<compile_context>
chip_gen: v7x
topology: tpu7x:2x2x1
jax: 0.10.0
libtpu: 0.0.40
codegen_flags: <defaults>
</compile_context>

<pallas_src>
import functools

import jax
import jax.numpy as jnp
from jax import lax
from jax.experimental import pallas as pl
from jax.experimental.pallas import tpu as pltpu

EPS = 1e-5


# ----------------------------------------------------------------------------
# In-kernel helpers
# ----------------------------------------------------------------------------
def _bn_scale_shift(ssum_ref, ssq_ref, gamma_ref, beta_ref, count):
    """Finalize training-mode BN from per-image partial (sum, sum_sq).

    Returns per-channel (scale, shift) so that bn(y) = y * scale + shift.
    """
    s = jnp.sum(ssum_ref[...], axis=0)               # (1, C)
    q = jnp.sum(ssq_ref[...], axis=0)                # (1, C)
    mu = s / count
    var = jnp.maximum(q / count - mu * mu, 0.0)      # one-pass (biased) variance
    scale = gamma_ref[...] * lax.rsqrt(var + EPS)
    shift = beta_ref[...] - mu * scale
    return scale, shift


# ----------------------------------------------------------------------------
# Stage 1: 1x1 conv (matmul) + per-image partial BN1 stats
# ----------------------------------------------------------------------------
def _stage1_kernel(x_ref, w1_ref, t1_ref, s1_ref, q1_ref):
    hw = x_ref.shape[1]
    cin = x_ref.shape[2]
    cout = w1_ref.shape[1]
    x2d = x_ref[...].reshape(hw, cin)
    y = jnp.dot(x2d.astype(jnp.bfloat16), w1_ref[...],          # bf16 MXU, f32 acc
                preferred_element_type=jnp.float32)              # (HW, C1)
    t1_ref[...] = y.reshape(1, hw, cout)
    s1_ref[...] = jnp.sum(y, axis=0, keepdims=True).reshape(1, 1, cout)
    q1_ref[...] = jnp.sum(y * y, axis=0, keepdims=True).reshape(1, 1, cout)


# ----------------------------------------------------------------------------
# Stage 2: finalize BN1 + ReLU + 3x3 conv as a single im2col matmul
#          + per-image partial BN2 stats
# ----------------------------------------------------------------------------
def _stage2_kernel(s1_ref, q1_ref, t1_ref, w2_ref, g1_ref, b1_ref,
                   t2_ref, s2_ref, q2_ref, pad_ref, *, height, width):
    hw = t1_ref.shape[1]
    c1 = t1_ref.shape[2]
    c2 = w2_ref.shape[1]
    count = s1_ref.shape[0] * hw

    scale, shift = _bn_scale_shift(s1_ref, q1_ref, g1_ref, b1_ref, count)
    y1 = jnp.maximum(t1_ref[...].reshape(hw, c1) * scale + shift, 0.0)

    # Padded activation scratch: zero ONLY the 1-wide halo ring, then write
    # the interior (no full zero pass that is immediately overwritten).
    zrow = jnp.zeros((1, width + 2, c1), jnp.float32)
    zcol = jnp.zeros((height + 2, 1, c1), jnp.float32)
    pad_ref[0:1, :, :] = zrow
    pad_ref[height + 1:height + 2, :, :] = zrow
    pad_ref[:, 0:1, :] = zcol
    pad_ref[:, width + 1:width + 2, :] = zcol
    pad_ref[1:height + 1, 1:width + 1, :] = y1.reshape(height, width, c1)

    # im2col: pack the 9 taps on the lane (K) axis -> ONE MXU matmul with
    # K = 9*C1 against the wrapper-reshaped (9*C1, C2) weight.
    col = jnp.concatenate(
        [pad_ref[kh:kh + height, kw:kw + width, :].reshape(hw, c1)
         for kh in range(3) for kw in range(3)],
        axis=-1)                                                  # (HW, 9*C1)
    y2 = jnp.dot(col.astype(jnp.bfloat16), w2_ref[...],
                 preferred_element_type=jnp.float32)              # (HW, C2)

    t2_ref[...] = y2.reshape(1, hw, c2)
    s2_ref[...] = jnp.sum(y2, axis=0, keepdims=True).reshape(1, 1, c2)
    q2_ref[...] = jnp.sum(y2 * y2, axis=0, keepdims=True).reshape(1, 1, c2)


# ----------------------------------------------------------------------------
# Stage 3: finalize BN2 + ReLU + 1x1 conv + per-image partial BN3 stats
# ----------------------------------------------------------------------------
def _stage3_kernel(s2_ref, q2_ref, t2_ref, w3_ref, g2_ref, b2_ref,
                   t3_ref, s3_ref, q3_ref):
    hw = t2_ref.shape[1]
    c2 = t2_ref.shape[2]
    c3 = w3_ref.shape[1]
    count = s2_ref.shape[0] * hw

    scale, shift = _bn_scale_shift(s2_ref, q2_ref, g2_ref, b2_ref, count)
    y2 = jnp.maximum(t2_ref[...].reshape(hw, c2) * scale + shift, 0.0)
    y3 = jnp.dot(y2.astype(jnp.bfloat16), w3_ref[...],
                 preferred_element_type=jnp.float32)              # (HW, C3)

    t3_ref[...] = y3.reshape(1, hw, c3)
    s3_ref[...] = jnp.sum(y3, axis=0, keepdims=True).reshape(1, 1, c3)
    q3_ref[...] = jnp.sum(y3 * y3, axis=0, keepdims=True).reshape(1, 1, c3)


# ----------------------------------------------------------------------------
# Stage 4: finalize BN3 + identity residual + ReLU
# ----------------------------------------------------------------------------
def _stage4_kernel(s3_ref, q3_ref, t3_ref, x_ref, g3_ref, b3_ref, o_ref):
    hw = t3_ref.shape[1]
    count = s3_ref.shape[0] * hw
    scale, shift = _bn_scale_shift(s3_ref, q3_ref, g3_ref, b3_ref, count)
    y3 = t3_ref[...] * scale + shift                              # (1, HW, C3)
    o_ref[...] = jnp.maximum(y3 + x_ref[...], 0.0)


# ----------------------------------------------------------------------------
# Wrapper
# ----------------------------------------------------------------------------
@jax.jit
def bottleneck(x, w1, g1, b1, w2, g2, b2, w3, g3, b3):
    N, H, W, Cin = x.shape
    C1 = w1.shape[1]
    C2 = w2.shape[3]
    C3 = w3.shape[1]
    HW = H * W
    assert Cin == C3, "identity residual requires in_channels == expansion*planes"
    # TODO(synk): stride>1 / downsample branch not implemented (default config).

    # Wrapper-side layout plumbing (free XLA ops): channel-minor activation
    # slabs, bf16 MXU weights, 3x3 kernel pre-reshaped to the im2col matrix.
    x3 = x.reshape(N, HW, Cin)
    w1b = w1.astype(jnp.bfloat16)
    w2b = w2.reshape(9 * C1, C2).astype(jnp.bfloat16)
    w3b = w3.astype(jnp.bfloat16)

    f32 = jnp.float32
    cparams = pltpu.CompilerParams(
        dimension_semantics=("parallel",),   # batch axis -> both TCs on v7x
        vmem_limit_bytes=48 << 20,           # headroom under v7x's 64 MiB/TC
    )

    def whole(a):
        # Full array visible to every grid step (weights, BN params, stats).
        zero = (0,) * a.ndim
        return pl.BlockSpec(a.shape, lambda n, _z=zero: _z)

    def per_image(*rest):
        # One batch element per grid step.
        rest = tuple(rest)
        zero = (0,) * len(rest)
        return pl.BlockSpec((1,) + rest, lambda n, _z=zero: (n,) + _z)

    # ---- stage 1: conv1 (1x1) + partial BN1 stats ---------------------------
    t1, s1, q1 = pl.pallas_call(
        _stage1_kernel,
        grid=(N,),
        in_specs=[per_image(HW, Cin), whole(w1b)],
        out_specs=(per_image(HW, C1), per_image(1, C1), per_image(1, C1)),
        out_shape=(jax.ShapeDtypeStruct((N, HW, C1), f32),
                   jax.ShapeDtypeStruct((N, 1, C1), f32),
                   jax.ShapeDtypeStruct((N, 1, C1), f32)),
        compiler_params=cparams,
    )(x3, w1b)

    # ---- stage 2: bn1 finalize + relu + conv2 (3x3, one im2col matmul) ------
    t2, s2, q2 = pl.pallas_call(
        functools.partial(_stage2_kernel, height=H, width=W),
        grid=(N,),
        in_specs=[whole(s1), whole(q1), per_image(HW, C1), whole(w2b),
                  whole(g1), whole(b1)],
        out_specs=(per_image(HW, C2), per_image(1, C2), per_image(1, C2)),
        out_shape=(jax.ShapeDtypeStruct((N, HW, C2), f32),
                   jax.ShapeDtypeStruct((N, 1, C2), f32),
                   jax.ShapeDtypeStruct((N, 1, C2), f32)),
        scratch_shapes=[pltpu.VMEM((H + 2, W + 2, C1), f32)],
        compiler_params=cparams,
    )(s1, q1, t1, w2b, g1, b1)

    # ---- stage 3: bn2 finalize + relu + conv3 (1x1) -------------------------
    t3, s3, q3 = pl.pallas_call(
        _stage3_kernel,
        grid=(N,),
        in_specs=[whole(s2), whole(q2), per_image(HW, C2), whole(w3b),
                  whole(g2), whole(b2)],
        out_specs=(per_image(HW, C3), per_image(1, C3), per_image(1, C3)),
        out_shape=(jax.ShapeDtypeStruct((N, HW, C3), f32),
                   jax.ShapeDtypeStruct((N, 1, C3), f32),
                   jax.ShapeDtypeStruct((N, 1, C3), f32)),
        compiler_params=cparams,
    )(s2, q2, t2, w3b, g2, b2)

    # ---- stage 4: bn3 finalize + residual add + relu ------------------------
    out3 = pl.pallas_call(
        _stage4_kernel,
        grid=(N,),
        in_specs=[whole(s3), whole(q3), per_image(HW, C3), per_image(HW, Cin),
                  whole(g3), whole(b3)],
        out_specs=per_image(HW, C3),
        out_shape=jax.ShapeDtypeStruct((N, HW, C3), f32),
        compiler_params=cparams,
    )(s3, q3, t3, x3, g3, b3)

    return out3.reshape(N, H, W, C3)


# ----------------------------------------------------------------------------
# Pure-JAX reference (training-mode BatchNorm, NHWC)
# ----------------------------------------------------------------------------
def reference(x, w1, g1, b1, w2, g2, b2, w3, g3, b3):
    dn = ('NHWC', 'HWIO', 'NHWC')

    def bn(y, g, b):
        mu = y.mean(axis=(0, 1, 2), keepdims=True)
        var = ((y - mu) ** 2).mean(axis=(0, 1, 2), keepdims=True)
        return (y - mu) * lax.rsqrt(var + EPS) * g + b

    y = lax.conv_general_dilated(x, w1.reshape(1, 1, *w1.shape), (1, 1), 'VALID',
                                 dimension_numbers=dn)
    y = jax.nn.relu(bn(y, g1, b1))
    y = lax.conv_general_dilated(y, w2, (1, 1), 'SAME', dimension_numbers=dn)
    y = jax.nn.relu(bn(y, g2, b2))
    y = lax.conv_general_dilated(y, w3.reshape(1, 1, *w3.shape), (1, 1), 'VALID',
                                 dimension_numbers=dn)
    y = bn(y, g3, b3)
    return jax.nn.relu(y + x)


if __name__ == "__main__":
    # number_list = [C1, Cin, C2, C1, C3, C2] with expansion = 4 -> C3 = 4*C1 = Cin
    N, H, W = 2, 8, 8
    Cin, C1, C2, C3 = 16, 4, 4, 16

    key = jax.random.PRNGKey(0)
    kx, k1, k2, k3 = jax.random.split(key, 4)

    x = jax.random.normal(kx, (N, H, W, Cin), jnp.float32)

    # conv weights (bias=False); 1x1 kernels stored as (Cin, Cout), 3x3 as HWIO.
    w1 = 0.1 * jax.random.normal(k1, (Cin, C1), jnp.float32)
    w2 = 0.1 * jax.random.normal(k2, (3, 3, C1, C2), jnp.float32)
    w3 = 0.1 * jax.random.normal(k3, (C2, C3), jnp.float32)

    # BatchNorm affine params (PyTorch defaults: gamma=1, beta=0), kept 2D.
    g1, b1 = jnp.ones((1, C1), jnp.float32), jnp.zeros((1, C1), jnp.float32)
    g2, b2 = jnp.ones((1, C2), jnp.float32), jnp.zeros((1, C2), jnp.float32)
    g3, b3 = jnp.ones((1, C3), jnp.float32), jnp.zeros((1, C3), jnp.float32)

    out = bottleneck(x, w1, g1, b1, w2, g2, b2, w3, g3, b3)
    out = jax.block_until_ready(out)

    ref = reference(x, w1, g1, b1, w2, g2, b2, w3, g3, b3)
    assert out.shape == ref.shape
    # MXU inputs are bf16 (f32 accumulation), so the tolerance vs. the all-f32
    # reference is relaxed; typical max-abs error is ~1e-2 or better.
    assert jnp.allclose(out, ref, rtol=5e-2, atol=5e-2), \
        f"max abs err {jnp.max(jnp.abs(out - ref))}"

    print("KERNEL_OK")
</pallas_src>

<mosaic_0001>
module attributes {stable_mosaic.version = 11 : i64} {
  func.func @_stage1_kernel(%arg0: i32, %arg1: memref<1x64x16xf32, #tpu.memory_space<vmem>>, %arg2: memref<16x4xbf16, #tpu.memory_space<vmem>>, %arg3: memref<1x64x4xf32, #tpu.memory_space<vmem>>, %arg4: memref<1x1x4xf32, #tpu.memory_space<vmem>>, %arg5: memref<1x1x4xf32, #tpu.memory_space<vmem>>) attributes {dimension_semantics = [#tpu.dimension_semantics<parallel>], iteration_bounds = array<i64: 2>, scalar_prefetch = 0 : i64, scratch_operands = 0 : i64, tpu.core_type = #tpu.core_type<tc>, window_params = [{transform_indices = @transform_0, window_bounds = array<i64: 1, 64, 16>}, {pipeline_mode = #tpu.pipeline_mode<synchronous>, transform_indices = @transform_1, window_bounds = array<i64: 16, 4>}, {transform_indices = @transform_2, window_bounds = array<i64: 1, 64, 4>}, {transform_indices = @transform_3, window_bounds = array<i64: 1, 1, 4>}, {transform_indices = @transform_4, window_bounds = array<i64: 1, 1, 4>}]} {
    %c0 = arith.constant 0 : index
    %c0_0 = arith.constant 0 : index
    %c0_1 = arith.constant 0 : index
    %0 = vector.load %arg1[%c0, %c0_0, %c0_1] : memref<1x64x16xf32, #tpu.memory_space<vmem>>, vector<1x64x16xf32>
    %1 = vector.shape_cast %0 : vector<1x64x16xf32> to vector<64x16xf32>
    %2 = arith.truncf %1 : vector<64x16xf32> to vector<64x16xbf16>
    %c0_2 = arith.constant 0 : index
    %c0_3 = arith.constant 0 : index
    %3 = vector.load %arg2[%c0_2, %c0_3] : memref<16x4xbf16, #tpu.memory_space<vmem>>, vector<16x4xbf16>
    %cst = arith.constant dense<0.000000e+00> : vector<64x4xf32>
    %4 = tpu.matmul %2, %3, %cst {dimension_numbers = #tpu.dot_dimension_numbers<[1], [0], [0], [1], [0, 0, 1, 1], [], []>} : vector<64x16xbf16>, vector<16x4xbf16>, vector<64x4xf32> -> vector<64x4xf32>
    %5 = vector.shape_cast %4 : vector<64x4xf32> to vector<1x64x4xf32>
    %c0_4 = arith.constant 0 : index
    %c0_5 = arith.constant 0 : index
    %c0_6 = arith.constant 0 : index
    %6 = vector.load %arg3[%c0_4, %c0_5, %c0_6] : memref<1x64x4xf32, #tpu.memory_space<vmem>>, vector<1x64x4xf32>
    tpu.vector_store %arg3[%c0_4, %c0_5, %c0_6], %5 {strides = array<i32>} : memref<1x64x4xf32, #tpu.memory_space<vmem>>, vector<1x64x4xf32>,
    %cst_7 = arith.constant dense<0.000000e+00> : vector<4xf32>
    %7 = vector.multi_reduction <add>, %4, %cst_7 [0] : vector<64x4xf32> to vector<4xf32>
    %8 = vector.shape_cast %7 : vector<4xf32> to vector<1x4xf32>
    %9 = vector.shape_cast %8 : vector<1x4xf32> to vector<1x1x4xf32>
    %c0_8 = arith.constant 0 : index
    %c0_9 = arith.constant 0 : index
    %c0_10 = arith.constant 0 : index
    %10 = vector.load %arg4[%c0_8, %c0_9, %c0_10] : memref<1x1x4xf32, #tpu.memory_space<vmem>>, vector<1x1x4xf32>
    tpu.vector_store %arg4[%c0_8, %c0_9, %c0_10], %9 {strides = array<i32>} : memref<1x1x4xf32, #tpu.memory_space<vmem>>, vector<1x1x4xf32>,
    %11 = arith.mulf %4, %4 : vector<64x4xf32>
    %cst_11 = arith.constant dense<0.000000e+00> : vector<4xf32>
    %12 = vector.multi_reduction <add>, %11, %cst_11 [0] : vector<64x4xf32> to vector<4xf32>
    %13 = vector.shape_cast %12 : vector<4xf32> to vector<1x4xf32>
    %14 = vector.shape_cast %13 : vector<1x4xf32> to vector<1x1x4xf32>
    %c0_12 = arith.constant 0 : index
    %c0_13 = arith.constant 0 : index
    %c0_14 = arith.constant 0 : index
    %15 = vector.load %arg5[%c0_12, %c0_13, %c0_14] : memref<1x1x4xf32, #tpu.memory_space<vmem>>, vector<1x1x4xf32>
    tpu.vector_store %arg5[%c0_12, %c0_13, %c0_14], %14 {strides = array<i32>} : memref<1x1x4xf32, #tpu.memory_space<vmem>>, vector<1x1x4xf32>,
    return
  }
  func.func @transform_0(%arg0: i32) -> (i32, i32, i32) {
    %c0_i32 = arith.constant 0 : i32
    %c0_i32_0 = arith.constant 0 : i32
    %c0_i32_1 = arith.constant 0 : i32
    return %arg0, %c0_i32, %c0_i32_0 : i32, i32, i32
  }
  func.func @transform_1(%arg0: i32) -> (i32, i32) {
    %c0_i32 = arith.constant 0 : i32
    %c0_i32_0 = arith.constant 0 : i32
    %c0_i32_1 = arith.constant 0 : i32
    return %c0_i32, %c0_i32_0 : i32, i32
  }
  func.func @transform_2(%arg0: i32) -> (i32, i32, i32) {
    %c0_i32 = arith.constant 0 : i32
    %c0_i32_0 = arith.constant 0 : i32
    %c0_i32_1 = arith.constant 0 : i32
    return %arg0, %c0_i32, %c0_i32_0 : i32, i32, i32
  }
  func.func @transform_3(%arg0: i32) -> (i32, i32, i32) {
    %c0_i32 = arith.constant 0 : i32
    %c0_i32_0 = arith.constant 0 : i32
    %c0_i32_1 = arith.constant 0 : i32
    return %arg0, %c0_i32, %c0_i32_0 : i32, i32, i32
  }
  func.func @transform_4(%arg0: i32) -> (i32, i32, i32) {
    %c0_i32 = arith.constant 0 : i32
    %c0_i32_0 = arith.constant 0 : i32
    %c0_i32_1 = arith.constant 0 : i32
    return %arg0, %c0_i32, %c0_i32_0 : i32, i32, i32
  }
}

module attributes {stable_mosaic.version = 11 : i64} {
  func.func @_stage2_kernel(%arg0: i32, %arg1: memref<2x1x4xf32, #tpu.memory_space<vmem>>, %arg2: memref<2x1x4xf32, #tpu.memory_space<vmem>>, %arg3: memref<1x64x4xf32, #tpu.memory_space<vmem>>, %arg4: memref<36x4xbf16, #tpu.memory_space<vmem>>, %arg5: memref<1x4xf32, #tpu.memory_space<vmem>>, %arg6: memref<1x4xf32, #tpu.memory_space<vmem>>, %arg7: memref<1x64x4xf32, #tpu.memory_space<vmem>>, %arg8: memref<1x1x4xf32, #tpu.memory_space<vmem>>, %arg9: memref<1x1x4xf32, #tpu.memory_space<vmem>>, %arg10: memref<10x10x4xf32, #tpu.memory_space<vmem>>) attributes {dimension_semantics = [#tpu.dimension_semantics<parallel>], iteration_bounds = array<i64: 2>, scalar_prefetch = 0 : i64, scratch_operands = 1 : i64, tpu.core_type = #tpu.core_type<tc>, window_params = [{pipeline_mode = #tpu.pipeline_mode<synchronous>, transform_indices = @transform_0, window_bounds = array<i64: 2, 1, 4>}, {pipeline_mode = #tpu.pipeline_mode<synchronous>, transform_indices = @transform_1, window_bounds = array<i64: 2, 1, 4>}, {transform_indices = @transform_2, window_bounds = array<i64: 1, 64, 4>}, {pipeline_mode = #tpu.pipeline_mode<synchronous>, transform_indices = @transform_3, window_bounds = array<i64: 36, 4>}, {pipeline_mode = #tpu.pipeline_mode<synchronous>, transform_indices = @transform_4, window_bounds = array<i64: 1, 4>}, {pipeline_mode = #tpu.pipeline_mode<synchronous>, transform_indices = @transform_5, window_bounds = array<i64: 1, 4>}, {transform_indices = @transform_6, window_bounds = array<i64: 1, 64, 4>}, {transform_indices = @transform_7, window_bounds = array<i64: 1, 1, 4>}, {transform_indices = @transform_8, window_bounds = array<i64: 1, 1, 4>}]} {
    %c0 = arith.constant 0 : index
    %c0_0 = arith.constant 0 : index
    %c0_1 = arith.constant 0 : index
    %0 = vector.load %arg1[%c0, %c0_0, %c0_1] : memref<2x1x4xf32, #tpu.memory_space<vmem>>, vector<2x1x4xf32>
    %cst = arith.constant dense<0.000000e+00> : vector<1x4xf32>
    %1 = vector.multi_reduction <add>, %0, %cst [0] : vector<2x1x4xf32> to vector<1x4xf32>
    %c0_2 = arith.constant 0 : index
    %c0_3 = arith.constant 0 : index
    %c0_4 = arith.constant 0 : index
    %2 = vector.load %arg2[%c0_2, %c0_3, %c0_4] : memref<2x1x4xf32, #tpu.memory_space<vmem>>, vector<2x1x4xf32>
    %cst_5 = arith.constant dense<0.000000e+00> : vector<1x4xf32>
    %3 = vector.multi_reduction <add>, %2, %cst_5 [0] : vector<2x1x4xf32> to vector<1x4xf32>
    %cst_6 = arith.constant 1.280000e+02 : f32
    %4 = vector.broadcast %cst_6 : f32 to vector<1x4xf32>
    %5 = arith.divf %1, %4 : vector<1x4xf32>
    %cst_7 = arith.constant 1.280000e+02 : f32
    %6 = vector.broadcast %cst_7 : f32 to vector<1x4xf32>
    %7 = arith.divf %3, %6 : vector<1x4xf32>
    %8 = arith.mulf %5, %5 : vector<1x4xf32>
    %9 = arith.subf %7, %8 : vector<1x4xf32>
    %cst_8 = arith.constant 0.000000e+00 : f32
    %10 = vector.broadcast %cst_8 : f32 to vector<1x4xf32>
    %11 = arith.maximumf %9, %10 : vector<1x4xf32>
    %c0_9 = arith.constant 0 : index
    %c0_10 = arith.constant 0 : index
    %12 = vector.load %arg5[%c0_9, %c0_10] : memref<1x4xf32, #tpu.memory_space<vmem>>, vector<1x4xf32>
    %cst_11 = arith.constant 9.99999974E-6 : f32
    %13 = vector.broadcast %cst_11 : f32 to vector<1x4xf32>
    %14 = arith.addf %11, %13 : vector<1x4xf32>
    %15 = math.rsqrt %14 : vector<1x4xf32>
    %16 = arith.mulf %12, %15 : vector<1x4xf32>
    %c0_12 = arith.constant 0 : index
    %c0_13 = arith.constant 0 : index
    %17 = vector.load %arg6[%c0_12, %c0_13] : memref<1x4xf32, #tpu.memory_space<vmem>>, vector<1x4xf32>
    %18 = arith.mulf %5, %16 : vector<1x4xf32>
    %19 = arith.subf %17, %18 : vector<1x4xf32>
    %c0_14 = arith.constant 0 : index
    %c0_15 = arith.constant 0 : index
    %c0_16 = arith.constant 0 : index
    %20 = vector.load %arg3[%c0_14, %c0_15, %c0_16] : memref<1x64x4xf32, #tpu.memory_space<vmem>>, vector<1x64x4xf32>
    %21 = vector.shape_cast %20 : vector<1x64x4xf32> to vector<64x4xf32>
    %22 = vector.broadcast %16 : vector<1x4xf32> to vector<64x4xf32>
    %23 = arith.mulf %21, %22 : vector<64x4xf32>
    %24 = vector.broadcast %19 : vector<1x4xf32> to vector<64x4xf32>
    %25 = arith.addf %23, %24 : vector<64x4xf32>
    %cst_17 = arith.constant 0.000000e+00 : f32
    %26 = vector.broadcast %cst_17 : f32 to vector<64x4xf32>
    %27 = arith.maximumf %25, %26 : vector<64x4xf32>
    %cst_18 = arith.constant 0.000000e+00 : f32
    %28 = vector.broadcast %cst_18 : f32 to vector<1x10x4xf32>
    %cst_19 = arith.constant 0.000000e+00 : f32
    %29 = vector.broadcast %cst_19 : f32 to vector<10x1x4xf32>
    %c0_20 = arith.constant 0 : index
    %c0_21 = arith.constant 0 : index
    %c0_22 = arith.constant 0 : index
    %30 = vector.load %arg10[%c0_20, %c0_21, %c0_22] : memref<10x10x4xf32, #tpu.memory_space<vmem>>, vector<1x10x4xf32>
    tpu.vector_store %arg10[%c0_20, %c0_21, %c0_22], %28 {strides = array<i32>} : memref<10x10x4xf32, #tpu.memory_space<vmem>>, vector<1x10x4xf32>,
    %c9 = arith.constant 9 : index
    %c0_23 = arith.constant 0 : index
    %c0_24 = arith.constant 0 : index
    %31 = vector.load %arg10[%c9, %c0_23, %c0_24] : memref<10x10x4xf32, #tpu.memory_space<vmem>>, vector<1x10x4xf32>
    tpu.vector_store %arg10[%c9, %c0_23, %c0_24], %28 {strides = array<i32>} : memref<10x10x4xf32, #tpu.memory_space<vmem>>, vector<1x10x4xf32>,
    %c0_25 = arith.constant 0 : index
    %c0_26 = arith.constant 0 : index
    %c0_27 = arith.constant 0 : index
    %32 = vector.load %arg10[%c0_25, %c0_26, %c0_27] : memref<10x10x4xf32, #tpu.memory_space<vmem>>, vector<10x1x4xf32>
    tpu.vector_store %arg10[%c0_25, %c0_26, %c0_27], %29 {strides = array<i32>} : memref<10x10x4xf32, #tpu.memory_space<vmem>>, vector<10x1x4xf32>,
    %c0_28 = arith.constant 0 : index
    %c9_29 = arith.constant 9 : index
    %c0_30 = arith.constant 0 : index
    %33 = vector.load %arg10[%c0_28, %c9_29, %c0_30] : memref<10x10x4xf32, #tpu.memory_space<vmem>>, vector<10x1x4xf32>
    tpu.vector_store %arg10[%c0_28, %c9_29, %c0_30], %29 {strides = array<i32>} : memref<10x10x4xf32, #tpu.memory_space<vmem>>, vector<10x1x4xf32>,
    %34 = vector.shape_cast %27 : vector<64x4xf32> to vector<8x8x4xf32>
    %c1 = arith.constant 1 : index
    %c1_31 = arith.constant 1 : index
    %c0_32 = arith.constant 0 : index
    %35 = vector.load %arg10[%c1, %c1_31, %c0_32] : memref<10x10x4xf32, #tpu.memory_space<vmem>>, vector<8x8x4xf32>
    tpu.vector_store %arg10[%c1, %c1_31, %c0_32], %34 {strides = array<i32>} : memref<10x10x4xf32, #tpu.memory_space<vmem>>, vector<8x8x4xf32>,
    %c0_33 = arith.constant 0 : index
    %c0_34 = arith.constant 0 : index
    %c0_35 = arith.constant 0 : index
    %36 = vector.load %arg10[%c0_33, %c0_34, %c0_35] : memref<10x10x4xf32, #tpu.memory_space<vmem>>, vector<8x8x4xf32>
    %37 = vector.shape_cast %36 : vector<8x8x4xf32> to vector<64x4xf32>
    %c0_36 = arith.constant 0 : index
    %c1_37 = arith.constant 1 : index
    %c0_38 = arith.constant 0 : index
    %38 = vector.load %arg10[%c0_36, %c1_37, %c0_38] : memref<10x10x4xf32, #tpu.memory_space<vmem>>, vector<8x8x4xf32>
    %39 = vector.shape_cast %38 : vector<8x8x4xf32> to vector<64x4xf32>
    %c0_39 = arith.constant 0 : index
    %c2 = arith.constant 2 : index
    %c0_40 = arith.constant 0 : index
    %40 = vector.load %arg10[%c0_39, %c2, %c0_40] : memref<10x10x4xf32, #tpu.memory_space<vmem>>, vector<8x8x4xf32>
    %41 = vector.shape_cast %40 : vector<8x8x4xf32> to vector<64x4xf32>
    %c1_41 = arith.constant 1 : index
    %c0_42 = arith.constant 0 : index
    %c0_43 = arith.constant 0 : index
    %42 = vector.load %arg10[%c1_41, %c0_42, %c0_43] : memref<10x10x4xf32, #tpu.memory_space<vmem>>, vector<8x8x4xf32>
    %43 = vector.shape_cast %42 : vector<8x8x4xf32> to vector<64x4xf32>
    %c1_44 = arith.constant 1 : index
    %c1_45 = arith.constant 1 : index
    %c0_46 = arith.constant 0 : index
    %44 = vector.load %arg10[%c1_44, %c1_45, %c0_46] : memref<10x10x4xf32, #tpu.memory_space<vmem>>, vector<8x8x4xf32>
    %45 = vector.shape_cast %44 : vector<8x8x4xf32> to vector<64x4xf32>
    %c1_47 = arith.constant 1 : index
    %c2_48 = arith.constant 2 : index
    %c0_49 = arith.constant 0 : index
    %46 = vector.load %arg10[%c1_47, %c2_48, %c0_49] : memref<10x10x4xf32, #tpu.memory_space<vmem>>, vector<8x8x4xf32>
    %47 = vector.shape_cast %46 : vector<8x8x4xf32> to vector<64x4xf32>
    %c2_50 = arith.constant 2 : index
    %c0_51 = arith.constant 0 : index
    %c0_52 = arith.constant 0 : index
    %48 = vector.load %arg10[%c2_50, %c0_51, %c0_52] : memref<10x10x4xf32, #tpu.memory_space<vmem>>, vector<8x8x4xf32>
    %49 = vector.shape_cast %48 : vector<8x8x4xf32> to vector<64x4xf32>
    %c2_53 = arith.constant 2 : index
    %c1_54 = arith.constant 1 : index
    %c0_55 = arith.constant 0 : index
    %50 = vector.load %arg10[%c2_53, %c1_54, %c0_55] : memref<10x10x4xf32, #tpu.memory_space<vmem>>, vector<8x8x4xf32>
    %51 = vector.shape_cast %50 : vector<8x8x4xf32> to vector<64x4xf32>
    %c2_56 = arith.constant 2 : index
    %c2_57 = arith.constant 2 : index
    %c0_58 = arith.constant 0 : index
    %52 = vector.load %arg10[%c2_56, %c2_57, %c0_58] : memref<10x10x4xf32, #tpu.memory_space<vmem>>, vector<8x8x4xf32>
    %53 = vector.shape_cast %52 : vector<8x8x4xf32> to vector<64x4xf32>
    %54 = tpu.concatenate %37, %39, %41, %43, %45, %47, %49, %51, %53 in 1 : vector<64x4xf32>, vector<64x4xf32>, vector<64x4xf32>, vector<64x4xf32>, vector<64x4xf32>, vector<64x4xf32>, vector<64x4xf32>, vector<64x4xf32>, vector<64x4xf32> -> vector<64x36xf32>
    %55 = arith.truncf %54 : vector<64x36xf32> to vector<64x36xbf16>
    %c0_59 = arith.constant 0 : index
    %c0_60 = arith.constant 0 : index
    %56 = vector.load %arg4[%c0_59, %c0_60] : memref<36x4xbf16, #tpu.memory_space<vmem>>, vector<36x4xbf16>
    %cst_61 = arith.constant dense<0.000000e+00> : vector<64x4xf32>
    %57 = tpu.matmul %55, %56, %cst_61 {dimension_numbers = #tpu.dot_dimension_numbers<[1], [0], [0], [1], [0, 0, 1, 1], [], []>} : vector<64x36xbf16>, vector<36x4xbf16>, vector<64x4xf32> -> vector<64x4xf32>
    %58 = vector.shape_cast %57 : vector<64x4xf32> to vector<1x64x4xf32>
    %c0_62 = arith.constant 0 : index
    %c0_63 = arith.constant 0 : index
    %c0_64 = arith.constant 0 : index
    %59 = vector.load %arg7[%c0_62, %c0_63, %c0_64] : memref<1x64x4xf32, #tpu.memory_space<vmem>>, vector<1x64x4xf32>
    tpu.vector_store %arg7[%c0_62, %c0_63, %c0_64], %58 {strides = array<i32>} : memref<1x64x4xf32, #tpu.memory_space<vmem>>, vector<1x64x4xf32>,
    %cst_65 = arith.constant dense<0.000000e+00> : vector<4xf32>
    %60 = vector.multi_reduction <add>, %57, %cst_65 [0] : vector<64x4xf32> to vector<4xf32>
    %61 = vector.shape_cast %60 : vector<4xf32> to vector<1x4xf32>
    %62 = vector.shape_cast %61 : vector<1x4xf32> to vector<1x1x4xf32>
    %c0_66 = arith.constant 0 : index
    %c0_67 = arith.constant 0 : index
    %c0_68 = arith.constant 0 : index
    %63 = vector.load %arg8[%c0_66, %c0_67, %c0_68] : memref<1x1x4xf32, #tpu.memory_space<vmem>>, vector<1x1x4xf32>
    tpu.vector_store %arg8[%c0_66, %c0_67, %c0_68], %62 {strides = array<i32>} : memref<1x1x4xf32, #tpu.memory_space<vmem>>, vector<1x1x4xf32>,
    %64 = arith.mulf %57, %57 : vector<64x4xf32>
    %cst_69 = arith.constant dense<0.000000e+00> : vector<4xf32>
    %65 = vector.multi_reduction <add>, %64, %cst_69 [0] : vector<64x4xf32> to vector<4xf32>
    %66 = vector.shape_cast %65 : vector<4xf32> to vector<1x4xf32>
    %67 = vector.shape_cast %66 : vector<1x4xf32> to vector<1x1x4xf32>
    %c0_70 = arith.constant 0 : index
    %c0_71 = arith.constant 0 : index
    %c0_72 = arith.constant 0 : index
    %68 = vector.load %arg9[%c0_70, %c0_71, %c0_72] : memref<1x1x4xf32, #tpu.memory_space<vmem>>, vector<1x1x4xf32>
    tpu.vector_store %arg9[%c0_70, %c0_71, %c0_72], %67 {strides = array<i32>} : memref<1x1x4xf32, #tpu.memory_space<vmem>>, vector<1x1x4xf32>,
    return
  }
  func.func @transform_0(%arg0: i32) -> (i32, i32, i32) {
    %c0_i32 = arith.constant 0 : i32
    %c0_i32_0 = arith.constant 0 : i32
    %c0_i32_1 = arith.constant 0 : i32
    %c0_i32_2 = arith.constant 0 : i32
    return %c0_i32, %c0_i32_0, %c0_i32_1 : i32, i32, i32
  }
  func.func @transform_1(%arg0: i32) -> (i32, i32, i32) {
    %c0_i32 = arith.constant 0 : i32
    %c0_i32_0 = arith.constant 0 : i32
    %c0_i32_1 = arith.constant 0 : i32
    %c0_i32_2 = arith.constant 0 : i32
    return %c0_i32, %c0_i32_0, %c0_i32_1 : i32, i32, i32
  }
  func.func @transform_2(%arg0: i32) -> (i32, i32, i32) {
    %c0_i32 = arith.constant 0 : i32
    %c0_i32_0 = arith.constant 0 : i32
    %c0_i32_1 = arith.constant 0 : i32
    return %arg0, %c0_i32, %c0_i32_0 : i32, i32, i32
  }
  func.func @transform_3(%arg0: i32) -> (i32, i32) {
    %c0_i32 = arith.constant 0 : i32
    %c0_i32_0 = arith.constant 0 : i32
    %c0_i32_1 = arith.constant 0 : i32
    return %c0_i32, %c0_i32_0 : i32, i32
  }
  func.func @transform_4(%arg0: i32) -> (i32, i32) {
    %c0_i32 = arith.constant 0 : i32
    %c0_i32_0 = arith.constant 0 : i32
    %c0_i32_1 = arith.constant 0 : i32
    return %c0_i32, %c0_i32_0 : i32, i32
  }
  func.func @transform_5(%arg0: i32) -> (i32, i32) {
    %c0_i32 = arith.constant 0 : i32
    %c0_i32_0 = arith.constant 0 : i32
    %c0_i32_1 = arith.constant 0 : i32
    return %c0_i32, %c0_i32_0 : i32, i32
  }
  func.func @transform_6(%arg0: i32) -> (i32, i32, i32) {
    %c0_i32 = arith.constant 0 : i32
    %c0_i32_0 = arith.constant 0 : i32
    %c0_i32_1 = arith.constant 0 : i32
    return %arg0, %c0_i32, %c0_i32_0 : i32, i32, i32
  }
  func.func @transform_7(%arg0: i32) -> (i32, i32, i32) {
    %c0_i32 = arith.constant 0 : i32
    %c0_i32_0 = arith.constant 0 : i32
    %c0_i32_1 = arith.constant 0 : i32
    return %arg0, %c0_i32, %c0_i32_0 : i32, i32, i32
  }
  func.func @transform_8(%arg0: i32) -> (i32, i32, i32) {
    %c0_i32 = arith.constant 0 : i32
    %c0_i32_0 = arith.constant 0 : i32
    %c0_i32_1 = arith.constant 0 : i32
    return %arg0, %c0_i32, %c0_i32_0 : i32, i32, i32
  }
}

module attributes {stable_mosaic.version = 11 : i64} {
  func.func @_stage4_kernel(%arg0: i32, %arg1: memref<2x1x16xf32, #tpu.memory_space<vmem>>, %arg2: memref<2x1x16xf32, #tpu.memory_space<vmem>>, %arg3: memref<1x64x16xf32, #tpu.memory_space<vmem>>, %arg4: memref<1x64x16xf32, #tpu.memory_space<vmem>>, %arg5: memref<1x16xf32, #tpu.memory_space<vmem>>, %arg6: memref<1x16xf32, #tpu.memory_space<vmem>>, %arg7: memref<1x64x16xf32, #tpu.memory_space<vmem>>) attributes {dimension_semantics = [#tpu.dimension_semantics<parallel>], iteration_bounds = array<i64: 2>, scalar_prefetch = 0 : i64, scratch_operands = 0 : i64, tpu.core_type = #tpu.core_type<tc>, window_params = [{pipeline_mode = #tpu.pipeline_mode<synchronous>, transform_indices = @transform_0, window_bounds = array<i64: 2, 1, 16>}, {pipeline_mode = #tpu.pipeline_mode<synchronous>, transform_indices = @transform_1, window_bounds = array<i64: 2, 1, 16>}, {transform_indices = @transform_2, window_bounds = array<i64: 1, 64, 16>}, {transform_indices = @transform_3, window_bounds = array<i64: 1, 64, 16>}, {pipeline_mode = #tpu.pipeline_mode<synchronous>, transform_indices = @transform_4, window_bounds = array<i64: 1, 16>}, {pipeline_mode = #tpu.pipeline_mode<synchronous>, transform_indices = @transform_5, window_bounds = array<i64: 1, 16>}, {transform_indices = @transform_6, window_bounds = array<i64: 1, 64, 16>}]} {
    %c0 = arith.constant 0 : index
    %c0_0 = arith.constant 0 : index
    %c0_1 = arith.constant 0 : index
    %0 = vector.load %arg1[%c0, %c0_0, %c0_1] : memref<2x1x16xf32, #tpu.memory_space<vmem>>, vector<2x1x16xf32>
    %cst = arith.constant dense<0.000000e+00> : vector<1x16xf32>
    %1 = vector.multi_reduction <add>, %0, %cst [0] : vector<2x1x16xf32> to vector<1x16xf32>
    %c0_2 = arith.constant 0 : index
    %c0_3 = arith.constant 0 : index
    %c0_4 = arith.constant 0 : index
    %2 = vector.load %arg2[%c0_2, %c0_3, %c0_4] : memref<2x1x16xf32, #tpu.memory_space<vmem>>, vector<2x1x16xf32>
    %cst_5 = arith.constant dense<0.000000e+00> : vector<1x16xf32>
    %3 = vector.multi_reduction <add>, %2, %cst_5 [0] : vector<2x1x16xf32> to vector<1x16xf32>
    %cst_6 = arith.constant 1.280000e+02 : f32
    %4 = vector.broadcast %cst_6 : f32 to vector<1x16xf32>
    %5 = arith.divf %1, %4 : vector<1x16xf32>
    %cst_7 = arith.constant 1.280000e+02 : f32
    %6 = vector.broadcast %cst_7 : f32 to vector<1x16xf32>
    %7 = arith.divf %3, %6 : vector<1x16xf32>
    %8 = arith.mulf %5, %5 : vector<1x16xf32>
    %9 = arith.subf %7, %8 : vector<1x16xf32>
    %cst_8 = arith.constant 0.000000e+00 : f32
    %10 = vector.broadcast %cst_8 : f32 to vector<1x16xf32>
    %11 = arith.maximumf %9, %10 : vector<1x16xf32>
    %c0_9 = arith.constant 0 : index
    %c0_10 = arith.constant 0 : index
    %12 = vector.load %arg5[%c0_9, %c0_10] : memref<1x16xf32, #tpu.memory_space<vmem>>, vector<1x16xf32>
    %cst_11 = arith.constant 9.99999974E-6 : f32
    %13 = vector.broadcast %cst_11 : f32 to vector<1x16xf32>
    %14 = arith.addf %11, %13 : vector<1x16xf32>
    %15 = math.rsqrt %14 : vector<1x16xf32>
    %16 = arith.mulf %12, %15 : vector<1x16xf32>
    %c0_12 = arith.constant 0 : index
    %c0_13 = arith.constant 0 : index
    %17 = vector.load %arg6[%c0_12, %c0_13] : memref<1x16xf32, #tpu.memory_space<vmem>>, vector<1x16xf32>
    %18 = arith.mulf %5, %16 : vector<1x16xf32>
    %19 = arith.subf %17, %18 : vector<1x16xf32>
    %c0_14 = arith.constant 0 : index
    %c0_15 = arith.constant 0 : index
    %c0_16 = arith.constant 0 : index
    %20 = vector.load %arg3[%c0_14, %c0_15, %c0_16] : memref<1x64x16xf32, #tpu.memory_space<vmem>>, vector<1x64x16xf32>
    %21 = vector.shape_cast %16 : vector<1x16xf32> to vector<1x1x16xf32>
    %22 = vector.broadcast %21 : vector<1x1x16xf32> to vector<1x64x16xf32>
    %23 = arith.mulf %20, %22 : vector<1x64x16xf32>
    %24 = vector.shape_cast %19 : vector<1x16xf32> to vector<1x1x16xf32>
    %25 = vector.broadcast %24 : vector<1x1x16xf32> to vector<1x64x16xf32>
    %26 = arith.addf %23, %25 : vector<1x64x16xf32>
    %c0_17 = arith.constant 0 : index
    %c0_18 = arith.constant 0 : index
    %c0_19 = arith.constant 0 : index
    %27 = vector.load %arg4[%c0_17, %c0_18, %c0_19] : memref<1x64x16xf32, #tpu.memory_space<vmem>>, vector<1x64x16xf32>
    %28 = arith.addf %26, %27 : vector<1x64x16xf32>
    %cst_20 = arith.constant 0.000000e+00 : f32
    %29 = vector.broadcast %cst_20 : f32 to vector<1x64x16xf32>
    %30 = arith.maximumf %28, %29 : vector<1x64x16xf32>
    %c0_21 = arith.constant 0 : index
    %c0_22 = arith.constant 0 : index
    %c0_23 = arith.constant 0 : index
    %31 = vector.load %arg7[%c0_21, %c0_22, %c0_23] : memref<1x64x16xf32, #tpu.memory_space<vmem>>, vector<1x64x16xf32>
    tpu.vector_store %arg7[%c0_21, %c0_22, %c0_23], %30 {strides = array<i32>} : memref<1x64x16xf32, #tpu.memory_space<vmem>>, vector<1x64x16xf32>,
    return
  }
  func.func @transform_0(%arg0: i32) -> (i32, i32, i32) {
    %c0_i32 = arith.constant 0 : i32
    %c0_i32_0 = arith.constant 0 : i32
    %c0_i32_1 = arith.constant 0 : i32
    %c0_i32_2 = arith.constant 0 : i32
    return %c0_i32, %c0_i32_0, %c0_i32_1 : i32, i32, i32
  }
  func.func @transform_1(%arg0: i32) -> (i32, i32, i32) {
    %c0_i32 = arith.constant 0 : i32
    %c0_i32_0 = arith.constant 0 : i32
    %c0_i32_1 = arith.constant 0 : i32
    %c0_i32_2 = arith.constant 0 : i32
    return %c0_i32, %c0_i32_0, %c0_i32_1 : i32, i32, i32
  }
  func.func @transform_2(%arg0: i32) -> (i32, i32, i32) {
    %c0_i32 = arith.constant 0 : i32
    %c0_i32_0 = arith.constant 0 : i32
    %c0_i32_1 = arith.constant 0 : i32
    return %arg0, %c0_i32, %c0_i32_0 : i32, i32, i32
  }
  func.func @transform_3(%arg0: i32) -> (i32, i32, i32) {
    %c0_i32 = arith.constant 0 : i32
    %c0_i32_0 = arith.constant 0 : i32
    %c0_i32_1 = arith.constant 0 : i32
    return %arg0, %c0_i32, %c0_i32_0 : i32, i32, i32
  }
  func.func @transform_4(%arg0: i32) -> (i32, i32) {
    %c0_i32 = arith.constant 0 : i32
    %c0_i32_0 = arith.constant 0 : i32
    %c0_i32_1 = arith.constant 0 : i32
    return %c0_i32, %c0_i32_0 : i32, i32
  }
  func.func @transform_5(%arg0: i32) -> (i32, i32) {
    %c0_i32 = arith.constant 0 : i32
    %c0_i32_0 = arith.constant 0 : i32
    %c0_i32_1 = arith.constant 0 : i32
    return %c0_i32, %c0_i32_0 : i32, i32
  }
  func.func @transform_6(%arg0: i32) -> (i32, i32, i32) {
    %c0_i32 = arith.constant 0 : i32
    %c0_i32_0 = arith.constant 0 : i32
    %c0_i32_1 = arith.constant 0 : i32
    return %arg0, %c0_i32, %c0_i32_0 : i32, i32, i32
  }
}

module attributes {stable_mosaic.version = 11 : i64} {
  func.func @_stage3_kernel(%arg0: i32, %arg1: memref<2x1x4xf32, #tpu.memory_space<vmem>>, %arg2: memref<2x1x4xf32, #tpu.memory_space<vmem>>, %arg3: memref<1x64x4xf32, #tpu.memory_space<vmem>>, %arg4: memref<4x16xbf16, #tpu.memory_space<vmem>>, %arg5: memref<1x4xf32, #tpu.memory_space<vmem>>, %arg6: memref<1x4xf32, #tpu.memory_space<vmem>>, %arg7: memref<1x64x16xf32, #tpu.memory_space<vmem>>, %arg8: memref<1x1x16xf32, #tpu.memory_space<vmem>>, %arg9: memref<1x1x16xf32, #tpu.memory_space<vmem>>) attributes {dimension_semantics = [#tpu.dimension_semantics<parallel>], iteration_bounds = array<i64: 2>, scalar_prefetch = 0 : i64, scratch_operands = 0 : i64, tpu.core_type = #tpu.core_type<tc>, window_params = [{pipeline_mode = #tpu.pipeline_mode<synchronous>, transform_indices = @transform_0, window_bounds = array<i64: 2, 1, 4>}, {pipeline_mode = #tpu.pipeline_mode<synchronous>, transform_indices = @transform_1, window_bounds = array<i64: 2, 1, 4>}, {transform_indices = @transform_2, window_bounds = array<i64: 1, 64, 4>}, {pipeline_mode = #tpu.pipeline_mode<synchronous>, transform_indices = @transform_3, window_bounds = array<i64: 4, 16>}, {pipeline_mode = #tpu.pipeline_mode<synchronous>, transform_indices = @transform_4, window_bounds = array<i64: 1, 4>}, {pipeline_mode = #tpu.pipeline_mode<synchronous>, transform_indices = @transform_5, window_bounds = array<i64: 1, 4>}, {transform_indices = @transform_6, window_bounds = array<i64: 1, 64, 16>}, {transform_indices = @transform_7, window_bounds = array<i64: 1, 1, 16>}, {transform_indices = @transform_8, window_bounds = array<i64: 1, 1, 16>}]} {
    %c0 = arith.constant 0 : index
    %c0_0 = arith.constant 0 : index
    %c0_1 = arith.constant 0 : index
    %0 = vector.load %arg1[%c0, %c0_0, %c0_1] : memref<2x1x4xf32, #tpu.memory_space<vmem>>, vector<2x1x4xf32>
    %cst = arith.constant dense<0.000000e+00> : vector<1x4xf32>
    %1 = vector.multi_reduction <add>, %0, %cst [0] : vector<2x1x4xf32> to vector<1x4xf32>
    %c0_2 = arith.constant 0 : index
    %c0_3 = arith.constant 0 : index
    %c0_4 = arith.constant 0 : index
    %2 = vector.load %arg2[%c0_2, %c0_3, %c0_4] : memref<2x1x4xf32, #tpu.memory_space<vmem>>, vector<2x1x4xf32>
    %cst_5 = arith.constant dense<0.000000e+00> : vector<1x4xf32>
    %3 = vector.multi_reduction <add>, %2, %cst_5 [0] : vector<2x1x4xf32> to vector<1x4xf32>
    %cst_6 = arith.constant 1.280000e+02 : f32
    %4 = vector.broadcast %cst_6 : f32 to vector<1x4xf32>
    %5 = arith.divf %1, %4 : vector<1x4xf32>
    %cst_7 = arith.constant 1.280000e+02 : f32
    %6 = vector.broadcast %cst_7 : f32 to vector<1x4xf32>
    %7 = arith.divf %3, %6 : vector<1x4xf32>
    %8 = arith.mulf %5, %5 : vector<1x4xf32>
    %9 = arith.subf %7, %8 : vector<1x4xf32>
    %cst_8 = arith.constant 0.000000e+00 : f32
    %10 = vector.broadcast %cst_8 : f32 to vector<1x4xf32>
    %11 = arith.maximumf %9, %10 : vector<1x4xf32>
    %c0_9 = arith.constant 0 : index
    %c0_10 = arith.constant 0 : index
    %12 = vector.load %arg5[%c0_9, %c0_10] : memref<1x4xf32, #tpu.memory_space<vmem>>, vector<1x4xf32>
    %cst_11 = arith.constant 9.99999974E-6 : f32
    %13 = vector.broadcast %cst_11 : f32 to vector<1x4xf32>
    %14 = arith.addf %11, %13 : vector<1x4xf32>
    %15 = math.rsqrt %14 : vector<1x4xf32>
    %16 = arith.mulf %12, %15 : vector<1x4xf32>
    %c0_12 = arith.constant 0 : index
    %c0_13 = arith.constant 0 : index
    %17 = vector.load %arg6[%c0_12, %c0_13] : memref<1x4xf32, #tpu.memory_space<vmem>>, vector<1x4xf32>
    %18 = arith.mulf %5, %16 : vector<1x4xf32>
    %19 = arith.subf %17, %18 : vector<1x4xf32>
    %c0_14 = arith.constant 0 : index
    %c0_15 = arith.constant 0 : index
    %c0_16 = arith.constant 0 : index
    %20 = vector.load %arg3[%c0_14, %c0_15, %c0_16] : memref<1x64x4xf32, #tpu.memory_space<vmem>>, vector<1x64x4xf32>
    %21 = vector.shape_cast %20 : vector<1x64x4xf32> to vector<64x4xf32>
    %22 = vector.broadcast %16 : vector<1x4xf32> to vector<64x4xf32>
    %23 = arith.mulf %21, %22 : vector<64x4xf32>
    %24 = vector.broadcast %19 : vector<1x4xf32> to vector<64x4xf32>
    %25 = arith.addf %23, %24 : vector<64x4xf32>
    %cst_17 = arith.constant 0.000000e+00 : f32
    %26 = vector.broadcast %cst_17 : f32 to vector<64x4xf32>
    %27 = arith.maximumf %25, %26 : vector<64x4xf32>
    %28 = arith.truncf %27 : vector<64x4xf32> to vector<64x4xbf16>
    %c0_18 = arith.constant 0 : index
    %c0_19 = arith.constant 0 : index
    %29 = vector.load %arg4[%c0_18, %c0_19] : memref<4x16xbf16, #tpu.memory_space<vmem>>, vector<4x16xbf16>
    %cst_20 = arith.constant dense<0.000000e+00> : vector<64x16xf32>
    %30 = tpu.matmul %28, %29, %cst_20 {dimension_numbers = #tpu.dot_dimension_numbers<[1], [0], [0], [1], [0, 0, 1, 1], [], []>} : vector<64x4xbf16>, vector<4x16xbf16>, vector<64x16xf32> -> vector<64x16xf32>
    %31 = vector.shape_cast %30 : vector<64x16xf32> to vector<1x64x16xf32>
    %c0_21 = arith.constant 0 : index
    %c0_22 = arith.constant 0 : index
    %c0_23 = arith.constant 0 : index
    %32 = vector.load %arg7[%c0_21, %c0_22, %c0_23] : memref<1x64x16xf32, #tpu.memory_space<vmem>>, vector<1x64x16xf32>
    tpu.vector_store %arg7[%c0_21, %c0_22, %c0_23], %31 {strides = array<i32>} : memref<1x64x16xf32, #tpu.memory_space<vmem>>, vector<1x64x16xf32>,
    %cst_24 = arith.constant dense<0.000000e+00> : vector<16xf32>
    %33 = vector.multi_reduction <add>, %30, %cst_24 [0] : vector<64x16xf32> to vector<16xf32>
    %34 = vector.shape_cast %33 : vector<16xf32> to vector<1x16xf32>
    %35 = vector.shape_cast %34 : vector<1x16xf32> to vector<1x1x16xf32>
    %c0_25 = arith.constant 0 : index
    %c0_26 = arith.constant 0 : index
    %c0_27 = arith.constant 0 : index
    %36 = vector.load %arg8[%c0_25, %c0_26, %c0_27] : memref<1x1x16xf32, #tpu.memory_space<vmem>>, vector<1x1x16xf32>
    tpu.vector_store %arg8[%c0_25, %c0_26, %c0_27], %35 {strides = array<i32>} : memref<1x1x16xf32, #tpu.memory_space<vmem>>, vector<1x1x16xf32>,
    %37 = arith.mulf %30, %30 : vector<64x16xf32>
    %cst_28 = arith.constant dense<0.000000e+00> : vector<16xf32>
    %38 = vector.multi_reduction <add>, %37, %cst_28 [0] : vector<64x16xf32> to vector<16xf32>
    %39 = vector.shape_cast %38 : vector<16xf32> to vector<1x16xf32>
    %40 = vector.shape_cast %39 : vector<1x16xf32> to vector<1x1x16xf32>
    %c0_29 = arith.constant 0 : index
    %c0_30 = arith.constant 0 : index
    %c0_31 = arith.constant 0 : index
    %41 = vector.load %arg9[%c0_29, %c0_30, %c0_31] : memref<1x1x16xf32, #tpu.memory_space<vmem>>, vector<1x1x16xf32>
    tpu.vector_store %arg9[%c0_29, %c0_30, %c0_31], %40 {strides = array<i32>} : memref<1x1x16xf32, #tpu.memory_space<vmem>>, vector<1x1x16xf32>,
    return
  }
  func.func @transform_0(%arg0: i32) -> (i32, i32, i32) {
    %c0_i32 = arith.constant 0 : i32
    %c0_i32_0 = arith.constant 0 : i32
    %c0_i32_1 = arith.constant 0 : i32
    %c0_i32_2 = arith.constant 0 : i32
    return %c0_i32, %c0_i32_0, %c0_i32_1 : i32, i32, i32
  }
  func.func @transform_1(%arg0: i32) -> (i32, i32, i32) {
    %c0_i32 = arith.constant 0 : i32
    %c0_i32_0 = arith.constant 0 : i32
    %c0_i32_1 = arith.constant 0 : i32
    %c0_i32_2 = arith.constant 0 : i32
    return %c0_i32, %c0_i32_0, %c0_i32_1 : i32, i32, i32
  }
  func.func @transform_2(%arg0: i32) -> (i32, i32, i32) {
    %c0_i32 = arith.constant 0 : i32
    %c0_i32_0 = arith.constant 0 : i32
    %c0_i32_1 = arith.constant 0 : i32
    return %arg0, %c0_i32, %c0_i32_0 : i32, i32, i32
  }
  func.func @transform_3(%arg0: i32) -> (i32, i32) {
    %c0_i32 = arith.constant 0 : i32
    %c0_i32_0 = arith.constant 0 : i32
    %c0_i32_1 = arith.constant 0 : i32
    return %c0_i32, %c0_i32_0 : i32, i32
  }
  func.func @transform_4(%arg0: i32) -> (i32, i32) {
    %c0_i32 = arith.constant 0 : i32
    %c0_i32_0 = arith.constant 0 : i32
    %c0_i32_1 = arith.constant 0 : i32
    return %c0_i32, %c0_i32_0 : i32, i32
  }
  func.func @transform_5(%arg0: i32) -> (i32, i32) {
    %c0_i32 = arith.constant 0 : i32
    %c0_i32_0 = arith.constant 0 : i32
    %c0_i32_1 = arith.constant 0 : i32
    return %c0_i32, %c0_i32_0 : i32, i32
  }
  func.func @transform_6(%arg0: i32) -> (i32, i32, i32) {
    %c0_i32 = arith.constant 0 : i32
    %c0_i32_0 = arith.constant 0 : i32
    %c0_i32_1 = arith.constant 0 : i32
    return %arg0, %c0_i32, %c0_i32_0 : i32, i32, i32
  }
  func.func @transform_7(%arg0: i32) -> (i32, i32, i32) {
    %c0_i32 = arith.constant 0 : i32
    %c0_i32_0 = arith.constant 0 : i32
    %c0_i32_1 = arith.constant 0 : i32
    return %arg0, %c0_i32, %c0_i32_0 : i32, i32, i32
  }
  func.func @transform_8(%arg0: i32) -> (i32, i32, i32) {
    %c0_i32 = arith.constant 0 : i32
    %c0_i32_0 = arith.constant 0 : i32
    %c0_i32_1 = arith.constant 0 : i32
    return %arg0, %c0_i32, %c0_i32_0 : i32, i32, i32
  }
}

</mosaic_0001>

<llo_original>
// kernel: bottleneck.6
$region0: #{bottleneck.6}
  #allocation0 [shape = 'u32[]', space=smem, size = 0x4, offset = 0x4, fixed_abs, tag = 'smem constant byte address 0x4 - core index']
  #allocation1 [shape = 'u32[144,128]{1,0:T(1,128)}', space=vmem, size = 0x12000, scoped, tag = 'internal scratch']
  %s0 = inlined_call_operand.vmem [shape: f32[2,1,4], index: 0, kind: input, shape index: {}]
  %s1 = inlined_call_operand.vmem [shape: f32[2,1,4], index: 1, kind: input, shape index: {}]
  %s2 = inlined_call_operand.vmem [shape: f32[2,64,4], index: 2, kind: input, shape index: {}]
  %s3 = inlined_call_operand.vmem [shape: bf16[4,16], index: 3, kind: input, shape index: {}]
  %s4 = inlined_call_operand.vmem [shape: f32[1,4], index: 4, kind: input, shape index: {}]
  %s5 = inlined_call_operand.vmem [shape: f32[1,4], index: 5, kind: input, shape index: {}]
  %s6 = inlined_call_operand.vmem [shape: f32[2,64,16], index: 6, kind: output, shape index: {0}]
  %s7 = inlined_call_operand.vmem [shape: f32[2,1,16], index: 7, kind: output, shape index: {1}]
  %s8 = inlined_call_operand.vmem [shape: f32[2,1,16], index: 8, kind: output, shape index: {2}]
  %9 = xla_tuple %s6, %s7, %s8
  %s10 = sld [smem:[#allocation0]]
  $region73: #{bottleneck.6} parent=0
    _
  %s12 = ssub.s32 1, %s10
  %s13 = scalar_select 0, %s12, %s10
  loop: start=0, step=1, limit=4
  $region2: #{bottleneck.6} parent=0 // loop_pre_header
    _
  $region3: #{bottleneck.6} parent=0 // loop_header
    %s15 = sphi 0, %s19
    %p16 = scmp.ge.s32.totalorder %s15, 4
    %s23 = sphi 0, %s23
    %s25 = sphi 0, %s23
    %s26 = sphi 0, %s25
    %s40 = sphi 0, %s26
    %s44 = sphi 0, %s44
    %s46 = sphi 0, %s44
    %s47 = sphi 0, %s46
    %s61 = sphi 0, %s47
    %s67 = sphi 0, %s69
    %s70 = sphi 0, %s67
    %s71 = sphi 0, %s70
    %s87 = sphi 0, %s71
    %s91 = sphi 0, %s91
    %s93 = sphi 0, %s91
    %s94 = sphi 0, %s93
    %s108 = sphi 0, %s94
    %s112 = sphi 0, %s112
    %s114 = sphi 0, %s112
    %s115 = sphi 0, %s114
    %s129 = sphi 0, %s115
    %s133 = sphi 0, %s133
    %s135 = sphi 0, %s133
    %s136 = sphi 0, %s135
    %s150 = sphi 0, %s136
    %s156 = sphi 0, %s158
    %s159 = sphi 0, %s156
    %s160 = sphi 0, %s159
    %s176 = sphi 0, %s160
    %s182 = sphi 0, %s184
    %s185 = sphi 0, %s182
    %s186 = sphi 0, %s185
    %s202 = sphi 0, %s186
    %s208 = sphi 0, %s210
    %s211 = sphi 0, %s208
    %s212 = sphi 0, %s211
    %s228 = sphi 0, %s212
  $region4: #{bottleneck.6} parent=0 // loop_header_branch
    %18 = sbr.rel (%p16) target = $region8
  $region5: #{bottleneck.6} parent=0 // loop_body
    %s20 = ssub.s32 %s15, 1
    %s21 = ssub.s32 %s15, 2
    %s22 = sadd.s32 %s15, 1
    %s24 = sadd.s32 %s23, 1
    %p27 = scmp.eq.s32.totalorder %s15, 1
    %p28 = scmp.ne.s32.totalorder %s23, %s25
    %p29 = scmp.eq.s32.totalorder %s15, 0
    %p30 = por %p28, %p29
    %p31 = scmp.ne.s32.totalorder %s23, %s25
    %p32 = scmp.eq.s32.totalorder %s20, 1
    %p33 = por %p31, %p32
    %p34 = scmp.ne.s32.totalorder %s25, %s26
    %p35 = scmp.eq.s32.totalorder %s20, 0
    %p36 = por %p34, %p35
    %p37 = scmp.ne.s32.totalorder %s25, %s26
    %p38 = scmp.eq.s32.totalorder %s21, 1
    %p39 = por %p37, %p38
    %p41 = scmp.ne.s32.totalorder %s26, %s40
    %p42 = scmp.eq.s32.totalorder %s21, 0
    %p43 = por %p41, %p42
    %s45 = sadd.s32 %s44, 1
    %p48 = scmp.eq.s32.totalorder %s15, 1
    %p49 = scmp.ne.s32.totalorder %s44, %s46
    %p50 = scmp.eq.s32.totalorder %s15, 0
    %p51 = por %p49, %p50
    %p52 = scmp.ne.s32.totalorder %s44, %s46
    %p53 = scmp.eq.s32.totalorder %s20, 1
    %p54 = por %p52, %p53
    %p55 = scmp.ne.s32.totalorder %s46, %s47
    %p56 = scmp.eq.s32.totalorder %s20, 0
    %p57 = por %p55, %p56
    %p58 = scmp.ne.s32.totalorder %s46, %s47
    %p59 = scmp.eq.s32.totalorder %s21, 1
    %p60 = por %p58, %p59
    %p62 = scmp.ne.s32.totalorder %s47, %s61
    %p63 = scmp.eq.s32.totalorder %s21, 0
    %p64 = por %p62, %p63
    %s65 = ssub.s32 %s15, %s22
    %p66 = scmp.eq.s32.totalorder %s65, 0
    %s68 = sadd.s32 %s67, 1
    %s69 = scalar_select %p66, %s67, %s68
    %p72 = pneg %p66
    %p73 = scmp.eq.s32.totalorder %s15, 1
    %p74 = por %p72, %p73
    %p75 = scmp.ne.s32.totalorder %s67, %s70
    %p76 = scmp.eq.s32.totalorder %s15, 0
    %p77 = por %p75, %p76
    %p78 = scmp.ne.s32.totalorder %s67, %s70
    %p79 = scmp.eq.s32.totalorder %s20, 1
    %p80 = por %p78, %p79
    %p81 = scmp.ne.s32.totalorder %s70, %s71
    %p82 = scmp.eq.s32.totalorder %s20, 0
    %p83 = por %p81, %p82
    %p84 = scmp.ne.s32.totalorder %s70, %s71
    %p85 = scmp.eq.s32.totalorder %s21, 1
    %p86 = por %p84, %p85
    %p88 = scmp.ne.s32.totalorder %s71, %s87
    %p89 = scmp.eq.s32.totalorder %s21, 0
    %p90 = por %p88, %p89
    %s92 = sadd.s32 %s91, 1
    %p95 = scmp.eq.s32.totalorder %s15, 1
    %p96 = scmp.ne.s32.totalorder %s91, %s93
    %p97 = scmp.eq.s32.totalorder %s15, 0
    %p98 = por %p96, %p97
    %p99 = scmp.ne.s32.totalorder %s91, %s93
    %p100 = scmp.eq.s32.totalorder %s20, 1
    %p101 = por %p99, %p100
    %p102 = scmp.ne.s32.totalorder %s93, %s94
    %p103 = scmp.eq.s32.totalorder %s20, 0
    %p104 = por %p102, %p103
    %p105 = scmp.ne.s32.totalorder %s93, %s94
    %p106 = scmp.eq.s32.totalorder %s21, 1
    %p107 = por %p105, %p106
    %p109 = scmp.ne.s32.totalorder %s94, %s108
    %p110 = scmp.eq.s32.totalorder %s21, 0
    %p111 = por %p109, %p110
    %s113 = sadd.s32 %s112, 1
    %p116 = scmp.eq.s32.totalorder %s15, 1
    %p117 = scmp.ne.s32.totalorder %s112, %s114
    %p118 = scmp.eq.s32.totalorder %s15, 0
    %p119 = por %p117, %p118
    %p120 = scmp.ne.s32.totalorder %s112, %s114
    %p121 = scmp.eq.s32.totalorder %s20, 1
    %p122 = por %p120, %p121
    %p123 = scmp.ne.s32.totalorder %s114, %s115
    %p124 = scmp.eq.s32.totalorder %s20, 0
    %p125 = por %p123, %p124
    %p126 = scmp.ne.s32.totalorder %s114, %s115
    %p127 = scmp.eq.s32.totalorder %s21, 1
    %p128 = por %p126, %p127
    %p130 = scmp.ne.s32.totalorder %s115, %s129
    %p131 = scmp.eq.s32.totalorder %s21, 0
    %p132 = por %p130, %p131
    %s134 = sadd.s32 %s133, 1
    %p137 = scmp.eq.s32.totalorder %s15, 1
    %p138 = scmp.ne.s32.totalorder %s133, %s135
    %p139 = scmp.eq.s32.totalorder %s15, 0
    %p140 = por %p138, %p139
    %p141 = scmp.ne.s32.totalorder %s133, %s135
    %p142 = scmp.eq.s32.totalorder %s20, 1
    %p143 = por %p141, %p142
    %p144 = scmp.ne.s32.totalorder %s135, %s136
    %p145 = scmp.eq.s32.totalorder %s20, 0
    %p146 = por %p144, %p145
    %p147 = scmp.ne.s32.totalorder %s135, %s136
    %p148 = scmp.eq.s32.totalorder %s21, 1
    %p149 = por %p147, %p148
    %p151 = scmp.ne.s32.totalorder %s136, %s150
    %p152 = scmp.eq.s32.totalorder %s21, 0
    %p153 = por %p151, %p152
    %s154 = ssub.s32 %s15, %s22
    %p155 = scmp.eq.s32.totalorder %s154, 0
    %s157 = sadd.s32 %s156, 1
    %s158 = scalar_select %p155, %s156, %s157
    %p161 = pneg %p155
    %p162 = scmp.eq.s32.totalorder %s15, 1
    %p163 = por %p161, %p162
    %p164 = scmp.ne.s32.totalorder %s156, %s159
    %p165 = scmp.eq.s32.totalorder %s15, 0
    %p166 = por %p164, %p165
    %p167 = scmp.ne.s32.totalorder %s156, %s159
    %p168 = scmp.eq.s32.totalorder %s20, 1
    %p169 = por %p167, %p168
    %p170 = scmp.ne.s32.totalorder %s159, %s160
    %p171 = scmp.eq.s32.totalorder %s20, 0
    %p172 = por %p170, %p171
    %p173 = scmp.ne.s32.totalorder %s159, %s160
    %p174 = scmp.eq.s32.totalorder %s21, 1
    %p175 = por %p173, %p174
    %p177 = scmp.ne.s32.totalorder %s160, %s176
    %p178 = scmp.eq.s32.totalorder %s21, 0
    %p179 = por %p177, %p178
    %s180 = ssub.s32 %s15, %s22
    %p181 = scmp.eq.s32.totalorder %s180, 0
    %s183 = sadd.s32 %s182, 1
    %s184 = scalar_select %p181, %s182, %s183
    %p187 = pneg %p181
    %p188 = scmp.eq.s32.totalorder %s15, 1
    %p189 = por %p187, %p188
    %p190 = scmp.ne.s32.totalorder %s182, %s185
    %p191 = scmp.eq.s32.totalorder %s15, 0
    %p192 = por %p190, %p191
    %p193 = scmp.ne.s32.totalorder %s182, %s185
    %p194 = scmp.eq.s32.totalorder %s20, 1
    %p195 = por %p193, %p194
    %p196 = scmp.ne.s32.totalorder %s185, %s186
    %p197 = scmp.eq.s32.totalorder %s20, 0
    %p198 = por %p196, %p197
    %p199 = scmp.ne.s32.totalorder %s185, %s186
    %p200 = scmp.eq.s32.totalorder %s21, 1
    %p201 = por %p199, %p200
    %p203 = scmp.ne.s32.totalorder %s186, %s202
    %p204 = scmp.eq.s32.totalorder %s21, 0
    %p205 = por %p203, %p204
    %s206 = ssub.s32 %s15, %s22
    %p207 = scmp.eq.s32.totalorder %s206, 0
    %s209 = sadd.s32 %s208, 1
    %s210 = scalar_select %p207, %s208, %s209
    %p213 = pneg %p207
    %p214 = scmp.eq.s32.totalorder %s15, 1
    %p215 = por %p213, %p214
    %p216 = scmp.ne.s32.totalorder %s208, %s211
    %p217 = scmp.eq.s32.totalorder %s15, 0
    %p218 = por %p216, %p217
    %p219 = scmp.ne.s32.totalorder %s208, %s211
    %p220 = scmp.eq.s32.totalorder %s20, 1
    %p221 = por %p219, %p220
    %p222 = scmp.ne.s32.totalorder %s211, %s212
    %p223 = scmp.eq.s32.totalorder %s20, 0
    %p224 = por %p222, %p223
    %p225 = scmp.ne.s32.totalorder %s211, %s212
    %p226 = scmp.eq.s32.totalorder %s21, 1
    %p227 = por %p225, %p226
    %p229 = scmp.ne.s32.totalorder %s212, %s228
    %p230 = scmp.eq.s32.totalorder %s21, 0
    %p231 = por %p229, %p230
    %p232 = scmp.le.s32.totalorder 1, %s15
    %p233 = scmp.lt.s32.totalorder %s15, 3
    %p234 = pnand %p232, %p233
    %p235 = pneg %p234
    // Predicated region
    $region9: #{bottleneck.6} parent=5 // pred_check
      _
    $region10: #{bottleneck.6} parent=5 // pred_check_branch
      %237 = sbr.rel (%p234) target = $region12
    $region11: #{bottleneck.6} parent=5 // pred_region
      %s238 = ssub.s32 %s15, 1
      // Predicated region
      $region13: #{bottleneck.6} parent=11 // pred_check
        %p239 = pneg %p36
      $region14: #{bottleneck.6} parent=11 // pred_check_branch
        %241 = sbr.rel (%p239) target = $region16
      $region15: #{bottleneck.6} parent=11 // pred_region
        _
      $region16: #{bottleneck.6} parent=11 // pred_fallthru
        _
      // Predicated region
      $region17: #{bottleneck.6} parent=11 // pred_check
        %p242 = pneg %p57
      $region18: #{bottleneck.6} parent=11 // pred_check_branch
        %244 = sbr.rel (%p242) target = $region20
      $region19: #{bottleneck.6} parent=11 // pred_region
        _
      $region20: #{bottleneck.6} parent=11 // pred_fallthru
        _
      // Predicated region
      $region21: #{bottleneck.6} parent=11 // pred_check
        %p245 = pneg %p104
      $region22: #{bottleneck.6} parent=11 // pred_check_branch
        %247 = sbr.rel (%p245) target = $region24
      $region23: #{bottleneck.6} parent=11 // pred_region
        _
      $region24: #{bottleneck.6} parent=11 // pred_fallthru
        _
      // Predicated region
      $region25: #{bottleneck.6} parent=11 // pred_check
        %p248 = pneg %p125
      $region26: #{bottleneck.6} parent=11 // pred_check_branch
        %250 = sbr.rel (%p248) target = $region28
      $region27: #{bottleneck.6} parent=11 // pred_region
        _
      $region28: #{bottleneck.6} parent=11 // pred_fallthru
        _
      // Predicated region
      $region29: #{bottleneck.6} parent=11 // pred_check
        %p251 = pneg %p146
      $region30: #{bottleneck.6} parent=11 // pred_check_branch
        %253 = sbr.rel (%p251) target = $region32
      $region31: #{bottleneck.6} parent=11 // pred_region
        _
      $region32: #{bottleneck.6} parent=11 // pred_fallthru
        _
    $region12: #{bottleneck.6} parent=5 // pred_fallthru
      _
    %p254 = scmp.lt.s32.totalorder %s15, 2
    // Predicated region
    $region33: #{bottleneck.6} parent=5 // pred_check
      %p255 = pneg %p254
    $region34: #{bottleneck.6} parent=5 // pred_check_branch
      %257 = sbr.rel (%p255) target = $region36
    $region35: #{bottleneck.6} parent=5 // pred_region
      // Predicated region
      $region37: #{bottleneck.6} parent=35 // pred_check
        %p258 = pneg %p77
      $region38: #{bottleneck.6} parent=35 // pred_check_branch
        %260 = sbr.rel (%p258) target = $region40
      $region39: #{bottleneck.6} parent=35 // pred_region
        %p261 = scmp.lt.s32.totalorder %s15, 1
        %s262 = scalar_select %p261, %s15, 1
        %s263 = smul.addr %s262, 8
        %s264 = smul.addr %s263, 8
        %s265 = scalar_lea.vmem %s2, %s264
      $region40: #{bottleneck.6} parent=35 // pred_fallthru
        _
    $region36: #{bottleneck.6} parent=5 // pred_fallthru
      _
    %p266 = scmp.le.s32.totalorder 1, %s15
    %p267 = scmp.lt.s32.totalorder %s15, 3
    %p268 = pnand %p266, %p267
    %p269 = pneg %p268
    // Predicated region
    $region41: #{bottleneck.6} parent=5 // pred_check
      _
    $region42: #{bottleneck.6} parent=5 // pred_check_branch
      %271 = sbr.rel (%p268) target = $region44
    $region43: #{bottleneck.6} parent=5 // pred_region
      %s272 = ssub.s32 %s15, 1
      %p273 = pneg %p36
      %p274 = pneg %p33
      %p275 = pneg %p57
      %p276 = pneg %p54
      %p277 = scmp.lt.s32.totalorder %s20, 1
      %s278 = scalar_select %p277, %s20, 1
      %s279 = smul.addr %s278, 8
      %s280 = smul.addr %s279, 8
      %s281 = scalar_lea.vmem %s2, %s280
      %p282 = pneg %p83
      %p283 = pneg %p80
      %p284 = pneg %p104
      %p285 = pneg %p101
      %p286 = pneg %p125
      %p287 = pneg %p122
      %p288 = pneg %p146
      %p289 = pneg %p143
      %p290 = pneg %p172
      %p291 = pneg %p169
      %p292 = scmp.lt.s32.totalorder %s20, 1
      %s293 = scalar_select %p292, %s20, 1
      %s294 = smul.addr %s293, 8
      %s295 = smul.addr %s294, 8
      %s296 = scalar_lea.vmem %s6, %s295
      %p297 = pneg %p198
      %p298 = pneg %p195
      %p299 = scmp.lt.s32.totalorder %s20, 1
      %s300 = scalar_select %p299, %s20, 1
      %s301 = scalar_lea.vmem %s7, %s300
      %p302 = pneg %p224
      %p303 = pneg %p221
      %p304 = scmp.lt.s32.totalorder %s20, 1
      %s305 = scalar_select %p304, %s20, 1
      %s306 = scalar_lea.vmem %s8, %s305
      %p307 = scmp.lt.s32.totalorder %s20, 1
      %s308 = scalar_select %p307, %s20, 1
      %s309 = smul.addr %s308, 8
      %s310 = smul.addr %s309, 8
      %s311 = scalar_lea.vmem %s2, %s310
      %p312 = scmp.lt.s32.totalorder %s20, 1
      %s313 = scalar_select %p312, %s20, 1
      %s314 = smul.addr %s313, 8
      %s315 = smul.addr %s314, 8
      %s316 = scalar_lea.vmem %s6, %s315
      %p317 = scmp.lt.s32.totalorder %s20, 1
      %s318 = scalar_select %p317, %s20, 1
      %s319 = scalar_lea.vmem %s7, %s318
      %p320 = scmp.lt.s32.totalorder %s20, 1
      %s321 = scalar_select %p320, %s20, 1
      %s322 = scalar_lea.vmem %s8, %s321
      %v324 = vld [vmem:[%s0] sm:$0x1]
      %v325 = vld [vmem:[%s0 + $0x1] sm:$0x1]
      %vm326 = vcmask 24576
      %v327 = vsel %vm326, %v324, 0.0
      %v328 = vsel %vm326, %v325, 0.0
      %v329 = vadd.f32 %v327, %v328
      %v330 = vld [vmem:[%s1] sm:$0x1]
      %v331 = vld [vmem:[%s1 + $0x1] sm:$0x1]
      %v332 = vsel %vm326, %v330, 0.0
      %v333 = vsel %vm326, %v331, 0.0
      %v334 = vadd.f32 %v332, %v333
      %v335 = vrcp.pop 128.0
      %v336 = vmul.f32 %v329, %v335
      %v337 = vmul.f32 %v334, %v335
      %v338 = vmul.f32 %v336, %v336
      %v339 = vsub.f32 %v337, %v338
      %v340 = vmax.f32 %v339, 0.0
      %v341 = vld [vmem:[%s4] sm:$0x1]
      %v342 = vadd.f32 %v340, 1e-05
      %v343 = vrsqrt.pop %v342
      %v344 = vmul.f32 %v341, %v343
      %v345 = vld [vmem:[%s5] sm:$0x1]
      %v346 = vmul.f32 %v336, %v344
      %v347 = vsub.f32 %v345, %v346
      %v348 = vld [vmem:[%s311] sm:$0xff]
      %v349 = vld [vmem:[%s311 + $0x8] sm:$0xff]
      %v350 = vld [vmem:[%s311 + $0x10] sm:$0xff]
      %v351 = vld [vmem:[%s311 + $0x18] sm:$0xff]
      %v352 = vld [vmem:[%s311 + $0x20] sm:$0xff]
      %v353 = vld [vmem:[%s311 + $0x28] sm:$0xff]
      %v354 = vld [vmem:[%s311 + $0x30] sm:$0xff]
      %v355 = vld [vmem:[%s311 + $0x38] sm:$0xff]
      %v357 = vlaneseq
      %v358 = vshrl.u32 %v357, 7
      %v359 = vsub.s32 0, %v358
      %v360 = vrot.slane %v344, %v359
      %v362 = vmul.f32 %v348, %v360
      %v363 = vmul.f32 %v349, %v360
      %v364 = vmul.f32 %v350, %v360
      %v365 = vmul.f32 %v351, %v360
      %v366 = vmul.f32 %v352, %v360
      %v367 = vmul.f32 %v353, %v360
      %v368 = vmul.f32 %v354, %v360
      %v369 = vmul.f32 %v355, %v360
      %v371 = vlaneseq
      %v372 = vshrl.u32 %v371, 7
      %v373 = vsub.s32 0, %v372
      %v374 = vrot.slane %v347, %v373
      %v376 = vadd.f32 %v362, %v374
      %v377 = vadd.f32 %v363, %v374
      %v378 = vadd.f32 %v364, %v374
      %v379 = vadd.f32 %v365, %v374
      %v380 = vadd.f32 %v366, %v374
      %v381 = vadd.f32 %v367, %v374
      %v382 = vadd.f32 %v368, %v374
      %v383 = vadd.f32 %v369, %v374
      %v384 = vmax.f32 %v376, 0.0
      %v385 = vmax.f32 %v377, 0.0
      %v386 = vmax.f32 %v378, 0.0
      %v387 = vmax.f32 %v379, 0.0
      %v388 = vmax.f32 %v380, 0.0
      %v389 = vmax.f32 %v381, 0.0
      %v390 = vmax.f32 %v382, 0.0
      %v391 = vmax.f32 %v383, 0.0
      %v392 = vpack.c.bf16 %v385, %v384
      %v393 = vpack.c.bf16 %v387, %v386
      %v394 = vpack.c.bf16 %v389, %v388
      %v395 = vpack.c.bf16 %v391, %v390
      %v396 = vld [vmem:[%s3] sm:$0x3]
      %vm397 = vcmask 31744
      %v399 = vsel %vm397, %v392, 0
      %v402 = vsel %vm397, %v393, 0
      %v405 = vsel %vm397, %v394, 0
      %v408 = vsel %vm397, %v395, 0
      %vm410 = vcmask 1041408
      %v412 = vsel %vm410, %v396, 0
      %414 = vmatprep.subr.bf16.mxu0 0
      %415 = vmatpush1.bf16.msra.mxu0 %v412
      %416 = vmatprep.subr.bf16.mxu0 0
      %417 = vmatpush1.bf16.msra.mxu0 0
      %418 = vmatprep.subr.bf16.mxu0 0
      %419 = vmatpush1.bf16.msra.mxu0 0
      %420 = vmatprep.subr.bf16.mxu0 0
      %421 = vmatpush1.bf16.msra.mxu0 0
      %422 = vmatprep.subr.bf16.mxu0 0
      %423 = vmatpush1.bf16.msra.mxu0 0
      %424 = vmatprep.subr.bf16.mxu0 0
      %425 = vmatpush1.bf16.msra.mxu0 0
      %426 = vmatprep.subr.bf16.mxu0 0
      %427 = vmatpush1.bf16.msra.mxu0 0
      %428 = vmatprep.subr.bf16.mxu0 0
      %429 = vmatpush1.bf16.msra.mxu0 0
      %430 = vmatprep.subr.bf16.mxu0 0
      %431 = vmatpush1.bf16.msra.mxu0 0
      %432 = vmatprep.subr.bf16.mxu0 0
      %433 = vmatpush1.bf16.msra.mxu0 0
      %434 = vmatprep.subr.bf16.mxu0 0
      %435 = vmatpush1.bf16.msra.mxu0 0
      %436 = vmatprep.subr.bf16.mxu0 0
      %437 = vmatpush1.bf16.msra.mxu0 0
      %438 = vmatprep.subr.bf16.mxu0 0
      %439 = vmatpush1.bf16.msra.mxu0 0
      %440 = vmatprep.subr.bf16.mxu0 0
      %441 = vmatpush1.bf16.msra.mxu0 0
      %442 = vmatprep.subr.bf16.mxu0 0
      %443 = vmatpush1.bf16.msra.mxu0 0
      %444 = vmatprep.subr.bf16.mxu0 0
      %445 = vmatpush1.bf16.msra.mxu0 0
      %446 = vmatprep.mubr.bf16.mxu0 0
      %447 = vmatmul.mubr.bf16.gmra.mrb[0].mxu0 %v399
      %v448 = vpop.f32.mrb[0].mxu0
      %v449 = vadd.f32 0.0, %v448
      %v450 = vpop.f32.mrb[0].mxu0
      %v451 = vpop.f32.mrb[0].mxu0
      %v452 = vadd.f32 0.0, %v451
      %v453 = vpop.f32.mrb[0].mxu0
      %454 = vmatprep.mubr.bf16.mxu0 0
      %455 = vmatmul.mubr.bf16.gmra.mrb[0].mxu0 %v402
      %v456 = vpop.f32.mrb[0].mxu0
      %v457 = vadd.f32 0.0, %v456
      %v458 = vpop.f32.mrb[0].mxu0
      %v459 = vpop.f32.mrb[0].mxu0
      %v460 = vadd.f32 0.0, %v459
      %v461 = vpop.f32.mrb[0].mxu0
      %462 = vmatprep.mubr.bf16.mxu0 0
      %463 = vmatmul.mubr.bf16.gmra.mrb[0].mxu0 %v405
      %v464 = vpop.f32.mrb[0].mxu0
      %v465 = vadd.f32 0.0, %v464
      %v466 = vpop.f32.mrb[0].mxu0
      %v467 = vpop.f32.mrb[0].mxu0
      %v468 = vadd.f32 0.0, %v467
      %v469 = vpop.f32.mrb[0].mxu0
      %470 = vmatprep.mubr.bf16.mxu0 0
      %471 = vmatmul.mubr.bf16.gmra.mrb[0].mxu0 %v408
      %v472 = vpop.f32.mrb[0].mxu0
      %v473 = vadd.f32 0.0, %v472
      %v474 = vpop.f32.mrb[0].mxu0
      %v475 = vpop.f32.mrb[0].mxu0
      %v476 = vadd.f32 0.0, %v475
      %v477 = vpop.f32.mrb[0].mxu0
      %478 = vdwg.mxu0
      %vm479 = vcmask 130048
      %480 = vst.msk [vmem:[%s316] sm:$0xff] %vm479, %v449
      %481 = vst.msk [vmem:[%s316 + $0x8] sm:$0xff] %vm479, %v452
      %482 = vst.msk [vmem:[%s316 + $0x10] sm:$0xff] %vm479, %v457
      %483 = vst.msk [vmem:[%s316 + $0x18] sm:$0xff] %vm479, %v460
      %484 = vst.msk [vmem:[%s316 + $0x20] sm:$0xff] %vm479, %v465
      %485 = vst.msk [vmem:[%s316 + $0x28] sm:$0xff] %vm479, %v468
      %486 = vst.msk [vmem:[%s316 + $0x30] sm:$0xff] %vm479, %v473
      %487 = vst.msk [vmem:[%s316 + $0x38] sm:$0xff] %vm479, %v476
      %v488 = vsel %vm479, %v449, 0.0
      %v489 = vsel %vm479, %v452, 0.0
      %v490 = vadd.f32 %v488, %v489
      %v491 = vsel %vm479, %v457, 0.0
      %v492 = vadd.f32 %v490, %v491
      %v493 = vsel %vm479, %v460, 0.0
      %v494 = vadd.f32 %v492, %v493
      %v495 = vsel %vm479, %v465, 0.0
      %v496 = vadd.f32 %v494, %v495
      %v497 = vsel %vm479, %v468, 0.0
      %v498 = vadd.f32 %v496, %v497
      %v499 = vsel %vm479, %v473, 0.0
      %v500 = vadd.f32 %v498, %v499
      %v501 = vsel %vm479, %v476, 0.0
      %v502 = vadd.f32 %v500, %v501
      %v503 = vrot.slane %v502, 4
      %v504 = vadd.f32 %v502, %v503
      %v505 = vrot.slane %v504, 2
      %v506 = vadd.f32 %v504, %v505
      %v507 = vrot.slane %v506, 1
      %v508 = vadd.f32 %v506, %v507
      %vm509 = vcmask 122880
      %510 = vst.msk [vmem:[%s319] sm:$0x1] %vm509, %v508
      %v511 = vmul.f32 %v449, %v449
      %v512 = vmul.f32 %v452, %v452
      %v513 = vmul.f32 %v457, %v457
      %v514 = vmul.f32 %v460, %v460
      %v515 = vmul.f32 %v465, %v465
      %v516 = vmul.f32 %v468, %v468
      %v517 = vmul.f32 %v473, %v473
      %v518 = vmul.f32 %v476, %v476
      %v519 = vsel %vm479, %v511, 0.0
      %v520 = vsel %vm479, %v512, 0.0
      %v521 = vadd.f32 %v519, %v520
      %v522 = vsel %vm479, %v513, 0.0
      %v523 = vadd.f32 %v521, %v522
      %v524 = vsel %vm479, %v514, 0.0
      %v525 = vadd.f32 %v523, %v524
      %v526 = vsel %vm479, %v515, 0.0
      %v527 = vadd.f32 %v525, %v526
      %v528 = vsel %vm479, %v516, 0.0
      %v529 = vadd.f32 %v527, %v528
      %v530 = vsel %vm479, %v517, 0.0
      %v531 = vadd.f32 %v529, %v530
      %v532 = vsel %vm479, %v518, 0.0
      %v533 = vadd.f32 %v531, %v532
      %v534 = vrot.slane %v533, 4
      %v535 = vadd.f32 %v533, %v534
      %v536 = vrot.slane %v535, 2
      %v537 = vadd.f32 %v535, %v536
      %v538 = vrot.slane %v537, 1
      %v539 = vadd.f32 %v537, %v538
      %540 = vst.msk [vmem:[%s322] sm:$0x1] %vm509, %v539
      %p541 = scmp.lt.s32.totalorder %s20, 1
      %s542 = scalar_select %p541, %s20, 1
      %s543 = smul.addr %s542, 8
      %s544 = smul.addr %s543, 8
      %s545 = scalar_lea.vmem %s6, %s544
      %p546 = scmp.lt.s32.totalorder %s20, 1
      %s547 = scalar_select %p546, %s20, 1
      %s548 = scalar_lea.vmem %s7, %s547
      %p549 = scmp.lt.s32.totalorder %s20, 1
      %s550 = scalar_select %p549, %s20, 1
      %s551 = scalar_lea.vmem %s8, %s550
      // Predicated region
      $region45: #{bottleneck.6} parent=43 // pred_check
        %p552 = pneg %p169
      $region46: #{bottleneck.6} parent=43 // pred_check_branch
        %554 = sbr.rel (%p552) target = $region48
      $region47: #{bottleneck.6} parent=43 // pred_region
        _
      $region48: #{bottleneck.6} parent=43 // pred_fallthru
        _
      // Predicated region
      $region49: #{bottleneck.6} parent=43 // pred_check
        %p555 = pneg %p195
      $region50: #{bottleneck.6} parent=43 // pred_check_branch
        %557 = sbr.rel (%p555) target = $region52
      $region51: #{bottleneck.6} parent=43 // pred_region
        _
      $region52: #{bottleneck.6} parent=43 // pred_fallthru
        _
      // Predicated region
      $region53: #{bottleneck.6} parent=43 // pred_check
        %p558 = pneg %p221
      $region54: #{bottleneck.6} parent=43 // pred_check_branch
        %560 = sbr.rel (%p558) target = $region56
      $region55: #{bottleneck.6} parent=43 // pred_region
        _
      $region56: #{bottleneck.6} parent=43 // pred_fallthru
        _
    $region44: #{bottleneck.6} parent=5 // pred_fallthru
      _
    %p561 = scmp.le.s32.totalorder 2, %s15
    // Predicated region
    $region57: #{bottleneck.6} parent=5 // pred_check
      %p562 = pneg %p561
    $region58: #{bottleneck.6} parent=5 // pred_check_branch
      %564 = sbr.rel (%p562) target = $region60
    $region59: #{bottleneck.6} parent=5 // pred_region
      %s565 = ssub.s32 %s15, 2
      // Predicated region
      $region61: #{bottleneck.6} parent=59 // pred_check
        %p566 = pneg %p175
      $region62: #{bottleneck.6} parent=59 // pred_check_branch
        %568 = sbr.rel (%p566) target = $region64
      $region63: #{bottleneck.6} parent=59 // pred_region
        %p569 = scmp.lt.s32.totalorder %s21, 1
        %s570 = scalar_select %p569, %s21, 1
        %s571 = smul.addr %s570, 8
        %s572 = smul.addr %s571, 8
        %s573 = scalar_lea.vmem %s6, %s572
      $region64: #{bottleneck.6} parent=59 // pred_fallthru
        _
      // Predicated region
      $region65: #{bottleneck.6} parent=59 // pred_check
        %p574 = pneg %p201
      $region66: #{bottleneck.6} parent=59 // pred_check_branch
        %576 = sbr.rel (%p574) target = $region68
      $region67: #{bottleneck.6} parent=59 // pred_region
        %p577 = scmp.lt.s32.totalorder %s21, 1
        %s578 = scalar_select %p577, %s21, 1
        %s579 = scalar_lea.vmem %s7, %s578
      $region68: #{bottleneck.6} parent=59 // pred_fallthru
        _
      // Predicated region
      $region69: #{bottleneck.6} parent=59 // pred_check
        %p580 = pneg %p227
      $region70: #{bottleneck.6} parent=59 // pred_check_branch
        %582 = sbr.rel (%p580) target = $region72
      $region71: #{bottleneck.6} parent=59 // pred_region
        %p583 = scmp.lt.s32.totalorder %s21, 1
        %s584 = scalar_select %p583, %s21, 1
        %s585 = scalar_lea.vmem %s8, %s584
      $region72: #{bottleneck.6} parent=59 // pred_fallthru
        _
    $region60: #{bottleneck.6} parent=5 // pred_fallthru
      _
  $region6: #{bottleneck.6} parent=0 // loop_footer
    %s19 = sadd.s32 1, %s15
  $region7: #{bottleneck.6} parent=0 // loop_footer_branch
    %14 = sbr.rel target = $region3
  $region8: #{bottleneck.6} parent=0 // loop_exit
    _

// kernel: bottleneck.4
$region0: #{bottleneck.4}
  #allocation0 [shape = 'u32[]', space=smem, size = 0x4, offset = 0x4, fixed_abs, tag = 'smem constant byte address 0x4 - core index']
  #allocation1 [shape = 'u32[144,128]{1,0:T(1,128)}', space=vmem, size = 0x12000, scoped, tag = 'internal scratch']
  %s0 = inlined_call_operand.hbm [shape: f32[2,64,16], index: 0, kind: input, shape index: {}]
  %s1 = inlined_call_operand.vmem [shape: bf16[16,4], index: 1, kind: input, shape index: {}]
  %s2 = inlined_call_operand.vmem [shape: f32[2,64,4], index: 2, kind: output, shape index: {0}]
  %s3 = inlined_call_operand.vmem [shape: f32[2,1,4], index: 3, kind: output, shape index: {1}]
  %s4 = inlined_call_operand.vmem [shape: f32[2,1,4], index: 4, kind: output, shape index: {2}]
  %5 = xla_tuple %s2, %s3, %s4
  %s6 = sld [smem:[#allocation0]]
  $region61: #{bottleneck.4} parent=0
    _
  %s8 = ssub.s32 1, %s6
  %s9 = scalar_select 0, %s8, %s6
  $region1: #{bottleneck.4} parent=0
    #allocation2 [shape = 'u8[65536]{0}', space=vmem, size = 0x10000, scoped, tag = 'input window, operand 0']
    #allocation3 [shape = 's32[2]{0}', space=sflag, size = 0x8, scoped, tag = 'scoped memory for bottleneck.4']
    %10 = vsyncpa [#allocation3], 0
    %s11 = scalar_lea.sflag [#allocation3], 1
    %12 = vsyncpa %s11, 0
    loop: start=0, step=1, limit=4
    $region2: #{bottleneck.4} parent=1 // loop_pre_header
      _
    $region3: #{bottleneck.4} parent=1 // loop_header
      %s14 = sphi 0, %s18
      %p15 = scmp.ge.s32.totalorder %s14, 4
      %s24 = sphi 0, %s26
      %s27 = sphi 0, %s24
      %s28 = sphi 0, %s27
      %s44 = sphi 0, %s28
      %s48 = sphi 0, %s48
      %s50 = sphi 0, %s48
      %s51 = sphi 0, %s50
      %s65 = sphi 0, %s51
      %s71 = sphi 0, %s73
      %s74 = sphi 0, %s71
      %s75 = sphi 0, %s74
      %s91 = sphi 0, %s75
      %s97 = sphi 0, %s99
      %s100 = sphi 0, %s97
      %s101 = sphi 0, %s100
      %s117 = sphi 0, %s101
      %s123 = sphi 0, %s125
      %s126 = sphi 0, %s123
      %s127 = sphi 0, %s126
      %s143 = sphi 0, %s127
    $region4: #{bottleneck.4} parent=1 // loop_header_branch
      %17 = sbr.rel (%p15) target = $region8
    $region5: #{bottleneck.4} parent=1 // loop_body
      %s19 = ssub.s32 %s14, 1
      %s20 = ssub.s32 %s14, 2
      %s21 = sadd.s32 %s14, 1
      %s22 = ssub.s32 %s14, %s21
      %p23 = scmp.eq.s32.totalorder %s22, 0
      %s25 = sadd.s32 %s24, 1
      %s26 = scalar_select %p23, %s24, %s25
      %p29 = pneg %p23
      %p30 = scmp.eq.s32.totalorder %s14, 1
      %p31 = por %p29, %p30
      %p32 = scmp.ne.s32.totalorder %s24, %s27
      %p33 = scmp.eq.s32.totalorder %s14, 0
      %p34 = por %p32, %p33
      %p35 = scmp.ne.s32.totalorder %s24, %s27
      %p36 = scmp.eq.s32.totalorder %s19, 1
      %p37 = por %p35, %p36
      %p38 = scmp.ne.s32.totalorder %s27, %s28
      %p39 = scmp.eq.s32.totalorder %s19, 0
      %p40 = por %p38, %p39
      %p41 = scmp.ne.s32.totalorder %s27, %s28
      %p42 = scmp.eq.s32.totalorder %s20, 1
      %p43 = por %p41, %p42
      %p45 = scmp.ne.s32.totalorder %s28, %s44
      %p46 = scmp.eq.s32.totalorder %s20, 0
      %p47 = por %p45, %p46
      %s49 = sadd.s32 %s48, 1
      %p52 = scmp.eq.s32.totalorder %s14, 1
      %p53 = scmp.ne.s32.totalorder %s48, %s50
      %p54 = scmp.eq.s32.totalorder %s14, 0
      %p55 = por %p53, %p54
      %p56 = scmp.ne.s32.totalorder %s48, %s50
      %p57 = scmp.eq.s32.totalorder %s19, 1
      %p58 = por %p56, %p57
      %p59 = scmp.ne.s32.totalorder %s50, %s51
      %p60 = scmp.eq.s32.totalorder %s19, 0
      %p61 = por %p59, %p60
      %p62 = scmp.ne.s32.totalorder %s50, %s51
      %p63 = scmp.eq.s32.totalorder %s20, 1
      %p64 = por %p62, %p63
      %p66 = scmp.ne.s32.totalorder %s51, %s65
      %p67 = scmp.eq.s32.totalorder %s20, 0
      %p68 = por %p66, %p67
      %s69 = ssub.s32 %s14, %s21
      %p70 = scmp.eq.s32.totalorder %s69, 0
      %s72 = sadd.s32 %s71, 1
      %s73 = scalar_select %p70, %s71, %s72
      %p76 = pneg %p70
      %p77 = scmp.eq.s32.totalorder %s14, 1
      %p78 = por %p76, %p77
      %p79 = scmp.ne.s32.totalorder %s71, %s74
      %p80 = scmp.eq.s32.totalorder %s14, 0
      %p81 = por %p79, %p80
      %p82 = scmp.ne.s32.totalorder %s71, %s74
      %p83 = scmp.eq.s32.totalorder %s19, 1
      %p84 = por %p82, %p83
      %p85 = scmp.ne.s32.totalorder %s74, %s75
      %p86 = scmp.eq.s32.totalorder %s19, 0
      %p87 = por %p85, %p86
      %p88 = scmp.ne.s32.totalorder %s74, %s75
      %p89 = scmp.eq.s32.totalorder %s20, 1
      %p90 = por %p88, %p89
      %p92 = scmp.ne.s32.totalorder %s75, %s91
      %p93 = scmp.eq.s32.totalorder %s20, 0
      %p94 = por %p92, %p93
      %s95 = ssub.s32 %s14, %s21
      %p96 = scmp.eq.s32.totalorder %s95, 0
      %s98 = sadd.s32 %s97, 1
      %s99 = scalar_select %p96, %s97, %s98
      %p102 = pneg %p96
      %p103 = scmp.eq.s32.totalorder %s14, 1
      %p104 = por %p102, %p103
      %p105 = scmp.ne.s32.totalorder %s97, %s100
      %p106 = scmp.eq.s32.totalorder %s14, 0
      %p107 = por %p105, %p106
      %p108 = scmp.ne.s32.totalorder %s97, %s100
      %p109 = scmp.eq.s32.totalorder %s19, 1
      %p110 = por %p108, %p109
      %p111 = scmp.ne.s32.totalorder %s100, %s101
      %p112 = scmp.eq.s32.totalorder %s19, 0
      %p113 = por %p111, %p112
      %p114 = scmp.ne.s32.totalorder %s100, %s101
      %p115 = scmp.eq.s32.totalorder %s20, 1
      %p116 = por %p114, %p115
      %p118 = scmp.ne.s32.totalorder %s101, %s117
      %p119 = scmp.eq.s32.totalorder %s20, 0
      %p120 = por %p118, %p119
      %s121 = ssub.s32 %s14, %s21
      %p122 = scmp.eq.s32.totalorder %s121, 0
      %s124 = sadd.s32 %s123, 1
      %s125 = scalar_select %p122, %s123, %s124
      %p128 = pneg %p122
      %p129 = scmp.eq.s32.totalorder %s14, 1
      %p130 = por %p128, %p129
      %p131 = scmp.ne.s32.totalorder %s123, %s126
      %p132 = scmp.eq.s32.totalorder %s14, 0
      %p133 = por %p131, %p132
      %p134 = scmp.ne.s32.totalorder %s123, %s126
      %p135 = scmp.eq.s32.totalorder %s19, 1
      %p136 = por %p134, %p135
      %p137 = scmp.ne.s32.totalorder %s126, %s127
      %p138 = scmp.eq.s32.totalorder %s19, 0
      %p139 = por %p137, %p138
      %p140 = scmp.ne.s32.totalorder %s126, %s127
      %p141 = scmp.eq.s32.totalorder %s20, 1
      %p142 = por %p140, %p141
      %p144 = scmp.ne.s32.totalorder %s127, %s143
      %p145 = scmp.eq.s32.totalorder %s20, 0
      %p146 = por %p144, %p145
      %p147 = scmp.le.s32.totalorder 1, %s14
      %p148 = scmp.lt.s32.totalorder %s14, 3
      %p149 = pnand %p147, %p148
      %p150 = pneg %p149
      // Predicated region
      $region9: #{bottleneck.4} parent=5 // pred_check
        _
      $region10: #{bottleneck.4} parent=5 // pred_check_branch
        %152 = sbr.rel (%p149) target = $region12
      $region11: #{bottleneck.4} parent=5 // pred_region
        %s153 = ssub.s32 %s14, 1
        // Predicated region
        $region13: #{bottleneck.4} parent=11 // pred_check
          %p154 = pneg %p61
        $region14: #{bottleneck.4} parent=11 // pred_check_branch
          %156 = sbr.rel (%p154) target = $region16
        $region15: #{bottleneck.4} parent=11 // pred_region
          _
        $region16: #{bottleneck.4} parent=11 // pred_fallthru
          _
      $region12: #{bottleneck.4} parent=5 // pred_fallthru
        _
      %p157 = scmp.lt.s32.totalorder %s14, 2
      // Predicated region
      $region17: #{bottleneck.4} parent=5 // pred_check
        %p158 = pneg %p157
      $region18: #{bottleneck.4} parent=5 // pred_check_branch
        %160 = sbr.rel (%p158) target = $region20
      $region19: #{bottleneck.4} parent=5 // pred_region
        // Predicated region
        $region21: #{bottleneck.4} parent=19 // pred_check
          %p161 = pneg %p34
        $region22: #{bottleneck.4} parent=19 // pred_check_branch
          %163 = sbr.rel (%p161) target = $region24
        $region23: #{bottleneck.4} parent=19 // pred_region
          %s164 = sand.u32 %s24, 1
          %s165 = scalar_lea.sflag [#allocation3], %s164
          %s166 = sand.u32 %s24, 1
          %s167 = smul.addr %s166, 64
          %s168 = scalar_lea.vmem [#allocation2], %s167
          %s170 = ssub.s32 1024, 1024
          %171 = vsyncadd %s165, %s170
          %s172 = smul.addr %s14, 8
          %s173 = smul.addr %s172, 128
          %s174 = scalar_lea.hbm %s0, %s173
          %s175 = sshll.u32 %s168, 4
          %s176 = int_to_ptr.vmem [resolvable:$true] %s175
          %181 = dma.hbm_to_vmem [thread:$0]  %s174, 1024, %s176, %s165, 128, 128, 8
        $region24: #{bottleneck.4} parent=19 // pred_fallthru
          _
      $region20: #{bottleneck.4} parent=5 // pred_fallthru
        _
      %p182 = scmp.le.s32.totalorder 1, %s14
      %p183 = scmp.lt.s32.totalorder %s14, 3
      %p184 = pnand %p182, %p183
      %p185 = pneg %p184
      // Predicated region
      $region25: #{bottleneck.4} parent=5 // pred_check
        _
      $region26: #{bottleneck.4} parent=5 // pred_check_branch
        %187 = sbr.rel (%p184) target = $region28
      $region27: #{bottleneck.4} parent=5 // pred_region
        %s188 = ssub.s32 %s14, 1
        %s189 = sand.u32 %s27, 1
        %s190 = scalar_lea.sflag [#allocation3], %s189
        %s191 = sand.u32 %s27, 1
        %s192 = smul.addr %s191, 64
        %s193 = scalar_lea.vmem [#allocation2], %s192
        // Predicated region
        $region29: #{bottleneck.4} parent=27 // pred_check
          %p194 = pneg %p40
        $region30: #{bottleneck.4} parent=27 // pred_check_branch
          %196 = sbr.rel (%p194) target = $region32
        $region31: #{bottleneck.4} parent=27 // pred_region
          %197 = dma.done %s190, 1024
        $region32: #{bottleneck.4} parent=27 // pred_fallthru
          _
        %s198 = sand.u32 %s27, 1
        %s199 = scalar_lea.sflag [#allocation3], %s198
        %s200 = sand.u32 %s27, 1
        %s201 = smul.addr %s200, 64
        %s202 = scalar_lea.vmem [#allocation2], %s201
        %p203 = pneg %p40
        %p204 = pneg %p37
        %p205 = pneg %p61
        %p206 = pneg %p58
        %p207 = pneg %p87
        %p208 = pneg %p84
        %p209 = scmp.lt.s32.totalorder %s19, 1
        %s210 = scalar_select %p209, %s19, 1
        %s211 = smul.addr %s210, 8
        %s212 = smul.addr %s211, 8
        %s213 = scalar_lea.vmem %s2, %s212
        %p214 = pneg %p113
        %p215 = pneg %p110
        %p216 = scmp.lt.s32.totalorder %s19, 1
        %s217 = scalar_select %p216, %s19, 1
        %s218 = scalar_lea.vmem %s3, %s217
        %p219 = pneg %p139
        %p220 = pneg %p136
        %p221 = scmp.lt.s32.totalorder %s19, 1
        %s222 = scalar_select %p221, %s19, 1
        %s223 = scalar_lea.vmem %s4, %s222
        %p224 = scmp.lt.s32.totalorder %s19, 1
        %s225 = scalar_select %p224, %s19, 1
        %s226 = smul.addr %s225, 8
        %s227 = smul.addr %s226, 8
        %s228 = scalar_lea.vmem %s2, %s227
        %p229 = scmp.lt.s32.totalorder %s19, 1
        %s230 = scalar_select %p229, %s19, 1
        %s231 = scalar_lea.vmem %s3, %s230
        %p232 = scmp.lt.s32.totalorder %s19, 1
        %s233 = scalar_select %p232, %s19, 1
        %s234 = scalar_lea.vmem %s4, %s233
        %v236 = vld [vmem:[%s193] sm:$0xff]
        %v237 = vld [vmem:[%s193 + $0x8] sm:$0xff]
        %v238 = vld [vmem:[%s193 + $0x10] sm:$0xff]
        %v239 = vld [vmem:[%s193 + $0x18] sm:$0xff]
        %v240 = vld [vmem:[%s193 + $0x20] sm:$0xff]
        %v241 = vld [vmem:[%s193 + $0x28] sm:$0xff]
        %v242 = vld [vmem:[%s193 + $0x30] sm:$0xff]
        %v243 = vld [vmem:[%s193 + $0x38] sm:$0xff]
        %v244 = vpack.c.bf16 %v237, %v236
        %v245 = vpack.c.bf16 %v239, %v238
        %v246 = vpack.c.bf16 %v241, %v240
        %v247 = vpack.c.bf16 %v243, %v242
        %v248 = vld [vmem:[%s1] sm:$0xf]
        %v249 = vld [vmem:[%s1 + $0x4] sm:$0xf]
        %v252 = vunpack.c.l.b16 %v248
        %v253 = vunpack.c.l.b16 %v249
        %v254 = vpack.c.b16 %v253, %v252
        %vm256 = vcmask 130048
        %v258 = vsel %vm256, %v244, 0
        %v261 = vsel %vm256, %v245, 0
        %v264 = vsel %vm256, %v246, 0
        %v267 = vsel %vm256, %v247, 0
        %269 = vmatprep.subr.bf16.mxu0 0
        %270 = vmatpush1.bf16.msra.mxu0 %v254
        %271 = vmatprep.subr.bf16.mxu0 0
        %272 = vmatpush1.bf16.msra.mxu0 0
        %273 = vmatprep.subr.bf16.mxu0 0
        %274 = vmatpush1.bf16.msra.mxu0 0
        %275 = vmatprep.subr.bf16.mxu0 0
        %276 = vmatpush1.bf16.msra.mxu0 0
        %277 = vmatprep.subr.bf16.mxu0 0
        %278 = vmatpush1.bf16.msra.mxu0 0
        %279 = vmatprep.subr.bf16.mxu0 0
        %280 = vmatpush1.bf16.msra.mxu0 0
        %281 = vmatprep.subr.bf16.mxu0 0
        %282 = vmatpush1.bf16.msra.mxu0 0
        %283 = vmatprep.subr.bf16.mxu0 0
        %284 = vmatpush1.bf16.msra.mxu0 0
        %285 = vmatprep.subr.bf16.mxu0 0
        %286 = vmatpush1.bf16.msra.mxu0 0
        %287 = vmatprep.subr.bf16.mxu0 0
        %288 = vmatpush1.bf16.msra.mxu0 0
        %289 = vmatprep.subr.bf16.mxu0 0
        %290 = vmatpush1.bf16.msra.mxu0 0
        %291 = vmatprep.subr.bf16.mxu0 0
        %292 = vmatpush1.bf16.msra.mxu0 0
        %293 = vmatprep.subr.bf16.mxu0 0
        %294 = vmatpush1.bf16.msra.mxu0 0
        %295 = vmatprep.subr.bf16.mxu0 0
        %296 = vmatpush1.bf16.msra.mxu0 0
        %297 = vmatprep.subr.bf16.mxu0 0
        %298 = vmatpush1.bf16.msra.mxu0 0
        %299 = vmatprep.subr.bf16.mxu0 0
        %300 = vmatpush1.bf16.msra.mxu0 0
        %301 = vmatprep.mubr.bf16.mxu0 0
        %302 = vmatmul.mubr.bf16.gmra.mrb[0].mxu0 %v258
        %v303 = vpop.f32.mrb[0].mxu0
        %v304 = vadd.f32 0.0, %v303
        %v305 = vpop.f32.mrb[0].mxu0
        %v306 = vpop.f32.mrb[0].mxu0
        %v307 = vadd.f32 0.0, %v306
        %v308 = vpop.f32.mrb[0].mxu0
        %309 = vmatprep.mubr.bf16.mxu0 0
        %310 = vmatmul.mubr.bf16.gmra.mrb[0].mxu0 %v261
        %v311 = vpop.f32.mrb[0].mxu0
        %v312 = vadd.f32 0.0, %v311
        %v313 = vpop.f32.mrb[0].mxu0
        %v314 = vpop.f32.mrb[0].mxu0
        %v315 = vadd.f32 0.0, %v314
        %v316 = vpop.f32.mrb[0].mxu0
        %317 = vmatprep.mubr.bf16.mxu0 0
        %318 = vmatmul.mubr.bf16.gmra.mrb[0].mxu0 %v264
        %v319 = vpop.f32.mrb[0].mxu0
        %v320 = vadd.f32 0.0, %v319
        %v321 = vpop.f32.mrb[0].mxu0
        %v322 = vpop.f32.mrb[0].mxu0
        %v323 = vadd.f32 0.0, %v322
        %v324 = vpop.f32.mrb[0].mxu0
        %325 = vmatprep.mubr.bf16.mxu0 0
        %326 = vmatmul.mubr.bf16.gmra.mrb[0].mxu0 %v267
        %v327 = vpop.f32.mrb[0].mxu0
        %v328 = vadd.f32 0.0, %v327
        %v329 = vpop.f32.mrb[0].mxu0
        %v330 = vpop.f32.mrb[0].mxu0
        %v331 = vadd.f32 0.0, %v330
        %v332 = vpop.f32.mrb[0].mxu0
        %333 = vdwg.mxu0
        %vm334 = vcmask 31744
        %335 = vst.msk [vmem:[%s228] sm:$0xff] %vm334, %v304
        %336 = vst.msk [vmem:[%s228 + $0x8] sm:$0xff] %vm334, %v307
        %337 = vst.msk [vmem:[%s228 + $0x10] sm:$0xff] %vm334, %v312
        %338 = vst.msk [vmem:[%s228 + $0x18] sm:$0xff] %vm334, %v315
        %339 = vst.msk [vmem:[%s228 + $0x20] sm:$0xff] %vm334, %v320
        %340 = vst.msk [vmem:[%s228 + $0x28] sm:$0xff] %vm334, %v323
        %341 = vst.msk [vmem:[%s228 + $0x30] sm:$0xff] %vm334, %v328
        %342 = vst.msk [vmem:[%s228 + $0x38] sm:$0xff] %vm334, %v331
        %v343 = vsel %vm334, %v304, 0.0
        %v344 = vsel %vm334, %v307, 0.0
        %v345 = vadd.f32 %v343, %v344
        %v346 = vsel %vm334, %v312, 0.0
        %v347 = vadd.f32 %v345, %v346
        %v348 = vsel %vm334, %v315, 0.0
        %v349 = vadd.f32 %v347, %v348
        %v350 = vsel %vm334, %v320, 0.0
        %v351 = vadd.f32 %v349, %v350
        %v352 = vsel %vm334, %v323, 0.0
        %v353 = vadd.f32 %v351, %v352
        %v354 = vsel %vm334, %v328, 0.0
        %v355 = vadd.f32 %v353, %v354
        %v356 = vsel %vm334, %v331, 0.0
        %v357 = vadd.f32 %v355, %v356
        %v358 = vrot.slane %v357, 4
        %v359 = vadd.f32 %v357, %v358
        %v360 = vrot.slane %v359, 2
        %v361 = vadd.f32 %v359, %v360
        %v362 = vrot.slane %v361, 1
        %v363 = vadd.f32 %v361, %v362
        %vm364 = vcmask 24576
        %365 = vst.msk [vmem:[%s231] sm:$0x1] %vm364, %v363
        %v366 = vmul.f32 %v304, %v304
        %v367 = vmul.f32 %v307, %v307
        %v368 = vmul.f32 %v312, %v312
        %v369 = vmul.f32 %v315, %v315
        %v370 = vmul.f32 %v320, %v320
        %v371 = vmul.f32 %v323, %v323
        %v372 = vmul.f32 %v328, %v328
        %v373 = vmul.f32 %v331, %v331
        %v374 = vsel %vm334, %v366, 0.0
        %v375 = vsel %vm334, %v367, 0.0
        %v376 = vadd.f32 %v374, %v375
        %v377 = vsel %vm334, %v368, 0.0
        %v378 = vadd.f32 %v376, %v377
        %v379 = vsel %vm334, %v369, 0.0
        %v380 = vadd.f32 %v378, %v379
        %v381 = vsel %vm334, %v370, 0.0
        %v382 = vadd.f32 %v380, %v381
        %v383 = vsel %vm334, %v371, 0.0
        %v384 = vadd.f32 %v382, %v383
        %v385 = vsel %vm334, %v372, 0.0
        %v386 = vadd.f32 %v384, %v385
        %v387 = vsel %vm334, %v373, 0.0
        %v388 = vadd.f32 %v386, %v387
        %v389 = vrot.slane %v388, 4
        %v390 = vadd.f32 %v388, %v389
        %v391 = vrot.slane %v390, 2
        %v392 = vadd.f32 %v390, %v391
        %v393 = vrot.slane %v392, 1
        %v394 = vadd.f32 %v392, %v393
        %395 = vst.msk [vmem:[%s234] sm:$0x1] %vm364, %v394
        %p396 = scmp.lt.s32.totalorder %s19, 1
        %s397 = scalar_select %p396, %s19, 1
        %s398 = smul.addr %s397, 8
        %s399 = smul.addr %s398, 8
        %s400 = scalar_lea.vmem %s2, %s399
        %p401 = scmp.lt.s32.totalorder %s19, 1
        %s402 = scalar_select %p401, %s19, 1
        %s403 = scalar_lea.vmem %s3, %s402
        %p404 = scmp.lt.s32.totalorder %s19, 1
        %s405 = scalar_select %p404, %s19, 1
        %s406 = scalar_lea.vmem %s4, %s405
        // Predicated region
        $region33: #{bottleneck.4} parent=27 // pred_check
          %p407 = pneg %p84
        $region34: #{bottleneck.4} parent=27 // pred_check_branch
          %409 = sbr.rel (%p407) target = $region36
        $region35: #{bottleneck.4} parent=27 // pred_region
          _
        $region36: #{bottleneck.4} parent=27 // pred_fallthru
          _
        // Predicated region
        $region37: #{bottleneck.4} parent=27 // pred_check
          %p410 = pneg %p110
        $region38: #{bottleneck.4} parent=27 // pred_check_branch
          %412 = sbr.rel (%p410) target = $region40
        $region39: #{bottleneck.4} parent=27 // pred_region
          _
        $region40: #{bottleneck.4} parent=27 // pred_fallthru
          _
        // Predicated region
        $region41: #{bottleneck.4} parent=27 // pred_check
          %p413 = pneg %p136
        $region42: #{bottleneck.4} parent=27 // pred_check_branch
          %415 = sbr.rel (%p413) target = $region44
        $region43: #{bottleneck.4} parent=27 // pred_region
          _
        $region44: #{bottleneck.4} parent=27 // pred_fallthru
          _
      $region28: #{bottleneck.4} parent=5 // pred_fallthru
        _
      %p416 = scmp.le.s32.totalorder 2, %s14
      // Predicated region
      $region45: #{bottleneck.4} parent=5 // pred_check
        %p417 = pneg %p416
      $region46: #{bottleneck.4} parent=5 // pred_check_branch
        %419 = sbr.rel (%p417) target = $region48
      $region47: #{bottleneck.4} parent=5 // pred_region
        %s420 = ssub.s32 %s14, 2
        // Predicated region
        $region49: #{bottleneck.4} parent=47 // pred_check
          %p421 = pneg %p90
        $region50: #{bottleneck.4} parent=47 // pred_check_branch
          %423 = sbr.rel (%p421) target = $region52
        $region51: #{bottleneck.4} parent=47 // pred_region
          %p424 = scmp.lt.s32.totalorder %s20, 1
          %s425 = scalar_select %p424, %s20, 1
          %s426 = smul.addr %s425, 8
          %s427 = smul.addr %s426, 8
          %s428 = scalar_lea.vmem %s2, %s427
        $region52: #{bottleneck.4} parent=47 // pred_fallthru
          _
        // Predicated region
        $region53: #{bottleneck.4} parent=47 // pred_check
          %p429 = pneg %p116
        $region54: #{bottleneck.4} parent=47 // pred_check_branch
          %431 = sbr.rel (%p429) target = $region56
        $region55: #{bottleneck.4} parent=47 // pred_region
          %p432 = scmp.lt.s32.totalorder %s20, 1
          %s433 = scalar_select %p432, %s20, 1
          %s434 = scalar_lea.vmem %s3, %s433
        $region56: #{bottleneck.4} parent=47 // pred_fallthru
          _
        // Predicated region
        $region57: #{bottleneck.4} parent=47 // pred_check
          %p435 = pneg %p142
        $region58: #{bottleneck.4} parent=47 // pred_check_branch
          %437 = sbr.rel (%p435) target = $region60
        $region59: #{bottleneck.4} parent=47 // pred_region
          %p438 = scmp.lt.s32.totalorder %s20, 1
          %s439 = scalar_select %p438, %s20, 1
          %s440 = scalar_lea.vmem %s4, %s439
        $region60: #{bottleneck.4} parent=47 // pred_fallthru
          _
      $region48: #{bottleneck.4} parent=5 // pred_fallthru
        _
    $region6: #{bottleneck.4} parent=1 // loop_footer
      %s18 = sadd.s32 1, %s14
    $region7: #{bottleneck.4} parent=1 // loop_footer_branch
      %13 = sbr.rel target = $region3
    $region8: #{bottleneck.4} parent=1 // loop_exit
      _
    %441 = vsyncpa [#allocation3], 1
    %s442 = scalar_lea.sflag [#allocation3], 1
    %443 = vsyncpa %s442, 1

// kernel: bottleneck.7
$region0: #{bottleneck.7}
  #allocation0 [shape = 'u32[]', space=smem, size = 0x4, offset = 0x4, fixed_abs, tag = 'smem constant byte address 0x4 - core index']
  #allocation1 [shape = 'u32[144,128]{1,0:T(1,128)}', space=vmem, size = 0x12000, scoped, tag = 'internal scratch']
  %s0 = inlined_call_operand.vmem [shape: f32[2,1,16], index: 0, kind: input, shape index: {}]
  %s1 = inlined_call_operand.vmem [shape: f32[2,1,16], index: 1, kind: input, shape index: {}]
  %s2 = inlined_call_operand.vmem [shape: f32[2,64,16], index: 2, kind: input, shape index: {}]
  %s3 = inlined_call_operand.vmem [shape: f32[2,64,16], index: 3, kind: input, shape index: {}]
  %s4 = inlined_call_operand.vmem [shape: f32[1,16], index: 4, kind: input, shape index: {}]
  %s5 = inlined_call_operand.vmem [shape: f32[1,16], index: 5, kind: input, shape index: {}]
  %s6 = inlined_call_operand.hbm [shape: f32[2,64,16], index: 6, kind: output, shape index: {}]
  %s7 = sld [smem:[#allocation0]]
  $region57: #{bottleneck.7} parent=0
    _
  %s9 = ssub.s32 1, %s7
  %s10 = scalar_select 0, %s9, %s7
  $region1: #{bottleneck.7} parent=0
    #allocation2 [shape = 'u8[65536]{0}', space=vmem, size = 0x10000, scoped, tag = 'output window, operand 0']
    #allocation3 [shape = 's32[2]{0}', space=sflag, size = 0x8, scoped, tag = 'scoped memory for bottleneck.7']
    %11 = vsyncpa [#allocation3], 0
    %s12 = scalar_lea.sflag [#allocation3], 1
    %13 = vsyncpa %s12, 0
    loop: start=0, step=1, limit=4
    $region2: #{bottleneck.7} parent=1 // loop_pre_header
      _
    $region3: #{bottleneck.7} parent=1 // loop_header
      %s15 = sphi 0, %s19
      %p16 = scmp.ge.s32.totalorder %s15, 4
      %s23 = sphi 0, %s23
      %s25 = sphi 0, %s23
      %s26 = sphi 0, %s25
      %s40 = sphi 0, %s26
      %s44 = sphi 0, %s44
      %s46 = sphi 0, %s44
      %s47 = sphi 0, %s46
      %s61 = sphi 0, %s47
      %s67 = sphi 0, %s69
      %s70 = sphi 0, %s67
      %s71 = sphi 0, %s70
      %s87 = sphi 0, %s71
      %s93 = sphi 0, %s95
      %s96 = sphi 0, %s93
      %s97 = sphi 0, %s96
      %s113 = sphi 0, %s97
      %s117 = sphi 0, %s117
      %s119 = sphi 0, %s117
      %s120 = sphi 0, %s119
      %s134 = sphi 0, %s120
      %s138 = sphi 0, %s138
      %s140 = sphi 0, %s138
      %s141 = sphi 0, %s140
      %s155 = sphi 0, %s141
      %s161 = sphi 0, %s163
      %s164 = sphi 0, %s161
      %s165 = sphi 0, %s164
      %s181 = sphi 0, %s165
    $region4: #{bottleneck.7} parent=1 // loop_header_branch
      %18 = sbr.rel (%p16) target = $region8
    $region5: #{bottleneck.7} parent=1 // loop_body
      %s20 = ssub.s32 %s15, 1
      %s21 = ssub.s32 %s15, 2
      %s22 = sadd.s32 %s15, 1
      %s24 = sadd.s32 %s23, 1
      %p27 = scmp.eq.s32.totalorder %s15, 1
      %p28 = scmp.ne.s32.totalorder %s23, %s25
      %p29 = scmp.eq.s32.totalorder %s15, 0
      %p30 = por %p28, %p29
      %p31 = scmp.ne.s32.totalorder %s23, %s25
      %p32 = scmp.eq.s32.totalorder %s20, 1
      %p33 = por %p31, %p32
      %p34 = scmp.ne.s32.totalorder %s25, %s26
      %p35 = scmp.eq.s32.totalorder %s20, 0
      %p36 = por %p34, %p35
      %p37 = scmp.ne.s32.totalorder %s25, %s26
      %p38 = scmp.eq.s32.totalorder %s21, 1
      %p39 = por %p37, %p38
      %p41 = scmp.ne.s32.totalorder %s26, %s40
      %p42 = scmp.eq.s32.totalorder %s21, 0
      %p43 = por %p41, %p42
      %s45 = sadd.s32 %s44, 1
      %p48 = scmp.eq.s32.totalorder %s15, 1
      %p49 = scmp.ne.s32.totalorder %s44, %s46
      %p50 = scmp.eq.s32.totalorder %s15, 0
      %p51 = por %p49, %p50
      %p52 = scmp.ne.s32.totalorder %s44, %s46
      %p53 = scmp.eq.s32.totalorder %s20, 1
      %p54 = por %p52, %p53
      %p55 = scmp.ne.s32.totalorder %s46, %s47
      %p56 = scmp.eq.s32.totalorder %s20, 0
      %p57 = por %p55, %p56
      %p58 = scmp.ne.s32.totalorder %s46, %s47
      %p59 = scmp.eq.s32.totalorder %s21, 1
      %p60 = por %p58, %p59
      %p62 = scmp.ne.s32.totalorder %s47, %s61
      %p63 = scmp.eq.s32.totalorder %s21, 0
      %p64 = por %p62, %p63
      %s65 = ssub.s32 %s15, %s22
      %p66 = scmp.eq.s32.totalorder %s65, 0
      %s68 = sadd.s32 %s67, 1
      %s69 = scalar_select %p66, %s67, %s68
      %p72 = pneg %p66
      %p73 = scmp.eq.s32.totalorder %s15, 1
      %p74 = por %p72, %p73
      %p75 = scmp.ne.s32.totalorder %s67, %s70
      %p76 = scmp.eq.s32.totalorder %s15, 0
      %p77 = por %p75, %p76
      %p78 = scmp.ne.s32.totalorder %s67, %s70
      %p79 = scmp.eq.s32.totalorder %s20, 1
      %p80 = por %p78, %p79
      %p81 = scmp.ne.s32.totalorder %s70, %s71
      %p82 = scmp.eq.s32.totalorder %s20, 0
      %p83 = por %p81, %p82
      %p84 = scmp.ne.s32.totalorder %s70, %s71
      %p85 = scmp.eq.s32.totalorder %s21, 1
      %p86 = por %p84, %p85
      %p88 = scmp.ne.s32.totalorder %s71, %s87
      %p89 = scmp.eq.s32.totalorder %s21, 0
      %p90 = por %p88, %p89
      %s91 = ssub.s32 %s15, %s22
      %p92 = scmp.eq.s32.totalorder %s91, 0
      %s94 = sadd.s32 %s93, 1
      %s95 = scalar_select %p92, %s93, %s94
      %p98 = pneg %p92
      %p99 = scmp.eq.s32.totalorder %s15, 1
      %p100 = por %p98, %p99
      %p101 = scmp.ne.s32.totalorder %s93, %s96
      %p102 = scmp.eq.s32.totalorder %s15, 0
      %p103 = por %p101, %p102
      %p104 = scmp.ne.s32.totalorder %s93, %s96
      %p105 = scmp.eq.s32.totalorder %s20, 1
      %p106 = por %p104, %p105
      %p107 = scmp.ne.s32.totalorder %s96, %s97
      %p108 = scmp.eq.s32.totalorder %s20, 0
      %p109 = por %p107, %p108
      %p110 = scmp.ne.s32.totalorder %s96, %s97
      %p111 = scmp.eq.s32.totalorder %s21, 1
      %p112 = por %p110, %p111
      %p114 = scmp.ne.s32.totalorder %s97, %s113
      %p115 = scmp.eq.s32.totalorder %s21, 0
      %p116 = por %p114, %p115
      %s118 = sadd.s32 %s117, 1
      %p121 = scmp.eq.s32.totalorder %s15, 1
      %p122 = scmp.ne.s32.totalorder %s117, %s119
      %p123 = scmp.eq.s32.totalorder %s15, 0
      %p124 = por %p122, %p123
      %p125 = scmp.ne.s32.totalorder %s117, %s119
      %p126 = scmp.eq.s32.totalorder %s20, 1
      %p127 = por %p125, %p126
      %p128 = scmp.ne.s32.totalorder %s119, %s120
      %p129 = scmp.eq.s32.totalorder %s20, 0
      %p130 = por %p128, %p129
      %p131 = scmp.ne.s32.totalorder %s119, %s120
      %p132 = scmp.eq.s32.totalorder %s21, 1
      %p133 = por %p131, %p132
      %p135 = scmp.ne.s32.totalorder %s120, %s134
      %p136 = scmp.eq.s32.totalorder %s21, 0
      %p137 = por %p135, %p136
      %s139 = sadd.s32 %s138, 1
      %p142 = scmp.eq.s32.totalorder %s15, 1
      %p143 = scmp.ne.s32.totalorder %s138, %s140
      %p144 = scmp.eq.s32.totalorder %s15, 0
      %p145 = por %p143, %p144
      %p146 = scmp.ne.s32.totalorder %s138, %s140
      %p147 = scmp.eq.s32.totalorder %s20, 1
      %p148 = por %p146, %p147
      %p149 = scmp.ne.s32.totalorder %s140, %s141
      %p150 = scmp.eq.s32.totalorder %s20, 0
      %p151 = por %p149, %p150
      %p152 = scmp.ne.s32.totalorder %s140, %s141
      %p153 = scmp.eq.s32.totalorder %s21, 1
      %p154 = por %p152, %p153
      %p156 = scmp.ne.s32.totalorder %s141, %s155
      %p157 = scmp.eq.s32.totalorder %s21, 0
      %p158 = por %p156, %p157
      %s159 = ssub.s32 %s15, %s22
      %p160 = scmp.eq.s32.totalorder %s159, 0
      %s162 = sadd.s32 %s161, 1
      %s163 = scalar_select %p160, %s161, %s162
      %p166 = pneg %p160
      %p167 = scmp.eq.s32.totalorder %s15, 1
      %p168 = por %p166, %p167
      %p169 = scmp.ne.s32.totalorder %s161, %s164
      %p170 = scmp.eq.s32.totalorder %s15, 0
      %p171 = por %p169, %p170
      %p172 = scmp.ne.s32.totalorder %s161, %s164
      %p173 = scmp.eq.s32.totalorder %s20, 1
      %p174 = por %p172, %p173
      %p175 = scmp.ne.s32.totalorder %s164, %s165
      %p176 = scmp.eq.s32.totalorder %s20, 0
      %p177 = por %p175, %p176
      %p178 = scmp.ne.s32.totalorder %s164, %s165
      %p179 = scmp.eq.s32.totalorder %s21, 1
      %p180 = por %p178, %p179
      %p182 = scmp.ne.s32.totalorder %s165, %s181
      %p183 = scmp.eq.s32.totalorder %s21, 0
      %p184 = por %p182, %p183
      %p185 = scmp.le.s32.totalorder 1, %s15
      %p186 = scmp.lt.s32.totalorder %s15, 3
      %p187 = pnand %p185, %p186
      %p188 = pneg %p187
      // Predicated region
      $region9: #{bottleneck.7} parent=5 // pred_check
        _
      $region10: #{bottleneck.7} parent=5 // pred_check_branch
        %190 = sbr.rel (%p187) target = $region12
      $region11: #{bottleneck.7} parent=5 // pred_region
        %s191 = ssub.s32 %s15, 1
        // Predicated region
        $region13: #{bottleneck.7} parent=11 // pred_check
          %p192 = pneg %p36
        $region14: #{bottleneck.7} parent=11 // pred_check_branch
          %194 = sbr.rel (%p192) target = $region16
        $region15: #{bottleneck.7} parent=11 // pred_region
          _
        $region16: #{bottleneck.7} parent=11 // pred_fallthru
          _
        // Predicated region
        $region17: #{bottleneck.7} parent=11 // pred_check
          %p195 = pneg %p57
        $region18: #{bottleneck.7} parent=11 // pred_check_branch
          %197 = sbr.rel (%p195) target = $region20
        $region19: #{bottleneck.7} parent=11 // pred_region
          _
        $region20: #{bottleneck.7} parent=11 // pred_fallthru
          _
        // Predicated region
        $region21: #{bottleneck.7} parent=11 // pred_check
          %p198 = pneg %p130
        $region22: #{bottleneck.7} parent=11 // pred_check_branch
          %200 = sbr.rel (%p198) target = $region24
        $region23: #{bottleneck.7} parent=11 // pred_region
          _
        $region24: #{bottleneck.7} parent=11 // pred_fallthru
          _
        // Predicated region
        $region25: #{bottleneck.7} parent=11 // pred_check
          %p201 = pneg %p151
        $region26: #{bottleneck.7} parent=11 // pred_check_branch
          %203 = sbr.rel (%p201) target = $region28
        $region27: #{bottleneck.7} parent=11 // pred_region
          _
        $region28: #{bottleneck.7} parent=11 // pred_fallthru
          _
      $region12: #{bottleneck.7} parent=5 // pred_fallthru
        _
      %p204 = scmp.lt.s32.totalorder %s15, 2
      // Predicated region
      $region29: #{bottleneck.7} parent=5 // pred_check
        %p205 = pneg %p204
      $region30: #{bottleneck.7} parent=5 // pred_check_branch
        %207 = sbr.rel (%p205) target = $region32
      $region31: #{bottleneck.7} parent=5 // pred_region
        // Predicated region
        $region33: #{bottleneck.7} parent=31 // pred_check
          %p208 = pneg %p77
        $region34: #{bottleneck.7} parent=31 // pred_check_branch
          %210 = sbr.rel (%p208) target = $region36
        $region35: #{bottleneck.7} parent=31 // pred_region
          %p211 = scmp.lt.s32.totalorder %s15, 1
          %s212 = scalar_select %p211, %s15, 1
          %s213 = smul.addr %s212, 8
          %s214 = smul.addr %s213, 8
          %s215 = scalar_lea.vmem %s2, %s214
        $region36: #{bottleneck.7} parent=31 // pred_fallthru
          _
        // Predicated region
        $region37: #{bottleneck.7} parent=31 // pred_check
          %p216 = pneg %p103
        $region38: #{bottleneck.7} parent=31 // pred_check_branch
          %218 = sbr.rel (%p216) target = $region40
        $region39: #{bottleneck.7} parent=31 // pred_region
          %p219 = scmp.lt.s32.totalorder %s15, 1
          %s220 = scalar_select %p219, %s15, 1
          %s221 = smul.addr %s220, 8
          %s222 = smul.addr %s221, 8
          %s223 = scalar_lea.vmem %s3, %s222
        $region40: #{bottleneck.7} parent=31 // pred_fallthru
          _
      $region32: #{bottleneck.7} parent=5 // pred_fallthru
        _
      %p224 = scmp.le.s32.totalorder 1, %s15
      %p225 = scmp.lt.s32.totalorder %s15, 3
      %p226 = pnand %p224, %p225
      %p227 = pneg %p226
      // Predicated region
      $region41: #{bottleneck.7} parent=5 // pred_check
        _
      $region42: #{bottleneck.7} parent=5 // pred_check_branch
        %229 = sbr.rel (%p226) target = $region44
      $region43: #{bottleneck.7} parent=5 // pred_region
        %s230 = ssub.s32 %s15, 1
        %p231 = pneg %p36
        %p232 = pneg %p33
        %p233 = pneg %p57
        %p234 = pneg %p54
        %p235 = scmp.lt.s32.totalorder %s20, 1
        %s236 = scalar_select %p235, %s20, 1
        %s237 = smul.addr %s236, 8
        %s238 = smul.addr %s237, 8
        %s239 = scalar_lea.vmem %s2, %s238
        %p240 = pneg %p83
        %p241 = pneg %p80
        %p242 = scmp.lt.s32.totalorder %s20, 1
        %s243 = scalar_select %p242, %s20, 1
        %s244 = smul.addr %s243, 8
        %s245 = smul.addr %s244, 8
        %s246 = scalar_lea.vmem %s3, %s245
        %p247 = pneg %p109
        %p248 = pneg %p106
        %p249 = pneg %p130
        %p250 = pneg %p127
        %p251 = pneg %p151
        %p252 = pneg %p148
        %p253 = pneg %p177
        %p254 = pneg %p174
        %s255 = sand.u32 %s164, 1
        %s256 = scalar_lea.sflag [#allocation3], %s255
        %s257 = sand.u32 %s164, 1
        %s258 = smul.addr %s257, 64
        %s259 = scalar_lea.vmem [#allocation2], %s258
        %p260 = scmp.lt.s32.totalorder %s20, 1
        %s261 = scalar_select %p260, %s20, 1
        %s262 = smul.addr %s261, 8
        %s263 = smul.addr %s262, 8
        %s264 = scalar_lea.vmem %s2, %s263
        %p265 = scmp.lt.s32.totalorder %s20, 1
        %s266 = scalar_select %p265, %s20, 1
        %s267 = smul.addr %s266, 8
        %s268 = smul.addr %s267, 8
        %s269 = scalar_lea.vmem %s3, %s268
        %v270 = vld [vmem:[%s0] sm:$0x1]
        %v271 = vld [vmem:[%s0 + $0x1] sm:$0x1]
        %vm272 = vcmask 122880
        %v273 = vsel %vm272, %v270, 0.0
        %v274 = vsel %vm272, %v271, 0.0
        %v275 = vadd.f32 %v273, %v274
        %v276 = vld [vmem:[%s1] sm:$0x1]
        %v277 = vld [vmem:[%s1 + $0x1] sm:$0x1]
        %v278 = vsel %vm272, %v276, 0.0
        %v279 = vsel %vm272, %v277, 0.0
        %v280 = vadd.f32 %v278, %v279
        %v281 = vrcp.pop 128.0
        %v282 = vmul.f32 %v275, %v281
        %v283 = vmul.f32 %v280, %v281
        %v284 = vmul.f32 %v282, %v282
        %v285 = vsub.f32 %v283, %v284
        %v286 = vmax.f32 %v285, 0.0
        %v287 = vld [vmem:[%s4] sm:$0x1]
        %v288 = vadd.f32 %v286, 1e-05
        %v289 = vrsqrt.pop %v288
        %v290 = vmul.f32 %v287, %v289
        %v291 = vld [vmem:[%s5] sm:$0x1]
        %v292 = vmul.f32 %v282, %v290
        %v293 = vsub.f32 %v291, %v292
        %v294 = vld [vmem:[%s264] sm:$0xff]
        %v295 = vld [vmem:[%s264 + $0x8] sm:$0xff]
        %v296 = vld [vmem:[%s264 + $0x10] sm:$0xff]
        %v297 = vld [vmem:[%s264 + $0x18] sm:$0xff]
        %v298 = vld [vmem:[%s264 + $0x20] sm:$0xff]
        %v299 = vld [vmem:[%s264 + $0x28] sm:$0xff]
        %v300 = vld [vmem:[%s264 + $0x30] sm:$0xff]
        %v301 = vld [vmem:[%s264 + $0x38] sm:$0xff]
        %v303 = vlaneseq
        %v304 = vshrl.u32 %v303, 7
        %v305 = vsub.s32 0, %v304
        %v306 = vrot.slane %v290, %v305
        %v308 = vmul.f32 %v294, %v306
        %v309 = vmul.f32 %v295, %v306
        %v310 = vmul.f32 %v296, %v306
        %v311 = vmul.f32 %v297, %v306
        %v312 = vmul.f32 %v298, %v306
        %v313 = vmul.f32 %v299, %v306
        %v314 = vmul.f32 %v300, %v306
        %v315 = vmul.f32 %v301, %v306
        %v317 = vlaneseq
        %v318 = vshrl.u32 %v317, 7
        %v319 = vsub.s32 0, %v318
        %v320 = vrot.slane %v293, %v319
        %v322 = vadd.f32 %v308, %v320
        %v323 = vadd.f32 %v309, %v320
        %v324 = vadd.f32 %v310, %v320
        %v325 = vadd.f32 %v311, %v320
        %v326 = vadd.f32 %v312, %v320
        %v327 = vadd.f32 %v313, %v320
        %v328 = vadd.f32 %v314, %v320
        %v329 = vadd.f32 %v315, %v320
        %v330 = vld [vmem:[%s269] sm:$0xff]
        %v331 = vld [vmem:[%s269 + $0x8] sm:$0xff]
        %v332 = vld [vmem:[%s269 + $0x10] sm:$0xff]
        %v333 = vld [vmem:[%s269 + $0x18] sm:$0xff]
        %v334 = vld [vmem:[%s269 + $0x20] sm:$0xff]
        %v335 = vld [vmem:[%s269 + $0x28] sm:$0xff]
        %v336 = vld [vmem:[%s269 + $0x30] sm:$0xff]
        %v337 = vld [vmem:[%s269 + $0x38] sm:$0xff]
        %v338 = vadd.f32 %v322, %v330
        %v339 = vadd.f32 %v323, %v331
        %v340 = vadd.f32 %v324, %v332
        %v341 = vadd.f32 %v325, %v333
        %v342 = vadd.f32 %v326, %v334
        %v343 = vadd.f32 %v327, %v335
        %v344 = vadd.f32 %v328, %v336
        %v345 = vadd.f32 %v329, %v337
        %v346 = vmax.f32 %v338, 0.0
        %v347 = vmax.f32 %v339, 0.0
        %v348 = vmax.f32 %v340, 0.0
        %v349 = vmax.f32 %v341, 0.0
        %v350 = vmax.f32 %v342, 0.0
        %v351 = vmax.f32 %v343, 0.0
        %v352 = vmax.f32 %v344, 0.0
        %v353 = vmax.f32 %v345, 0.0
        %vm354 = vcmask 130048
        %355 = vst.msk [vmem:[%s259] sm:$0xff] %vm354, %v346
        %356 = vst.msk [vmem:[%s259 + $0x8] sm:$0xff] %vm354, %v347
        %357 = vst.msk [vmem:[%s259 + $0x10] sm:$0xff] %vm354, %v348
        %358 = vst.msk [vmem:[%s259 + $0x18] sm:$0xff] %vm354, %v349
        %359 = vst.msk [vmem:[%s259 + $0x20] sm:$0xff] %vm354, %v350
        %360 = vst.msk [vmem:[%s259 + $0x28] sm:$0xff] %vm354, %v351
        %361 = vst.msk [vmem:[%s259 + $0x30] sm:$0xff] %vm354, %v352
        %362 = vst.msk [vmem:[%s259 + $0x38] sm:$0xff] %vm354, %v353
        %s363 = sand.u32 %s164, 1
        %s364 = scalar_lea.sflag [#allocation3], %s363
        %s365 = sand.u32 %s164, 1
        %s366 = smul.addr %s365, 64
        %s367 = scalar_lea.vmem [#allocation2], %s366
        // Predicated region
        $region45: #{bottleneck.7} parent=43 // pred_check
          %p368 = pneg %p174
        $region46: #{bottleneck.7} parent=43 // pred_check_branch
          %370 = sbr.rel (%p368) target = $region48
        $region47: #{bottleneck.7} parent=43 // pred_region
          %s372 = ssub.s32 1024, 1024
          %373 = vsyncadd %s364, %s372
          %s374 = smul.addr %s20, 8
          %s375 = smul.addr %s374, 128
          %s376 = scalar_lea.hbm %s6, %s375
          %s377 = sshll.u32 %s367, 4
          %s378 = int_to_ptr.vmem [resolvable:$true] %s377
          %383 = dma.vmem_to_hbm [thread:$0]  %s378, 1024, %s376, %s364, 128, 128, 8
        $region48: #{bottleneck.7} parent=43 // pred_fallthru
          _
      $region44: #{bottleneck.7} parent=5 // pred_fallthru
        _
      %p384 = scmp.le.s32.totalorder 2, %s15
      // Predicated region
      $region49: #{bottleneck.7} parent=5 // pred_check
        %p385 = pneg %p384
      $region50: #{bottleneck.7} parent=5 // pred_check_branch
        %387 = sbr.rel (%p385) target = $region52
      $region51: #{bottleneck.7} parent=5 // pred_region
        %s388 = ssub.s32 %s15, 2
        // Predicated region
        $region53: #{bottleneck.7} parent=51 // pred_check
          %p389 = pneg %p180
        $region54: #{bottleneck.7} parent=51 // pred_check_branch
          %391 = sbr.rel (%p389) target = $region56
        $region55: #{bottleneck.7} parent=51 // pred_region
          %s392 = sand.u32 %s165, 1
          %s393 = scalar_lea.sflag [#allocation3], %s392
          %s394 = sand.u32 %s165, 1
          %s395 = smul.addr %s394, 64
          %s396 = scalar_lea.vmem [#allocation2], %s395
          %397 = dma.done %s393, 1024
        $region56: #{bottleneck.7} parent=51 // pred_fallthru
          _
      $region52: #{bottleneck.7} parent=5 // pred_fallthru
        _
    $region6: #{bottleneck.7} parent=1 // loop_footer
      %s19 = sadd.s32 1, %s15
    $region7: #{bottleneck.7} parent=1 // loop_footer_branch
      %14 = sbr.rel target = $region3
    $region8: #{bottleneck.7} parent=1 // loop_exit
      _
    %398 = vsyncpa [#allocation3], 1
    %s399 = scalar_lea.sflag [#allocation3], 1
    %400 = vsyncpa %s399, 1

// kernel: bottleneck.5
$region0: #{bottleneck.5}
  #allocation0 [shape = 'u32[]', space=smem, size = 0x4, offset = 0x4, fixed_abs, tag = 'smem constant byte address 0x4 - core index']
  #allocation1 [shape = 'u32[144,128]{1,0:T(1,128)}', space=vmem, size = 0x12000, scoped, tag = 'internal scratch']
  #allocation2 [shape = 'f32[10,10,4]{2,1,0:T(8,128)}', space=vmem, size = 0x14000, scoped, tag = 'scratch operand']
  %s0 = inlined_call_operand.vmem [shape: f32[2,1,4], index: 0, kind: input, shape index: {}]
  %s1 = inlined_call_operand.vmem [shape: f32[2,1,4], index: 1, kind: input, shape index: {}]
  %s2 = inlined_call_operand.vmem [shape: f32[2,64,4], index: 2, kind: input, shape index: {}]
  %s3 = inlined_call_operand.vmem [shape: bf16[36,4], index: 3, kind: input, shape index: {}]
  %s4 = inlined_call_operand.vmem [shape: f32[1,4], index: 4, kind: input, shape index: {}]
  %s5 = inlined_call_operand.vmem [shape: f32[1,4], index: 5, kind: input, shape index: {}]
  %s6 = inlined_call_operand.vmem [shape: f32[2,64,4], index: 6, kind: output, shape index: {0}]
  %s7 = inlined_call_operand.vmem [shape: f32[2,1,4], index: 7, kind: output, shape index: {1}]
  %s8 = inlined_call_operand.vmem [shape: f32[2,1,4], index: 8, kind: output, shape index: {2}]
  %9 = xla_tuple %s6, %s7, %s8
  %s10 = sld [smem:[#allocation0]]
  $region73: #{bottleneck.5} parent=0
    _
  %s12 = ssub.s32 1, %s10
  %s13 = scalar_select 0, %s12, %s10
  loop: start=0, step=1, limit=4
  $region2: #{bottleneck.5} parent=0 // loop_pre_header
    _
  $region3: #{bottleneck.5} parent=0 // loop_header
    %s15 = sphi 0, %s19
    %p16 = scmp.ge.s32.totalorder %s15, 4
    %s23 = sphi 0, %s23
    %s25 = sphi 0, %s23
    %s26 = sphi 0, %s25
    %s40 = sphi 0, %s26
    %s44 = sphi 0, %s44
    %s46 = sphi 0, %s44
    %s47 = sphi 0, %s46
    %s61 = sphi 0, %s47
    %s67 = sphi 0, %s69
    %s70 = sphi 0, %s67
    %s71 = sphi 0, %s70
    %s87 = sphi 0, %s71
    %s91 = sphi 0, %s91
    %s93 = sphi 0, %s91
    %s94 = sphi 0, %s93
    %s108 = sphi 0, %s94
    %s112 = sphi 0, %s112
    %s114 = sphi 0, %s112
    %s115 = sphi 0, %s114
    %s129 = sphi 0, %s115
    %s133 = sphi 0, %s133
    %s135 = sphi 0, %s133
    %s136 = sphi 0, %s135
    %s150 = sphi 0, %s136
    %s156 = sphi 0, %s158
    %s159 = sphi 0, %s156
    %s160 = sphi 0, %s159
    %s176 = sphi 0, %s160
    %s182 = sphi 0, %s184
    %s185 = sphi 0, %s182
    %s186 = sphi 0, %s185
    %s202 = sphi 0, %s186
    %s208 = sphi 0, %s210
    %s211 = sphi 0, %s208
    %s212 = sphi 0, %s211
    %s228 = sphi 0, %s212
  $region4: #{bottleneck.5} parent=0 // loop_header_branch
    %18 = sbr.rel (%p16) target = $region8
  $region5: #{bottleneck.5} parent=0 // loop_body
    %s20 = ssub.s32 %s15, 1
    %s21 = ssub.s32 %s15, 2
    %s22 = sadd.s32 %s15, 1
    %s24 = sadd.s32 %s23, 1
    %p27 = scmp.eq.s32.totalorder %s15, 1
    %p28 = scmp.ne.s32.totalorder %s23, %s25
    %p29 = scmp.eq.s32.totalorder %s15, 0
    %p30 = por %p28, %p29
    %p31 = scmp.ne.s32.totalorder %s23, %s25
    %p32 = scmp.eq.s32.totalorder %s20, 1
    %p33 = por %p31, %p32
    %p34 = scmp.ne.s32.totalorder %s25, %s26
    %p35 = scmp.eq.s32.totalorder %s20, 0
    %p36 = por %p34, %p35
    %p37 = scmp.ne.s32.totalorder %s25, %s26
    %p38 = scmp.eq.s32.totalorder %s21, 1
    %p39 = por %p37, %p38
    %p41 = scmp.ne.s32.totalorder %s26, %s40
    %p42 = scmp.eq.s32.totalorder %s21, 0
    %p43 = por %p41, %p42
    %s45 = sadd.s32 %s44, 1
    %p48 = scmp.eq.s32.totalorder %s15, 1
    %p49 = scmp.ne.s32.totalorder %s44, %s46
    %p50 = scmp.eq.s32.totalorder %s15, 0
    %p51 = por %p49, %p50
    %p52 = scmp.ne.s32.totalorder %s44, %s46
    %p53 = scmp.eq.s32.totalorder %s20, 1
    %p54 = por %p52, %p53
    %p55 = scmp.ne.s32.totalorder %s46, %s47
    %p56 = scmp.eq.s32.totalorder %s20, 0
    %p57 = por %p55, %p56
    %p58 = scmp.ne.s32.totalorder %s46, %s47
    %p59 = scmp.eq.s32.totalorder %s21, 1
    %p60 = por %p58, %p59
    %p62 = scmp.ne.s32.totalorder %s47, %s61
    %p63 = scmp.eq.s32.totalorder %s21, 0
    %p64 = por %p62, %p63
    %s65 = ssub.s32 %s15, %s22
    %p66 = scmp.eq.s32.totalorder %s65, 0
    %s68 = sadd.s32 %s67, 1
    %s69 = scalar_select %p66, %s67, %s68
    %p72 = pneg %p66
    %p73 = scmp.eq.s32.totalorder %s15, 1
    %p74 = por %p72, %p73
    %p75 = scmp.ne.s32.totalorder %s67, %s70
    %p76 = scmp.eq.s32.totalorder %s15, 0
    %p77 = por %p75, %p76
    %p78 = scmp.ne.s32.totalorder %s67, %s70
    %p79 = scmp.eq.s32.totalorder %s20, 1
    %p80 = por %p78, %p79
    %p81 = scmp.ne.s32.totalorder %s70, %s71
    %p82 = scmp.eq.s32.totalorder %s20, 0
    %p83 = por %p81, %p82
    %p84 = scmp.ne.s32.totalorder %s70, %s71
    %p85 = scmp.eq.s32.totalorder %s21, 1
    %p86 = por %p84, %p85
    %p88 = scmp.ne.s32.totalorder %s71, %s87
    %p89 = scmp.eq.s32.totalorder %s21, 0
    %p90 = por %p88, %p89
    %s92 = sadd.s32 %s91, 1
    %p95 = scmp.eq.s32.totalorder %s15, 1
    %p96 = scmp.ne.s32.totalorder %s91, %s93
    %p97 = scmp.eq.s32.totalorder %s15, 0
    %p98 = por %p96, %p97
    %p99 = scmp.ne.s32.totalorder %s91, %s93
    %p100 = scmp.eq.s32.totalorder %s20, 1
    %p101 = por %p99, %p100
    %p102 = scmp.ne.s32.totalorder %s93, %s94
    %p103 = scmp.eq.s32.totalorder %s20, 0
    %p104 = por %p102, %p103
    %p105 = scmp.ne.s32.totalorder %s93, %s94
    %p106 = scmp.eq.s32.totalorder %s21, 1
    %p107 = por %p105, %p106
    %p109 = scmp.ne.s32.totalorder %s94, %s108
    %p110 = scmp.eq.s32.totalorder %s21, 0
    %p111 = por %p109, %p110
    %s113 = sadd.s32 %s112, 1
    %p116 = scmp.eq.s32.totalorder %s15, 1
    %p117 = scmp.ne.s32.totalorder %s112, %s114
    %p118 = scmp.eq.s32.totalorder %s15, 0
    %p119 = por %p117, %p118
    %p120 = scmp.ne.s32.totalorder %s112, %s114
    %p121 = scmp.eq.s32.totalorder %s20, 1
    %p122 = por %p120, %p121
    %p123 = scmp.ne.s32.totalorder %s114, %s115
    %p124 = scmp.eq.s32.totalorder %s20, 0
    %p125 = por %p123, %p124
    %p126 = scmp.ne.s32.totalorder %s114, %s115
    %p127 = scmp.eq.s32.totalorder %s21, 1
    %p128 = por %p126, %p127
    %p130 = scmp.ne.s32.totalorder %s115, %s129
    %p131 = scmp.eq.s32.totalorder %s21, 0
    %p132 = por %p130, %p131
    %s134 = sadd.s32 %s133, 1
    %p137 = scmp.eq.s32.totalorder %s15, 1
    %p138 = scmp.ne.s32.totalorder %s133, %s135
    %p139 = scmp.eq.s32.totalorder %s15, 0
    %p140 = por %p138, %p139
    %p141 = scmp.ne.s32.totalorder %s133, %s135
    %p142 = scmp.eq.s32.totalorder %s20, 1
    %p143 = por %p141, %p142
    %p144 = scmp.ne.s32.totalorder %s135, %s136
    %p145 = scmp.eq.s32.totalorder %s20, 0
    %p146 = por %p144, %p145
    %p147 = scmp.ne.s32.totalorder %s135, %s136
    %p148 = scmp.eq.s32.totalorder %s21, 1
    %p149 = por %p147, %p148
    %p151 = scmp.ne.s32.totalorder %s136, %s150
    %p152 = scmp.eq.s32.totalorder %s21, 0
    %p153 = por %p151, %p152
    %s154 = ssub.s32 %s15, %s22
    %p155 = scmp.eq.s32.totalorder %s154, 0
    %s157 = sadd.s32 %s156, 1
    %s158 = scalar_select %p155, %s156, %s157
    %p161 = pneg %p155
    %p162 = scmp.eq.s32.totalorder %s15, 1
    %p163 = por %p161, %p162
    %p164 = scmp.ne.s32.totalorder %s156, %s159
    %p165 = scmp.eq.s32.totalorder %s15, 0
    %p166 = por %p164, %p165
    %p167 = scmp.ne.s32.totalorder %s156, %s159
    %p168 = scmp.eq.s32.totalorder %s20, 1
    %p169 = por %p167, %p168
    %p170 = scmp.ne.s32.totalorder %s159, %s160
    %p171 = scmp.eq.s32.totalorder %s20, 0
    %p172 = por %p170, %p171
    %p173 = scmp.ne.s32.totalorder %s159, %s160
    %p174 = scmp.eq.s32.totalorder %s21, 1
    %p175 = por %p173, %p174
    %p177 = scmp.ne.s32.totalorder %s160, %s176
    %p178 = scmp.eq.s32.totalorder %s21, 0
    %p179 = por %p177, %p178
    %s180 = ssub.s32 %s15, %s22
    %p181 = scmp.eq.s32.totalorder %s180, 0
    %s183 = sadd.s32 %s182, 1
    %s184 = scalar_select %p181, %s182, %s183
    %p187 = pneg %p181
    %p188 = scmp.eq.s32.totalorder %s15, 1
    %p189 = por %p187, %p188
    %p190 = scmp.ne.s32.totalorder %s182, %s185
    %p191 = scmp.eq.s32.totalorder %s15, 0
    %p192 = por %p190, %p191
    %p193 = scmp.ne.s32.totalorder %s182, %s185
    %p194 = scmp.eq.s32.totalorder %s20, 1
    %p195 = por %p193, %p194
    %p196 = scmp.ne.s32.totalorder %s185, %s186
    %p197 = scmp.eq.s32.totalorder %s20, 0
    %p198 = por %p196, %p197
    %p199 = scmp.ne.s32.totalorder %s185, %s186
    %p200 = scmp.eq.s32.totalorder %s21, 1
    %p201 = por %p199, %p200
    %p203 = scmp.ne.s32.totalorder %s186, %s202
    %p204 = scmp.eq.s32.totalorder %s21, 0
    %p205 = por %p203, %p204
    %s206 = ssub.s32 %s15, %s22
    %p207 = scmp.eq.s32.totalorder %s206, 0
    %s209 = sadd.s32 %s208, 1
    %s210 = scalar_select %p207, %s208, %s209
    %p213 = pneg %p207
    %p214 = scmp.eq.s32.totalorder %s15, 1
    %p215 = por %p213, %p214
    %p216 = scmp.ne.s32.totalorder %s208, %s211
    %p217 = scmp.eq.s32.totalorder %s15, 0
    %p218 = por %p216, %p217
    %p219 = scmp.ne.s32.totalorder %s208, %s211
    %p220 = scmp.eq.s32.totalorder %s20, 1
    %p221 = por %p219, %p220
    %p222 = scmp.ne.s32.totalorder %s211, %s212
    %p223 = scmp.eq.s32.totalorder %s20, 0
    %p224 = por %p222, %p223
    %p225 = scmp.ne.s32.totalorder %s211, %s212
    %p226 = scmp.eq.s32.totalorder %s21, 1
    %p227 = por %p225, %p226
    %p229 = scmp.ne.s32.totalorder %s212, %s228
    %p230 = scmp.eq.s32.totalorder %s21, 0
    %p231 = por %p229, %p230
    %p232 = scmp.le.s32.totalorder 1, %s15
    %p233 = scmp.lt.s32.totalorder %s15, 3
    %p234 = pnand %p232, %p233
    %p235 = pneg %p234
    // Predicated region
    $region9: #{bottleneck.5} parent=5 // pred_check
      _
    $region10: #{bottleneck.5} parent=5 // pred_check_branch
      %237 = sbr.rel (%p234) target = $region12
    $region11: #{bottleneck.5} parent=5 // pred_region
      %s238 = ssub.s32 %s15, 1
      // Predicated region
      $region13: #{bottleneck.5} parent=11 // pred_check
        %p239 = pneg %p36
      $region14: #{bottleneck.5} parent=11 // pred_check_branch
        %241 = sbr.rel (%p239) target = $region16
      $region15: #{bottleneck.5} parent=11 // pred_region
        _
      $region16: #{bottleneck.5} parent=11 // pred_fallthru
        _
      // Predicated region
      $region17: #{bottleneck.5} parent=11 // pred_check
        %p242 = pneg %p57
      $region18: #{bottleneck.5} parent=11 // pred_check_branch
        %244 = sbr.rel (%p242) target = $region20
      $region19: #{bottleneck.5} parent=11 // pred_region
        _
      $region20: #{bottleneck.5} parent=11 // pred_fallthru
        _
      // Predicated region
      $region21: #{bottleneck.5} parent=11 // pred_check
        %p245 = pneg %p104
      $region22: #{bottleneck.5} parent=11 // pred_check_branch
        %247 = sbr.rel (%p245) target = $region24
      $region23: #{bottleneck.5} parent=11 // pred_region
        _
      $region24: #{bottleneck.5} parent=11 // pred_fallthru
        _
      // Predicated region
      $region25: #{bottleneck.5} parent=11 // pred_check
        %p248 = pneg %p125
      $region26: #{bottleneck.5} parent=11 // pred_check_branch
        %250 = sbr.rel (%p248) target = $region28
      $region27: #{bottleneck.5} parent=11 // pred_region
        _
      $region28: #{bottleneck.5} parent=11 // pred_fallthru
        _
      // Predicated region
      $region29: #{bottleneck.5} parent=11 // pred_check
        %p251 = pneg %p146
      $region30: #{bottleneck.5} parent=11 // pred_check_branch
        %253 = sbr.rel (%p251) target = $region32
      $region31: #{bottleneck.5} parent=11 // pred_region
        _
      $region32: #{bottleneck.5} parent=11 // pred_fallthru
        _
    $region12: #{bottleneck.5} parent=5 // pred_fallthru
      _
    %p254 = scmp.lt.s32.totalorder %s15, 2
    // Predicated region
    $region33: #{bottleneck.5} parent=5 // pred_check
      %p255 = pneg %p254
    $region34: #{bottleneck.5} parent=5 // pred_check_branch
      %257 = sbr.rel (%p255) target = $region36
    $region35: #{bottleneck.5} parent=5 // pred_region
      // Predicated region
      $region37: #{bottleneck.5} parent=35 // pred_check
        %p258 = pneg %p77
      $region38: #{bottleneck.5} parent=35 // pred_check_branch
        %260 = sbr.rel (%p258) target = $region40
      $region39: #{bottleneck.5} parent=35 // pred_region
        %p261 = scmp.lt.s32.totalorder %s15, 1
        %s262 = scalar_select %p261, %s15, 1
        %s263 = smul.addr %s262, 8
        %s264 = smul.addr %s263, 8
        %s265 = scalar_lea.vmem %s2, %s264
      $region40: #{bottleneck.5} parent=35 // pred_fallthru
        _
    $region36: #{bottleneck.5} parent=5 // pred_fallthru
      _
    %p266 = scmp.le.s32.totalorder 1, %s15
    %p267 = scmp.lt.s32.totalorder %s15, 3
    %p268 = pnand %p266, %p267
    %p269 = pneg %p268
    // Predicated region
    $region41: #{bottleneck.5} parent=5 // pred_check
      _
    $region42: #{bottleneck.5} parent=5 // pred_check_branch
      %271 = sbr.rel (%p268) target = $region44
    $region43: #{bottleneck.5} parent=5 // pred_region
      %s272 = ssub.s32 %s15, 1
      %p273 = pneg %p36
      %p274 = pneg %p33
      %p275 = pneg %p57
      %p276 = pneg %p54
      %p277 = scmp.lt.s32.totalorder %s20, 1
      %s278 = scalar_select %p277, %s20, 1
      %s279 = smul.addr %s278, 8
      %s280 = smul.addr %s279, 8
      %s281 = scalar_lea.vmem %s2, %s280
      %p282 = pneg %p83
      %p283 = pneg %p80
      %p284 = pneg %p104
      %p285 = pneg %p101
      %p286 = pneg %p125
      %p287 = pneg %p122
      %p288 = pneg %p146
      %p289 = pneg %p143
      %p290 = pneg %p172
      %p291 = pneg %p169
      %p292 = scmp.lt.s32.totalorder %s20, 1
      %s293 = scalar_select %p292, %s20, 1
      %s294 = smul.addr %s293, 8
      %s295 = smul.addr %s294, 8
      %s296 = scalar_lea.vmem %s6, %s295
      %p297 = pneg %p198
      %p298 = pneg %p195
      %p299 = scmp.lt.s32.totalorder %s20, 1
      %s300 = scalar_select %p299, %s20, 1
      %s301 = scalar_lea.vmem %s7, %s300
      %p302 = pneg %p224
      %p303 = pneg %p221
      %p304 = scmp.lt.s32.totalorder %s20, 1
      %s305 = scalar_select %p304, %s20, 1
      %s306 = scalar_lea.vmem %s8, %s305
      %p307 = scmp.lt.s32.totalorder %s20, 1
      %s308 = scalar_select %p307, %s20, 1
      %s309 = smul.addr %s308, 8
      %s310 = smul.addr %s309, 8
      %s311 = scalar_lea.vmem %s2, %s310
      %p312 = scmp.lt.s32.totalorder %s20, 1
      %s313 = scalar_select %p312, %s20, 1
      %s314 = smul.addr %s313, 8
      %s315 = smul.addr %s314, 8
      %s316 = scalar_lea.vmem %s6, %s315
      %p317 = scmp.lt.s32.totalorder %s20, 1
      %s318 = scalar_select %p317, %s20, 1
      %s319 = scalar_lea.vmem %s7, %s318
      %p320 = scmp.lt.s32.totalorder %s20, 1
      %s321 = scalar_select %p320, %s20, 1
      %s322 = scalar_lea.vmem %s8, %s321
      %v324 = vld [vmem:[%s0] sm:$0x1]
      %v325 = vld [vmem:[%s0 + $0x1] sm:$0x1]
      %vm326 = vcmask 24576
      %v327 = vsel %vm326, %v324, 0.0
      %v328 = vsel %vm326, %v325, 0.0
      %v329 = vadd.f32 %v327, %v328
      %v330 = vld [vmem:[%s1] sm:$0x1]
      %v331 = vld [vmem:[%s1 + $0x1] sm:$0x1]
      %v332 = vsel %vm326, %v330, 0.0
      %v333 = vsel %vm326, %v331, 0.0
      %v334 = vadd.f32 %v332, %v333
      %v335 = vrcp.pop 128.0
      %v336 = vmul.f32 %v329, %v335
      %v337 = vmul.f32 %v334, %v335
      %v338 = vmul.f32 %v336, %v336
      %v339 = vsub.f32 %v337, %v338
      %v340 = vmax.f32 %v339, 0.0
      %v341 = vld [vmem:[%s4] sm:$0x1]
      %v342 = vadd.f32 %v340, 1e-05
      %v343 = vrsqrt.pop %v342
      %v344 = vmul.f32 %v341, %v343
      %v345 = vld [vmem:[%s5] sm:$0x1]
      %v346 = vmul.f32 %v336, %v344
      %v347 = vsub.f32 %v345, %v346
      %v348 = vld [vmem:[%s311] sm:$0xff]
      %v349 = vld [vmem:[%s311 + $0x8] sm:$0xff]
      %v350 = vld [vmem:[%s311 + $0x10] sm:$0xff]
      %v351 = vld [vmem:[%s311 + $0x18] sm:$0xff]
      %v352 = vld [vmem:[%s311 + $0x20] sm:$0xff]
      %v353 = vld [vmem:[%s311 + $0x28] sm:$0xff]
      %v354 = vld [vmem:[%s311 + $0x30] sm:$0xff]
      %v355 = vld [vmem:[%s311 + $0x38] sm:$0xff]
      %v357 = vlaneseq
      %v358 = vshrl.u32 %v357, 7
      %v359 = vsub.s32 0, %v358
      %v360 = vrot.slane %v344, %v359
      %v362 = vmul.f32 %v348, %v360
      %v363 = vmul.f32 %v349, %v360
      %v364 = vmul.f32 %v350, %v360
      %v365 = vmul.f32 %v351, %v360
      %v366 = vmul.f32 %v352, %v360
      %v367 = vmul.f32 %v353, %v360
      %v368 = vmul.f32 %v354, %v360
      %v369 = vmul.f32 %v355, %v360
      %v371 = vlaneseq
      %v372 = vshrl.u32 %v371, 7
      %v373 = vsub.s32 0, %v372
      %v374 = vrot.slane %v347, %v373
      %v376 = vadd.f32 %v362, %v374
      %v377 = vadd.f32 %v363, %v374
      %v378 = vadd.f32 %v364, %v374
      %v379 = vadd.f32 %v365, %v374
      %v380 = vadd.f32 %v366, %v374
      %v381 = vadd.f32 %v367, %v374
      %v382 = vadd.f32 %v368, %v374
      %v383 = vadd.f32 %v369, %v374
      %v384 = vmax.f32 %v376, 0.0
      %v385 = vmax.f32 %v377, 0.0
      %v386 = vmax.f32 %v378, 0.0
      %v387 = vmax.f32 %v379, 0.0
      %v388 = vmax.f32 %v380, 0.0
      %v389 = vmax.f32 %v381, 0.0
      %v390 = vmax.f32 %v382, 0.0
      %v391 = vmax.f32 %v383, 0.0
      %vm392 = vcmask 31744
      %393 = vst.msk [vmem:[#allocation2] sm:$0xff] %vm392, 0.0
      %vm394 = vcmask 25600
      %395 = vst.msk [vmem:[#allocation2 + $0x8] sm:$0x3] %vm394, 0.0
      %s396 = scalar_lea.vmem [#allocation2], 144
      %397 = vst.msk [vmem:[%s396] sm:$0xff] %vm392, 0.0
      %398 = vst.msk [vmem:[%s396 + $0x8] sm:$0x3] %vm394, 0.0
      %399 = vst.msk [vmem:[#allocation2] sm:$0x1] %vm326, 0.0
      %400 = vst.msk [vmem:[#allocation2 + $0x10] sm:$0x1] %vm326, 0.0
      %401 = vst.msk [vmem:[#allocation2 + $0x20] sm:$0x1] %vm326, 0.0
      %402 = vst.msk [vmem:[#allocation2 + $0x30] sm:$0x1] %vm326, 0.0
      %403 = vst.msk [vmem:[#allocation2 + $0x40] sm:$0x1] %vm326, 0.0
      %404 = vst.msk [vmem:[#allocation2 + $0x50] sm:$0x1] %vm326, 0.0
      %405 = vst.msk [vmem:[#allocation2 + $0x60] sm:$0x1] %vm326, 0.0
      %406 = vst.msk [vmem:[#allocation2 + $0x70] sm:$0x1] %vm326, 0.0
      %407 = vst.msk [vmem:[#allocation2 + $0x80] sm:$0x1] %vm326, 0.0
      %408 = vst.msk [vmem:[#allocation2 + $0x90] sm:$0x1] %vm326, 0.0
      %409 = vst.msk [vmem:[#allocation2 + $0x9] sm:$0x1] %vm326, 0.0
      %410 = vst.msk [vmem:[#allocation2 + $0x19] sm:$0x1] %vm326, 0.0
      %411 = vst.msk [vmem:[#allocation2 + $0x29] sm:$0x1] %vm326, 0.0
      %412 = vst.msk [vmem:[#allocation2 + $0x39] sm:$0x1] %vm326, 0.0
      %413 = vst.msk [vmem:[#allocation2 + $0x49] sm:$0x1] %vm326, 0.0
      %414 = vst.msk [vmem:[#allocation2 + $0x59] sm:$0x1] %vm326, 0.0
      %415 = vst.msk [vmem:[#allocation2 + $0x69] sm:$0x1] %vm326, 0.0
      %416 = vst.msk [vmem:[#allocation2 + $0x79] sm:$0x1] %vm326, 0.0
      %417 = vst.msk [vmem:[#allocation2 + $0x89] sm:$0x1] %vm326, 0.0
      %418 = vst.msk [vmem:[#allocation2 + $0x99] sm:$0x1] %vm326, 0.0
      %s419 = scalar_lea.vmem [#allocation2], 16
      %420 = vst.msk [vmem:[%s419 + $0x1] sm:$0xff] %vm392, %v384
      %421 = vst.msk [vmem:[%s419 + $0x11] sm:$0xff] %vm392, %v385
      %422 = vst.msk [vmem:[%s419 + $0x21] sm:$0xff] %vm392, %v386
      %423 = vst.msk [vmem:[%s419 + $0x31] sm:$0xff] %vm392, %v387
      %424 = vst.msk [vmem:[%s419 + $0x41] sm:$0xff] %vm392, %v388
      %425 = vst.msk [vmem:[%s419 + $0x51] sm:$0xff] %vm392, %v389
      %426 = vst.msk [vmem:[%s419 + $0x61] sm:$0xff] %vm392, %v390
      %427 = vst.msk [vmem:[%s419 + $0x71] sm:$0xff] %vm392, %v391
      %v428 = vld [vmem:[#allocation2] sm:$0xff]
      %v429 = vld [vmem:[#allocation2 + $0x10] sm:$0xff]
      %v430 = vld [vmem:[#allocation2 + $0x20] sm:$0xff]
      %v431 = vld [vmem:[#allocation2 + $0x30] sm:$0xff]
      %v432 = vld [vmem:[#allocation2 + $0x40] sm:$0xff]
      %v433 = vld [vmem:[#allocation2 + $0x50] sm:$0xff]
      %v434 = vld [vmem:[#allocation2 + $0x60] sm:$0xff]
      %v435 = vld [vmem:[#allocation2 + $0x70] sm:$0xff]
      %v436 = vld [vmem:[#allocation2 + $0x1] sm:$0xff]
      %v437 = vld [vmem:[#allocation2 + $0x11] sm:$0xff]
      %v438 = vld [vmem:[#allocation2 + $0x21] sm:$0xff]
      %v439 = vld [vmem:[#allocation2 + $0x31] sm:$0xff]
      %v440 = vld [vmem:[#allocation2 + $0x41] sm:$0xff]
      %v441 = vld [vmem:[#allocation2 + $0x51] sm:$0xff]
      %v442 = vld [vmem:[#allocation2 + $0x61] sm:$0xff]
      %v443 = vld [vmem:[#allocation2 + $0x71] sm:$0xff]
      %v444 = vld [vmem:[#allocation2 + $0x2] sm:$0xff]
      %v445 = vld [vmem:[#allocation2 + $0x12] sm:$0xff]
      %v446 = vld [vmem:[#allocation2 + $0x22] sm:$0xff]
      %v447 = vld [vmem:[#allocation2 + $0x32] sm:$0xff]
      %v448 = vld [vmem:[#allocation2 + $0x42] sm:$0xff]
      %v449 = vld [vmem:[#allocation2 + $0x52] sm:$0xff]
      %v450 = vld [vmem:[#allocation2 + $0x62] sm:$0xff]
      %v451 = vld [vmem:[#allocation2 + $0x72] sm:$0xff]
      %v452 = vld [vmem:[%s419] sm:$0xff]
      %v453 = vld [vmem:[%s419 + $0x10] sm:$0xff]
      %v454 = vld [vmem:[%s419 + $0x20] sm:$0xff]
      %v455 = vld [vmem:[%s419 + $0x30] sm:$0xff]
      %v456 = vld [vmem:[%s419 + $0x40] sm:$0xff]
      %v457 = vld [vmem:[%s419 + $0x50] sm:$0xff]
      %v458 = vld [vmem:[%s419 + $0x60] sm:$0xff]
      %v459 = vld [vmem:[%s419 + $0x70] sm:$0xff]
      %v460 = vld [vmem:[%s419 + $0x1] sm:$0xff]
      %v461 = vld [vmem:[%s419 + $0x11] sm:$0xff]
      %v462 = vld [vmem:[%s419 + $0x21] sm:$0xff]
      %v463 = vld [vmem:[%s419 + $0x31] sm:$0xff]
      %v464 = vld [vmem:[%s419 + $0x41] sm:$0xff]
      %v465 = vld [vmem:[%s419 + $0x51] sm:$0xff]
      %v466 = vld [vmem:[%s419 + $0x61] sm:$0xff]
      %v467 = vld [vmem:[%s419 + $0x71] sm:$0xff]
      %v468 = vld [vmem:[%s419 + $0x2] sm:$0xff]
      %v469 = vld [vmem:[%s419 + $0x12] sm:$0xff]
      %v470 = vld [vmem:[%s419 + $0x22] sm:$0xff]
      %v471 = vld [vmem:[%s419 + $0x32] sm:$0xff]
      %v472 = vld [vmem:[%s419 + $0x42] sm:$0xff]
      %v473 = vld [vmem:[%s419 + $0x52] sm:$0xff]
      %v474 = vld [vmem:[%s419 + $0x62] sm:$0xff]
      %v475 = vld [vmem:[%s419 + $0x72] sm:$0xff]
      %s476 = scalar_lea.vmem [#allocation2], 32
      %v477 = vld [vmem:[%s476] sm:$0xff]
      %v478 = vld [vmem:[%s476 + $0x10] sm:$0xff]
      %v479 = vld [vmem:[%s476 + $0x20] sm:$0xff]
      %v480 = vld [vmem:[%s476 + $0x30] sm:$0xff]
      %v481 = vld [vmem:[%s476 + $0x40] sm:$0xff]
      %v482 = vld [vmem:[%s476 + $0x50] sm:$0xff]
      %v483 = vld [vmem:[%s476 + $0x60] sm:$0xff]
      %v484 = vld [vmem:[%s476 + $0x70] sm:$0xff]
      %v485 = vld [vmem:[%s476 + $0x1] sm:$0xff]
      %v486 = vld [vmem:[%s476 + $0x11] sm:$0xff]
      %v487 = vld [vmem:[%s476 + $0x21] sm:$0xff]
      %v488 = vld [vmem:[%s476 + $0x31] sm:$0xff]
      %v489 = vld [vmem:[%s476 + $0x41] sm:$0xff]
      %v490 = vld [vmem:[%s476 + $0x51] sm:$0xff]
      %v491 = vld [vmem:[%s476 + $0x61] sm:$0xff]
      %v492 = vld [vmem:[%s476 + $0x71] sm:$0xff]
      %v493 = vld [vmem:[%s476 + $0x2] sm:$0xff]
      %v494 = vld [vmem:[%s476 + $0x12] sm:$0xff]
      %v495 = vld [vmem:[%s476 + $0x22] sm:$0xff]
      %v496 = vld [vmem:[%s476 + $0x32] sm:$0xff]
      %v497 = vld [vmem:[%s476 + $0x42] sm:$0xff]
      %v498 = vld [vmem:[%s476 + $0x52] sm:$0xff]
      %v499 = vld [vmem:[%s476 + $0x62] sm:$0xff]
      %v500 = vld [vmem:[%s476 + $0x72] sm:$0xff]
      %509 = vrot.lane.b32.xlu0 %v436, 4
      %v510 = vpop.permute.xlu0 %509
      %511 = vrot.lane.b32.xlu0 %v437, 4
      %v512 = vpop.permute.xlu0 %511
      %513 = vrot.lane.b32.xlu0 %v438, 4
      %v514 = vpop.permute.xlu0 %513
      %515 = vrot.lane.b32.xlu0 %v439, 4
      %v516 = vpop.permute.xlu0 %515
      %517 = vrot.lane.b32.xlu0 %v440, 4
      %v518 = vpop.permute.xlu0 %517
      %519 = vrot.lane.b32.xlu0 %v441, 4
      %v520 = vpop.permute.xlu0 %519
      %521 = vrot.lane.b32.xlu0 %v442, 4
      %v522 = vpop.permute.xlu0 %521
      %523 = vrot.lane.b32.xlu0 %v443, 4
      %v524 = vpop.permute.xlu0 %523
      %541 = vrot.lane.b32.xlu0 %v444, 8
      %v542 = vpop.permute.xlu0 %541
      %543 = vrot.lane.b32.xlu0 %v445, 8
      %v544 = vpop.permute.xlu0 %543
      %545 = vrot.lane.b32.xlu0 %v446, 8
      %v546 = vpop.permute.xlu0 %545
      %547 = vrot.lane.b32.xlu0 %v447, 8
      %v548 = vpop.permute.xlu0 %547
      %549 = vrot.lane.b32.xlu0 %v448, 8
      %v550 = vpop.permute.xlu0 %549
      %551 = vrot.lane.b32.xlu0 %v449, 8
      %v552 = vpop.permute.xlu0 %551
      %553 = vrot.lane.b32.xlu0 %v450, 8
      %v554 = vpop.permute.xlu0 %553
      %555 = vrot.lane.b32.xlu0 %v451, 8
      %v556 = vpop.permute.xlu0 %555
      %573 = vrot.lane.b32.xlu0 %v452, 12
      %v574 = vpop.permute.xlu0 %573
      %575 = vrot.lane.b32.xlu0 %v453, 12
      %v576 = vpop.permute.xlu0 %575
      %577 = vrot.lane.b32.xlu0 %v454, 12
      %v578 = vpop.permute.xlu0 %577
      %579 = vrot.lane.b32.xlu0 %v455, 12
      %v580 = vpop.permute.xlu0 %579
      %581 = vrot.lane.b32.xlu0 %v456, 12
      %v582 = vpop.permute.xlu0 %581
      %583 = vrot.lane.b32.xlu0 %v457, 12
      %v584 = vpop.permute.xlu0 %583
      %585 = vrot.lane.b32.xlu0 %v458, 12
      %v586 = vpop.permute.xlu0 %585
      %587 = vrot.lane.b32.xlu0 %v459, 12
      %v588 = vpop.permute.xlu0 %587
      %605 = vrot.lane.b32.xlu0 %v460, 16
      %v606 = vpop.permute.xlu0 %605
      %607 = vrot.lane.b32.xlu0 %v461, 16
      %v608 = vpop.permute.xlu0 %607
      %609 = vrot.lane.b32.xlu0 %v462, 16
      %v610 = vpop.permute.xlu0 %609
      %611 = vrot.lane.b32.xlu0 %v463, 16
      %v612 = vpop.permute.xlu0 %611
      %613 = vrot.lane.b32.xlu0 %v464, 16
      %v614 = vpop.permute.xlu0 %613
      %615 = vrot.lane.b32.xlu0 %v465, 16
      %v616 = vpop.permute.xlu0 %615
      %617 = vrot.lane.b32.xlu0 %v466, 16
      %v618 = vpop.permute.xlu0 %617
      %619 = vrot.lane.b32.xlu0 %v467, 16
      %v620 = vpop.permute.xlu0 %619
      %637 = vrot.lane.b32.xlu0 %v468, 20
      %v638 = vpop.permute.xlu0 %637
      %639 = vrot.lane.b32.xlu0 %v469, 20
      %v640 = vpop.permute.xlu0 %639
      %641 = vrot.lane.b32.xlu0 %v470, 20
      %v642 = vpop.permute.xlu0 %641
      %643 = vrot.lane.b32.xlu0 %v471, 20
      %v644 = vpop.permute.xlu0 %643
      %645 = vrot.lane.b32.xlu0 %v472, 20
      %v646 = vpop.permute.xlu0 %645
      %647 = vrot.lane.b32.xlu0 %v473, 20
      %v648 = vpop.permute.xlu0 %647
      %649 = vrot.lane.b32.xlu0 %v474, 20
      %v650 = vpop.permute.xlu0 %649
      %651 = vrot.lane.b32.xlu0 %v475, 20
      %v652 = vpop.permute.xlu0 %651
      %669 = vrot.lane.b32.xlu0 %v477, 24
      %v670 = vpop.permute.xlu0 %669
      %671 = vrot.lane.b32.xlu0 %v478, 24
      %v672 = vpop.permute.xlu0 %671
      %673 = vrot.lane.b32.xlu0 %v479, 24
      %v674 = vpop.permute.xlu0 %673
      %675 = vrot.lane.b32.xlu0 %v480, 24
      %v676 = vpop.permute.xlu0 %675
      %677 = vrot.lane.b32.xlu0 %v481, 24
      %v678 = vpop.permute.xlu0 %677
      %679 = vrot.lane.b32.xlu0 %v482, 24
      %v680 = vpop.permute.xlu0 %679
      %681 = vrot.lane.b32.xlu0 %v483, 24
      %v682 = vpop.permute.xlu0 %681
      %683 = vrot.lane.b32.xlu0 %v484, 24
      %v684 = vpop.permute.xlu0 %683
      %701 = vrot.lane.b32.xlu0 %v485, 28
      %v702 = vpop.permute.xlu0 %701
      %703 = vrot.lane.b32.xlu0 %v486, 28
      %v704 = vpop.permute.xlu0 %703
      %705 = vrot.lane.b32.xlu0 %v487, 28
      %v706 = vpop.permute.xlu0 %705
      %707 = vrot.lane.b32.xlu0 %v488, 28
      %v708 = vpop.permute.xlu0 %707
      %709 = vrot.lane.b32.xlu0 %v489, 28
      %v710 = vpop.permute.xlu0 %709
      %711 = vrot.lane.b32.xlu0 %v490, 28
      %v712 = vpop.permute.xlu0 %711
      %713 = vrot.lane.b32.xlu0 %v491, 28
      %v714 = vpop.permute.xlu0 %713
      %715 = vrot.lane.b32.xlu0 %v492, 28
      %v716 = vpop.permute.xlu0 %715
      %733 = vrot.lane.b32.xlu0 %v493, 32
      %v734 = vpop.permute.xlu0 %733
      %735 = vrot.lane.b32.xlu0 %v494, 32
      %v736 = vpop.permute.xlu0 %735
      %737 = vrot.lane.b32.xlu0 %v495, 32
      %v738 = vpop.permute.xlu0 %737
      %739 = vrot.lane.b32.xlu0 %v496, 32
      %v740 = vpop.permute.xlu0 %739
      %741 = vrot.lane.b32.xlu0 %v497, 32
      %v742 = vpop.permute.xlu0 %741
      %743 = vrot.lane.b32.xlu0 %v498, 32
      %v744 = vpop.permute.xlu0 %743
      %745 = vrot.lane.b32.xlu0 %v499, 32
      %v746 = vpop.permute.xlu0 %745
      %747 = vrot.lane.b32.xlu0 %v500, 32
      %v748 = vpop.permute.xlu0 %747
      %v757 = vsel %vm392, %v428, %v510
      %v758 = vsel %vm392, %v429, %v512
      %v759 = vsel %vm392, %v430, %v514
      %v760 = vsel %vm392, %v431, %v516
      %v761 = vsel %vm392, %v432, %v518
      %v762 = vsel %vm392, %v433, %v520
      %v763 = vsel %vm392, %v434, %v522
      %v764 = vsel %vm392, %v435, %v524
      %vm765 = vcmask 64512
      %v766 = vsel %vm765, %v757, %v542
      %v767 = vsel %vm765, %v758, %v544
      %v768 = vsel %vm765, %v759, %v546
      %v769 = vsel %vm765, %v760, %v548
      %v770 = vsel %vm765, %v761, %v550
      %v771 = vsel %vm765, %v762, %v552
      %v772 = vsel %vm765, %v763, %v554
      %v773 = vsel %vm765, %v764, %v556
      %vm774 = vcmask 97280
      %v775 = vsel %vm774, %v766, %v574
      %v776 = vsel %vm774, %v767, %v576
      %v777 = vsel %vm774, %v768, %v578
      %v778 = vsel %vm774, %v769, %v580
      %v779 = vsel %vm774, %v770, %v582
      %v780 = vsel %vm774, %v771, %v584
      %v781 = vsel %vm774, %v772, %v586
      %v782 = vsel %vm774, %v773, %v588
      %vm783 = vcmask 130048
      %v784 = vsel %vm783, %v775, %v606
      %v785 = vsel %vm783, %v776, %v608
      %v786 = vsel %vm783, %v777, %v610
      %v787 = vsel %vm783, %v778, %v612
      %v788 = vsel %vm783, %v779, %v614
      %v789 = vsel %vm783, %v780, %v616
      %v790 = vsel %vm783, %v781, %v618
      %v791 = vsel %vm783, %v782, %v620
      %vm792 = vcmask 162816
      %v793 = vsel %vm792, %v784, %v638
      %v794 = vsel %vm792, %v785, %v640
      %v795 = vsel %vm792, %v786, %v642
      %v796 = vsel %vm792, %v787, %v644
      %v797 = vsel %vm792, %v788, %v646
      %v798 = vsel %vm792, %v789, %v648
      %v799 = vsel %vm792, %v790, %v650
      %v800 = vsel %vm792, %v791, %v652
      %vm801 = vcmask 195584
      %v802 = vsel %vm801, %v793, %v670
      %v803 = vsel %vm801, %v794, %v672
      %v804 = vsel %vm801, %v795, %v674
      %v805 = vsel %vm801, %v796, %v676
      %v806 = vsel %vm801, %v797, %v678
      %v807 = vsel %vm801, %v798, %v680
      %v808 = vsel %vm801, %v799, %v682
      %v809 = vsel %vm801, %v800, %v684
      %vm810 = vcmask 228352
      %v811 = vsel %vm810, %v802, %v702
      %v812 = vsel %vm810, %v803, %v704
      %v813 = vsel %vm810, %v804, %v706
      %v814 = vsel %vm810, %v805, %v708
      %v815 = vsel %vm810, %v806, %v710
      %v816 = vsel %vm810, %v807, %v712
      %v817 = vsel %vm810, %v808, %v714
      %v818 = vsel %vm810, %v809, %v716
      %vm819 = vcmask 261120
      %v820 = vsel %vm819, %v811, %v734
      %v821 = vsel %vm819, %v812, %v736
      %v822 = vsel %vm819, %v813, %v738
      %v823 = vsel %vm819, %v814, %v740
      %v824 = vsel %vm819, %v815, %v742
      %v825 = vsel %vm819, %v816, %v744
      %v826 = vsel %vm819, %v817, %v746
      %v827 = vsel %vm819, %v818, %v748
      %v828 = vpack.c.bf16 %v821, %v820
      %v829 = vpack.c.bf16 %v823, %v822
      %v830 = vpack.c.bf16 %v825, %v824
      %v831 = vpack.c.bf16 %v827, %v826
      %v832 = vld [vmem:[%s3] sm:$0xf]
      %v833 = vld [vmem:[%s3 + $0x4] sm:$0xf]
      %v834 = vld [vmem:[%s3 + $0x8] sm:$0xf]
      %v835 = vld [vmem:[%s3 + $0xc] sm:$0xf]
      %v836 = vld [vmem:[%s3 + $0x10] sm:$0x3]
      %v842 = vunpack.c.l.b16 %v832
      %v843 = vunpack.c.l.b16 %v833
      %v844 = vunpack.c.l.b16 %v834
      %v845 = vunpack.c.l.b16 %v835
      %v846 = vunpack.c.l.b16 %v836
      %v847 = vpack.c.b16 %v843, %v842
      %v848 = vpack.c.b16 %v845, %v844
      %v849 = vpack.c.b16 %v846, %v846
      %vm852 = vcmask 293888
      %v854 = vsel %vm852, %v828, 0
      %v857 = vsel %vm852, %v829, 0
      %v860 = vsel %vm852, %v830, 0
      %v863 = vsel %vm852, %v831, 0
      %vm865 = vcmask 1041408
      %v867 = vsel %vm865, %v849, 0
      %869 = vmatprep.subr.bf16.mxu0 0
      %870 = vmatpush1.bf16.msra.mxu0 %v847
      %871 = vmatprep.subr.bf16.mxu0 0
      %872 = vmatpush1.bf16.msra.mxu0 %v848
      %873 = vmatprep.subr.bf16.mxu0 0
      %874 = vmatpush1.bf16.msra.mxu0 %v867
      %875 = vmatprep.subr.bf16.mxu0 0
      %876 = vmatpush1.bf16.msra.mxu0 0
      %877 = vmatprep.subr.bf16.mxu0 0
      %878 = vmatpush1.bf16.msra.mxu0 0
      %879 = vmatprep.subr.bf16.mxu0 0
      %880 = vmatpush1.bf16.msra.mxu0 0
      %881 = vmatprep.subr.bf16.mxu0 0
      %882 = vmatpush1.bf16.msra.mxu0 0
      %883 = vmatprep.subr.bf16.mxu0 0
      %884 = vmatpush1.bf16.msra.mxu0 0
      %885 = vmatprep.subr.bf16.mxu0 0
      %886 = vmatpush1.bf16.msra.mxu0 0
      %887 = vmatprep.subr.bf16.mxu0 0
      %888 = vmatpush1.bf16.msra.mxu0 0
      %889 = vmatprep.subr.bf16.mxu0 0
      %890 = vmatpush1.bf16.msra.mxu0 0
      %891 = vmatprep.subr.bf16.mxu0 0
      %892 = vmatpush1.bf16.msra.mxu0 0
      %893 = vmatprep.subr.bf16.mxu0 0
      %894 = vmatpush1.bf16.msra.mxu0 0
      %895 = vmatprep.subr.bf16.mxu0 0
      %896 = vmatpush1.bf16.msra.mxu0 0
      %897 = vmatprep.subr.bf16.mxu0 0
      %898 = vmatpush1.bf16.msra.mxu0 0
      %899 = vmatprep.subr.bf16.mxu0 0
      %900 = vmatpush1.bf16.msra.mxu0 0
      %901 = vmatprep.mubr.bf16.mxu0 0
      %902 = vmatmul.mubr.bf16.gmra.mrb[0].mxu0 %v854
      %v903 = vpop.f32.mrb[0].mxu0
      %v904 = vadd.f32 0.0, %v903
      %v905 = vpop.f32.mrb[0].mxu0
      %v906 = vpop.f32.mrb[0].mxu0
      %v907 = vadd.f32 0.0, %v906
      %v908 = vpop.f32.mrb[0].mxu0
      %909 = vmatprep.mubr.bf16.mxu0 0
      %910 = vmatmul.mubr.bf16.gmra.mrb[0].mxu0 %v857
      %v911 = vpop.f32.mrb[0].mxu0
      %v912 = vadd.f32 0.0, %v911
      %v913 = vpop.f32.mrb[0].mxu0
      %v914 = vpop.f32.mrb[0].mxu0
      %v915 = vadd.f32 0.0, %v914
      %v916 = vpop.f32.mrb[0].mxu0
      %917 = vmatprep.mubr.bf16.mxu0 0
      %918 = vmatmul.mubr.bf16.gmra.mrb[0].mxu0 %v860
      %v919 = vpop.f32.mrb[0].mxu0
      %v920 = vadd.f32 0.0, %v919
      %v921 = vpop.f32.mrb[0].mxu0
      %v922 = vpop.f32.mrb[0].mxu0
      %v923 = vadd.f32 0.0, %v922
      %v924 = vpop.f32.mrb[0].mxu0
      %925 = vmatprep.mubr.bf16.mxu0 0
      %926 = vmatmul.mubr.bf16.gmra.mrb[0].mxu0 %v863
      %v927 = vpop.f32.mrb[0].mxu0
      %v928 = vadd.f32 0.0, %v927
      %v929 = vpop.f32.mrb[0].mxu0
      %v930 = vpop.f32.mrb[0].mxu0
      %v931 = vadd.f32 0.0, %v930
      %v932 = vpop.f32.mrb[0].mxu0
      %933 = vdwg.mxu0
      %934 = vst.msk [vmem:[%s316] sm:$0xff] %vm392, %v904
      %935 = vst.msk [vmem:[%s316 + $0x8] sm:$0xff] %vm392, %v907
      %936 = vst.msk [vmem:[%s316 + $0x10] sm:$0xff] %vm392, %v912
      %937 = vst.msk [vmem:[%s316 + $0x18] sm:$0xff] %vm392, %v915
      %938 = vst.msk [vmem:[%s316 + $0x20] sm:$0xff] %vm392, %v920
      %939 = vst.msk [vmem:[%s316 + $0x28] sm:$0xff] %vm392, %v923
      %940 = vst.msk [vmem:[%s316 + $0x30] sm:$0xff] %vm392, %v928
      %941 = vst.msk [vmem:[%s316 + $0x38] sm:$0xff] %vm392, %v931
      %v942 = vsel %vm392, %v904, 0.0
      %v943 = vsel %vm392, %v907, 0.0
      %v944 = vadd.f32 %v942, %v943
      %v945 = vsel %vm392, %v912, 0.0
      %v946 = vadd.f32 %v944, %v945
      %v947 = vsel %vm392, %v915, 0.0
      %v948 = vadd.f32 %v946, %v947
      %v949 = vsel %vm392, %v920, 0.0
      %v950 = vadd.f32 %v948, %v949
      %v951 = vsel %vm392, %v923, 0.0
      %v952 = vadd.f32 %v950, %v951
      %v953 = vsel %vm392, %v928, 0.0
      %v954 = vadd.f32 %v952, %v953
      %v955 = vsel %vm392, %v931, 0.0
      %v956 = vadd.f32 %v954, %v955
      %v957 = vrot.slane %v956, 4
      %v958 = vadd.f32 %v956, %v957
      %v959 = vrot.slane %v958, 2
      %v960 = vadd.f32 %v958, %v959
      %v961 = vrot.slane %v960, 1
      %v962 = vadd.f32 %v960, %v961
      %963 = vst.msk [vmem:[%s319] sm:$0x1] %vm326, %v962
      %v964 = vmul.f32 %v904, %v904
      %v965 = vmul.f32 %v907, %v907
      %v966 = vmul.f32 %v912, %v912
      %v967 = vmul.f32 %v915, %v915
      %v968 = vmul.f32 %v920, %v920
      %v969 = vmul.f32 %v923, %v923
      %v970 = vmul.f32 %v928, %v928
      %v971 = vmul.f32 %v931, %v931
      %v972 = vsel %vm392, %v964, 0.0
      %v973 = vsel %vm392, %v965, 0.0
      %v974 = vadd.f32 %v972, %v973
      %v975 = vsel %vm392, %v966, 0.0
      %v976 = vadd.f32 %v974, %v975
      %v977 = vsel %vm392, %v967, 0.0
      %v978 = vadd.f32 %v976, %v977
      %v979 = vsel %vm392, %v968, 0.0
      %v980 = vadd.f32 %v978, %v979
      %v981 = vsel %vm392, %v969, 0.0
      %v982 = vadd.f32 %v980, %v981
      %v983 = vsel %vm392, %v970, 0.0
      %v984 = vadd.f32 %v982, %v983
      %v985 = vsel %vm392, %v971, 0.0
      %v986 = vadd.f32 %v984, %v985
      %v987 = vrot.slane %v986, 4
      %v988 = vadd.f32 %v986, %v987
      %v989 = vrot.slane %v988, 2
      %v990 = vadd.f32 %v988, %v989
      %v991 = vrot.slane %v990, 1
      %v992 = vadd.f32 %v990, %v991
      %993 = vst.msk [vmem:[%s322] sm:$0x1] %vm326, %v992
      %p994 = scmp.lt.s32.totalorder %s20, 1
      %s995 = scalar_select %p994, %s20, 1
      %s996 = smul.addr %s995, 8
      %s997 = smul.addr %s996, 8
      %s998 = scalar_lea.vmem %s6, %s997
      %p999 = scmp.lt.s32.totalorder %s20, 1
      %s1000 = scalar_select %p999, %s20, 1
      %s1001 = scalar_lea.vmem %s7, %s1000
      %p1002 = scmp.lt.s32.totalorder %s20, 1
      %s1003 = scalar_select %p1002, %s20, 1
      %s1004 = scalar_lea.vmem %s8, %s1003
      // Predicated region
      $region45: #{bottleneck.5} parent=43 // pred_check
        %p1005 = pneg %p169
      $region46: #{bottleneck.5} parent=43 // pred_check_branch
        %1007 = sbr.rel (%p1005) target = $region48
      $region47: #{bottleneck.5} parent=43 // pred_region
        _
      $region48: #{bottleneck.5} parent=43 // pred_fallthru
        _
      // Predicated region
      $region49: #{bottleneck.5} parent=43 // pred_check
        %p1008 = pneg %p195
      $region50: #{bottleneck.5} parent=43 // pred_check_branch
        %1010 = sbr.rel (%p1008) target = $region52
      $region51: #{bottleneck.5} parent=43 // pred_region
        _
      $region52: #{bottleneck.5} parent=43 // pred_fallthru
        _
      // Predicated region
      $region53: #{bottleneck.5} parent=43 // pred_check
        %p1011 = pneg %p221
      $region54: #{bottleneck.5} parent=43 // pred_check_branch
        %1013 = sbr.rel (%p1011) target = $region56
      $region55: #{bottleneck.5} parent=43 // pred_region
        _
      $region56: #{bottleneck.5} parent=43 // pred_fallthru
        _
    $region44: #{bottleneck.5} parent=5 // pred_fallthru
      _
    %p1014 = scmp.le.s32.totalorder 2, %s15
    // Predicated region
    $region57: #{bottleneck.5} parent=5 // pred_check
      %p1015 = pneg %p1014
    $region58: #{bottleneck.5} parent=5 // pred_check_branch
      %1017 = sbr.rel (%p1015) target = $region60
    $region59: #{bottleneck.5} parent=5 // pred_region
      %s1018 = ssub.s32 %s15, 2
      // Predicated region
      $region61: #{bottleneck.5} parent=59 // pred_check
        %p1019 = pneg %p175
      $region62: #{bottleneck.5} parent=59 // pred_check_branch
        %1021 = sbr.rel (%p1019) target = $region64
      $region63: #{bottleneck.5} parent=59 // pred_region
        %p1022 = scmp.lt.s32.totalorder %s21, 1
        %s1023 = scalar_select %p1022, %s21, 1
        %s1024 = smul.addr %s1023, 8
        %s1025 = smul.addr %s1024, 8
        %s1026 = scalar_lea.vmem %s6, %s1025
      $region64: #{bottleneck.5} parent=59 // pred_fallthru
        _
      // Predicated region
      $region65: #{bottleneck.5} parent=59 // pred_check
        %p1027 = pneg %p201
      $region66: #{bottleneck.5} parent=59 // pred_check_branch
        %1029 = sbr.rel (%p1027) target = $region68
      $region67: #{bottleneck.5} parent=59 // pred_region
        %p1030 = scmp.lt.s32.totalorder %s21, 1
        %s1031 = scalar_select %p1030, %s21, 1
        %s1032 = scalar_lea.vmem %s7, %s1031
      $region68: #{bottleneck.5} parent=59 // pred_fallthru
        _
      // Predicated region
      $region69: #{bottleneck.5} parent=59 // pred_check
        %p1033 = pneg %p227
      $region70: #{bottleneck.5} parent=59 // pred_check_branch
        %1035 = sbr.rel (%p1033) target = $region72
      $region71: #{bottleneck.5} parent=59 // pred_region
        %p1036 = scmp.lt.s32.totalorder %s21, 1
        %s1037 = scalar_select %p1036, %s21, 1
        %s1038 = scalar_lea.vmem %s8, %s1037
      $region72: #{bottleneck.5} parent=59 // pred_fallthru
        _
    $region60: #{bottleneck.5} parent=5 // pred_fallthru
      _
  $region6: #{bottleneck.5} parent=0 // loop_footer
    %s19 = sadd.s32 1, %s15
  $region7: #{bottleneck.5} parent=0 // loop_footer_branch
    %14 = sbr.rel target = $region3
  $region8: #{bottleneck.5} parent=0 // loop_exit
    _

</llo_original>
